<compile_context>
chip_gen: v7x
topology: tpu7x:2x2x1
jax: 0.10.0
libtpu: 0.0.40
codegen_flags: <defaults>
</compile_context>

<pallas_src>
import jax
import jax.numpy as jnp
import numpy as np
from jax import lax
from jax.experimental import pallas as pl
from jax.experimental.pallas import tpu as pltpu


def _ifgo_to_ifog(a):
    """Reorder last-axis gate blocks from PyTorch's [i f g o] to [i f o g]."""
    i, f, g, o = jnp.split(a, 4, axis=-1)
    return jnp.concatenate([i, f, o, g], axis=-1)


def _make_lstm_kernel(num_layers, seq_len, hidden_size, compute_dtype):
    L, S, H = num_layers, seq_len, hidden_size
    cd = compute_dtype

    def kernel(*refs):
        # inputs
        x_ref, h0_ref, c0_ref = refs[0:3]                      # (S,Bg,I), (L,Bg,H), (L,Bg,H)
        layer_refs = refs[3:3 + 3 * L]                         # per layer: wih, whh, b
        wlin_ref, blin_ref = refs[3 + 3 * L:5 + 3 * L]         # (H,I), (1,I)
        # outputs
        out_ref, hn_ref, cn_ref = refs[5 + 3 * L:8 + 3 * L]    # (S,Bg,I), (L,Bg,H), (L,Bg,H)
        # scratch
        seq_ref, gates_ref = refs[8 + 3 * L:10 + 3 * L]        # (S,Bg,H) cd, (S,Bg,4H) f32

        Bg = h0_ref.shape[1]
        I_out = out_ref.shape[-1]

        for l in range(L):
            wih = layer_refs[3 * l][...]                       # (in_l, 4H) cd, [i f o g]
            whh = layer_refs[3 * l + 1][...]                   # (H, 4H)   cd, [i f o g]
            b = layer_refs[3 * l + 2][...]                     # (1, 4H)   f32 (bih+bhh)

            # (1) Whole-sequence input projection + bias: ONE well-shaped MXU matmul.
            if l == 0:
                inp = x_ref[...].reshape(S * Bg, x_ref.shape[-1]).astype(cd)
            else:
                inp = seq_ref[...].reshape(S * Bg, H)          # already compute_dtype
            gates_in = jnp.dot(inp, wih, preferred_element_type=jnp.float32) + b
            gates_ref[...] = gates_in.reshape(S, Bg, 4 * H)    # free leading-dim split

            # (2) Time recurrence: per step just (Bg,H)@(H,4H) + gate math.
            def step(t, carry):
                h, c = carry                                   # (Bg,H) f32
                g = gates_ref[t] + jnp.dot(h.astype(cd), whh,
                                           preferred_element_type=jnp.float32)
                sig = jax.nn.sigmoid(g[:, :3 * H])             # one sigmoid: i,f,o
                i_g = sig[:, :H]
                f_g = sig[:, H:2 * H]
                o_g = sig[:, 2 * H:]
                g_g = jnp.tanh(g[:, 3 * H:])                   # one tanh: cell cand.
                c_new = f_g * c + i_g * g_g
                h_new = o_g * jnp.tanh(c_new)
                seq_ref[t] = h_new.astype(cd)                  # contiguous (Bg,H) slab
                return h_new, c_new

            h_fin, c_fin = lax.fori_loop(0, S, step, (h0_ref[l], c0_ref[l]),
                                         unroll=True)
            hn_ref[l] = h_fin
            cn_ref[l] = c_fin

        # (3) Hoisted Linear: one (S*Bg,H)@(H,I) matmul + single slab store.
        ys = seq_ref[...].reshape(S * Bg, H)
        out = jnp.dot(ys, wlin_ref[...],
                      preferred_element_type=jnp.float32) + blin_ref[...]
        out_ref[...] = out.reshape(S, Bg, I_out).astype(out_ref.dtype)

    return kernel


def rnn_forward(x, h0, c0, lstm_params, wlin_T, blin, *,
                compute_dtype=jnp.float32, num_batch_groups=1):
    """Pallas implementation of RNN.forward: returns (out, (h_n, c_n)).

    compute_dtype: dtype fed to the MXU (bf16 recommended on v6e/v7x, keep f32
        on v5e); accumulation, gate math and the recurrent h/c stay float32.
    num_batch_groups: 'parallel' grid axis over batch groups (v7x megacore);
        >1 requires B % groups == 0 and (B // groups) % 8 == 0.
    """
    B, S, I = x.shape
    L, _, H = h0.shape
    assert len(lstm_params) == L
    G = num_batch_groups
    assert B % G == 0
    Bg = B // G
    assert G == 1 or Bg % 8 == 0, "batch-group blocks need Bg % 8 == 0"

    # Time-major input: layer-0 projection reshape (S*Bg, I) is then free.
    x_t = jnp.swapaxes(x, 0, 1)                                # (S, B, I)

    inputs = [x_t, h0, c0]
    in_specs = [
        pl.BlockSpec((S, Bg, I), lambda g: (0, g, 0)),
        pl.BlockSpec((L, Bg, H), lambda g: (0, g, 0)),
        pl.BlockSpec((L, Bg, H), lambda g: (0, g, 0)),
    ]
    w_bytes = 0
    for (wih_T, whh_T, bih, bhh) in lstm_params:
        wih = _ifgo_to_ifog(wih_T).astype(compute_dtype)       # (in_l, 4H)
        whh = _ifgo_to_ifog(whh_T).astype(compute_dtype)       # (H, 4H)
        b = _ifgo_to_ifog((bih + bhh).reshape(1, 4 * H)).astype(jnp.float32)
        inputs += [wih, whh, b]
        in_specs += [
            pl.BlockSpec(wih.shape, lambda g: (0, 0)),
            pl.BlockSpec(whh.shape, lambda g: (0, 0)),
            pl.BlockSpec((1, 4 * H), lambda g: (0, 0)),
        ]
        w_bytes += (wih.size + whh.size) * jnp.dtype(compute_dtype).itemsize
        w_bytes += b.size * 4
    inputs += [wlin_T.astype(compute_dtype), blin.reshape(1, I).astype(jnp.float32)]
    in_specs += [
        pl.BlockSpec(wlin_T.shape, lambda g: (0, 0)),
        pl.BlockSpec((1, I), lambda g: (0, 0)),
    ]
    w_bytes += wlin_T.size * jnp.dtype(compute_dtype).itemsize + blin.size * 4

    out_shapes = (
        jax.ShapeDtypeStruct((S, B, I), jnp.float32),          # time-major; swapped below
        jax.ShapeDtypeStruct((L, B, H), jnp.float32),          # h_n
        jax.ShapeDtypeStruct((L, B, H), jnp.float32),          # c_n
    )
    out_specs = (
        pl.BlockSpec((S, Bg, I), lambda g: (0, g, 0)),
        pl.BlockSpec((L, Bg, H), lambda g: (0, g, 0)),
        pl.BlockSpec((L, Bg, H), lambda g: (0, g, 0)),
    )

    # Advisory cost estimate so XLA schedules around this one long grid step.
    flops = 0
    for (wih_T, _, _, _) in lstm_params:
        in_l = wih_T.shape[0]
        flops += 2 * S * B * (in_l + H) * 4 * H                # input proj + recurrent
    flops += 2 * S * B * H * I                                 # hoisted Linear
    transcendentals = 5 * S * L * B * H                        # 3 sigm + 2 tanh per unit
    bytes_accessed = int(x.size * 4 + 2 * h0.size * 4 + w_bytes
                         + B * S * I * 4 + 2 * L * B * H * 4)
    cost = pl.CostEstimate(flops=int(flops), transcendentals=int(transcendentals),
                           bytes_accessed=bytes_accessed)

    kernel = _make_lstm_kernel(L, S, H, compute_dtype)

    out_t, hn, cn = pl.pallas_call(
        kernel,
        out_shape=out_shapes,
        grid_spec=pltpu.PrefetchScalarGridSpec(
            num_scalar_prefetch=0,
            grid=(G,),                                         # batch groups; time is internal
            in_specs=in_specs,
            out_specs=out_specs,
            scratch_shapes=[
                pltpu.VMEM((S, Bg, H), compute_dtype),         # layer output over time
                pltpu.VMEM((S, Bg, 4 * H), jnp.float32),       # precomputed input gates
            ]),
        compiler_params=pltpu.CompilerParams(
            dimension_semantics=("parallel",)),
        cost_estimate=cost,
    )(*inputs)

    out = jnp.swapaxes(out_t, 0, 1)                            # back to batch_first (B,S,I)
    return out, (hn, cn)


def lstm_linear_ref(x, h0, c0, lstm_params, wlin_T, blin):
    """Pure-JAX reference matching torch.nn.LSTM(batch_first) + Linear."""
    L, _, H = h0.shape

    def step(carry, xt):
        h, c = carry
        inp = xt
        hs, cs = [], []
        for l in range(L):
            wih_T, whh_T, bih, bhh = lstm_params[l]
            gates = inp @ wih_T + h[l] @ whh_T + bih + bhh
            i = jax.nn.sigmoid(gates[:, :H])
            f = jax.nn.sigmoid(gates[:, H:2 * H])
            g = jnp.tanh(gates[:, 2 * H:3 * H])
            o = jax.nn.sigmoid(gates[:, 3 * H:])
            cn = f * c[l] + i * g
            hn = o * jnp.tanh(cn)
            hs.append(hn)
            cs.append(cn)
            inp = hn
        return (jnp.stack(hs), jnp.stack(cs)), inp

    (hn, cn), ys = jax.lax.scan(step, (h0, c0), jnp.swapaxes(x, 0, 1))
    out = jnp.swapaxes(ys, 0, 1) @ wlin_T + blin
    return out, (hn, cn)


if __name__ == "__main__":
    # Small shapes implied by the module: LSTM(input_size, hidden_size, num_layers)
    batch, seq_len, input_size, hidden_size, lstm_layers = 2, 8, 16, 32, 2

    key = jax.random.PRNGKey(0)
    k = 1.0 / np.sqrt(hidden_size)

    lstm_params = []
    for l in range(lstm_layers):
        in_dim = input_size if l == 0 else hidden_size
        key, k1, k2, k3, k4 = jax.random.split(key, 5)
        wih_T = jax.random.uniform(k1, (in_dim, 4 * hidden_size), jnp.float32, -k, k)
        whh_T = jax.random.uniform(k2, (hidden_size, 4 * hidden_size), jnp.float32, -k, k)
        bih = jax.random.uniform(k3, (4 * hidden_size,), jnp.float32, -k, k)
        bhh = jax.random.uniform(k4, (4 * hidden_size,), jnp.float32, -k, k)
        lstm_params.append((wih_T, whh_T, bih, bhh))

    key, k5, k6, kx, kh, kc = jax.random.split(key, 6)
    wlin_T = jax.random.uniform(k5, (hidden_size, input_size), jnp.float32, -k, k)
    blin = jax.random.uniform(k6, (input_size,), jnp.float32, -k, k)

    x = jax.random.normal(kx, (batch, seq_len, input_size), jnp.float32)
    h0 = jax.random.normal(kh, (lstm_layers, batch, hidden_size), jnp.float32) * 0.1
    c0 = jax.random.normal(kc, (lstm_layers, batch, hidden_size), jnp.float32) * 0.1

    # f32 path — checked tightly against the pure-JAX reference.
    out, (hn, cn) = rnn_forward(x, h0, c0, lstm_params, wlin_T, blin)
    jax.block_until_ready((out, hn, cn))

    out_r, (hn_r, cn_r) = lstm_linear_ref(x, h0, c0, lstm_params, wlin_T, blin)
    np.testing.assert_allclose(np.asarray(out), np.asarray(out_r), atol=3e-5, rtol=3e-5)
    np.testing.assert_allclose(np.asarray(hn), np.asarray(hn_r), atol=3e-5, rtol=3e-5)
    np.testing.assert_allclose(np.asarray(cn), np.asarray(cn_r), atol=3e-5, rtol=3e-5)

    # bf16-weight path (v6e/v7x MXU recommendation) — loose tolerance sanity check.
    out_b, (hn_b, cn_b) = rnn_forward(x, h0, c0, lstm_params, wlin_T, blin,
                                      compute_dtype=jnp.bfloat16)
    jax.block_until_ready((out_b, hn_b, cn_b))
    np.testing.assert_allclose(np.asarray(out_b), np.asarray(out_r), atol=1e-1, rtol=1e-1)

    print("KERNEL_OK")
</pallas_src>

<mosaic_0001>
module attributes {stable_mosaic.version = 11 : i64} {
  func.func @kernel(%arg0: i32, %arg1: memref<8x2x16xf32, #tpu.memory_space<vmem>>, %arg2: memref<2x2x32xf32, #tpu.memory_space<vmem>>, %arg3: memref<2x2x32xf32, #tpu.memory_space<vmem>>, %arg4: memref<16x128xf32, #tpu.memory_space<vmem>>, %arg5: memref<32x128xf32, #tpu.memory_space<vmem>>, %arg6: memref<1x128xf32, #tpu.memory_space<vmem>>, %arg7: memref<32x128xf32, #tpu.memory_space<vmem>>, %arg8: memref<32x128xf32, #tpu.memory_space<vmem>>, %arg9: memref<1x128xf32, #tpu.memory_space<vmem>>, %arg10: memref<32x16xf32, #tpu.memory_space<vmem>>, %arg11: memref<1x16xf32, #tpu.memory_space<vmem>>, %arg12: memref<8x2x16xf32, #tpu.memory_space<vmem>>, %arg13: memref<2x2x32xf32, #tpu.memory_space<vmem>>, %arg14: memref<2x2x32xf32, #tpu.memory_space<vmem>>, %arg15: memref<8x2x32xf32, #tpu.memory_space<vmem>>, %arg16: memref<8x2x128xf32, #tpu.memory_space<vmem>>) attributes {dimension_semantics = [#tpu.dimension_semantics<parallel>], iteration_bounds = array<i64: 1>, scalar_prefetch = 0 : i64, scratch_operands = 2 : i64, tpu.core_type = #tpu.core_type<tc>, window_params = [{transform_indices = @transform_0, window_bounds = array<i64: 8, 2, 16>}, {transform_indices = @transform_1, window_bounds = array<i64: 2, 2, 32>}, {transform_indices = @transform_2, window_bounds = array<i64: 2, 2, 32>}, {pipeline_mode = #tpu.pipeline_mode<synchronous>, transform_indices = @transform_3, window_bounds = array<i64: 16, 128>}, {pipeline_mode = #tpu.pipeline_mode<synchronous>, transform_indices = @transform_4, window_bounds = array<i64: 32, 128>}, {pipeline_mode = #tpu.pipeline_mode<synchronous>, transform_indices = @transform_5, window_bounds = array<i64: 1, 128>}, {pipeline_mode = #tpu.pipeline_mode<synchronous>, transform_indices = @transform_6, window_bounds = array<i64: 32, 128>}, {pipeline_mode = #tpu.pipeline_mode<synchronous>, transform_indices = @transform_7, window_bounds = array<i64: 32, 128>}, {pipeline_mode = #tpu.pipeline_mode<synchronous>, transform_indices = @transform_8, window_bounds = array<i64: 1, 128>}, {pipeline_mode = #tpu.pipeline_mode<synchronous>, transform_indices = @transform_9, window_bounds = array<i64: 32, 16>}, {pipeline_mode = #tpu.pipeline_mode<synchronous>, transform_indices = @transform_10, window_bounds = array<i64: 1, 16>}, {transform_indices = @transform_11, window_bounds = array<i64: 8, 2, 16>}, {transform_indices = @transform_12, window_bounds = array<i64: 2, 2, 32>}, {transform_indices = @transform_13, window_bounds = array<i64: 2, 2, 32>}]} {
    %c0 = arith.constant 0 : index
    %c0_0 = arith.constant 0 : index
    %0 = vector.load %arg4[%c0, %c0_0] : memref<16x128xf32, #tpu.memory_space<vmem>>, vector<16x128xf32>
    %c0_1 = arith.constant 0 : index
    %c0_2 = arith.constant 0 : index
    %1 = vector.load %arg5[%c0_1, %c0_2] : memref<32x128xf32, #tpu.memory_space<vmem>>, vector<32x128xf32>
    %c0_3 = arith.constant 0 : index
    %c0_4 = arith.constant 0 : index
    %2 = vector.load %arg6[%c0_3, %c0_4] : memref<1x128xf32, #tpu.memory_space<vmem>>, vector<1x128xf32>
    %c0_5 = arith.constant 0 : index
    %c0_6 = arith.constant 0 : index
    %c0_7 = arith.constant 0 : index
    %3 = vector.load %arg1[%c0_5, %c0_6, %c0_7] : memref<8x2x16xf32, #tpu.memory_space<vmem>>, vector<8x2x16xf32>
    %4 = vector.shape_cast %3 : vector<8x2x16xf32> to vector<16x16xf32>
    %cst = arith.constant dense<0.000000e+00> : vector<16x128xf32>
    %5 = tpu.matmul %4, %0, %cst {dimension_numbers = #tpu.dot_dimension_numbers<[1], [0], [0], [1], [0, 0, 1, 1], [], []>} : vector<16x16xf32>, vector<16x128xf32>, vector<16x128xf32> -> vector<16x128xf32>
    %6 = vector.broadcast %2 : vector<1x128xf32> to vector<16x128xf32>
    %7 = arith.addf %5, %6 : vector<16x128xf32>
    %8 = vector.shape_cast %7 : vector<16x128xf32> to vector<8x2x128xf32>
    %c0_8 = arith.constant 0 : index
    %c0_9 = arith.constant 0 : index
    %c0_10 = arith.constant 0 : index
    %9 = vector.load %arg16[%c0_8, %c0_9, %c0_10] : memref<8x2x128xf32, #tpu.memory_space<vmem>>, vector<8x2x128xf32>
    tpu.vector_store %arg16[%c0_8, %c0_9, %c0_10], %8 {strides = array<i32>} : memref<8x2x128xf32, #tpu.memory_space<vmem>>, vector<8x2x128xf32>,
    %c0_11 = arith.constant 0 : index
    %c0_12 = arith.constant 0 : index
    %c0_13 = arith.constant 0 : index
    %10 = vector.load %arg2[%c0_11, %c0_12, %c0_13] : memref<2x2x32xf32, #tpu.memory_space<vmem>>, vector<1x2x32xf32>
    %11 = vector.shape_cast %10 : vector<1x2x32xf32> to vector<2x32xf32>
    %c0_14 = arith.constant 0 : index
    %c0_15 = arith.constant 0 : index
    %c0_16 = arith.constant 0 : index
    %12 = vector.load %arg3[%c0_14, %c0_15, %c0_16] : memref<2x2x32xf32, #tpu.memory_space<vmem>>, vector<1x2x32xf32>
    %13 = vector.shape_cast %12 : vector<1x2x32xf32> to vector<2x32xf32>
    %c0_i32 = arith.constant 0 : i32
    %14 = arith.index_cast %c0_i32 : i32 to index
    %c0_17 = arith.constant 0 : index
    %c0_18 = arith.constant 0 : index
    %15 = vector.load %arg16[%14, %c0_17, %c0_18] : memref<8x2x128xf32, #tpu.memory_space<vmem>>, vector<1x2x128xf32>
    %16 = vector.shape_cast %15 : vector<1x2x128xf32> to vector<2x128xf32>
    %cst_19 = arith.constant dense<0.000000e+00> : vector<2x128xf32>
    %17 = tpu.matmul %11, %1, %cst_19 {dimension_numbers = #tpu.dot_dimension_numbers<[1], [0], [0], [1], [0, 0, 1, 1], [], []>} : vector<2x32xf32>, vector<32x128xf32>, vector<2x128xf32> -> vector<2x128xf32>
    %18 = arith.addf %16, %17 : vector<2x128xf32>
    %19 = vector.extract_strided_slice %18 {offsets = [0, 0], sizes = [2, 96], strides = [1, 1]} : vector<2x128xf32> to vector<2x96xf32>
    %20 = arith.negf %19 : vector<2x96xf32>
    %21 = math.exp %20 : vector<2x96xf32>
    %cst_20 = arith.constant 1.000000e+00 : f32
    %22 = vector.broadcast %cst_20 : f32 to vector<2x96xf32>
    %23 = arith.addf %22, %21 : vector<2x96xf32>
    %24 = arith.divf %22, %23 : vector<2x96xf32>
    %25 = vector.extract_strided_slice %24 {offsets = [0, 0], sizes = [2, 32], strides = [1, 1]} : vector<2x96xf32> to vector<2x32xf32>
    %26 = vector.extract_strided_slice %24 {offsets = [0, 32], sizes = [2, 32], strides = [1, 1]} : vector<2x96xf32> to vector<2x32xf32>
    %27 = vector.extract_strided_slice %24 {offsets = [0, 64], sizes = [2, 32], strides = [1, 1]} : vector<2x96xf32> to vector<2x32xf32>
    %28 = vector.extract_strided_slice %18 {offsets = [0, 96], sizes = [2, 32], strides = [1, 1]} : vector<2x128xf32> to vector<2x32xf32>
    %29 = math.tanh %28 : vector<2x32xf32>
    %30 = arith.mulf %26, %13 : vector<2x32xf32>
    %31 = arith.mulf %25, %29 : vector<2x32xf32>
    %32 = arith.addf %30, %31 : vector<2x32xf32>
    %33 = math.tanh %32 : vector<2x32xf32>
    %34 = arith.mulf %27, %33 : vector<2x32xf32>
    %35 = arith.index_cast %c0_i32 : i32 to index
    %c0_21 = arith.constant 0 : index
    %c0_22 = arith.constant 0 : index
    %36 = vector.load %arg15[%35, %c0_21, %c0_22] : memref<8x2x32xf32, #tpu.memory_space<vmem>>, vector<1x2x32xf32>
    %37 = vector.shape_cast %36 : vector<1x2x32xf32> to vector<2x32xf32>
    %38 = vector.shape_cast %34 : vector<2x32xf32> to vector<1x2x32xf32>
    tpu.vector_store %arg15[%35, %c0_21, %c0_22], %38 {strides = array<i32>} : memref<8x2x32xf32, #tpu.memory_space<vmem>>, vector<1x2x32xf32>,
    %c1_i32 = arith.constant 1 : i32
    %39 = arith.index_cast %c1_i32 : i32 to index
    %c0_23 = arith.constant 0 : index
    %c0_24 = arith.constant 0 : index
    %40 = vector.load %arg16[%39, %c0_23, %c0_24] : memref<8x2x128xf32, #tpu.memory_space<vmem>>, vector<1x2x128xf32>
    %41 = vector.shape_cast %40 : vector<1x2x128xf32> to vector<2x128xf32>
    %cst_25 = arith.constant dense<0.000000e+00> : vector<2x128xf32>
    %42 = tpu.matmul %34, %1, %cst_25 {dimension_numbers = #tpu.dot_dimension_numbers<[1], [0], [0], [1], [0, 0, 1, 1], [], []>} : vector<2x32xf32>, vector<32x128xf32>, vector<2x128xf32> -> vector<2x128xf32>
    %43 = arith.addf %41, %42 : vector<2x128xf32>
    %44 = vector.extract_strided_slice %43 {offsets = [0, 0], sizes = [2, 96], strides = [1, 1]} : vector<2x128xf32> to vector<2x96xf32>
    %45 = arith.negf %44 : vector<2x96xf32>
    %46 = math.exp %45 : vector<2x96xf32>
    %cst_26 = arith.constant 1.000000e+00 : f32
    %47 = vector.broadcast %cst_26 : f32 to vector<2x96xf32>
    %48 = arith.addf %47, %46 : vector<2x96xf32>
    %49 = arith.divf %47, %48 : vector<2x96xf32>
    %50 = vector.extract_strided_slice %49 {offsets = [0, 0], sizes = [2, 32], strides = [1, 1]} : vector<2x96xf32> to vector<2x32xf32>
    %51 = vector.extract_strided_slice %49 {offsets = [0, 32], sizes = [2, 32], strides = [1, 1]} : vector<2x96xf32> to vector<2x32xf32>
    %52 = vector.extract_strided_slice %49 {offsets = [0, 64], sizes = [2, 32], strides = [1, 1]} : vector<2x96xf32> to vector<2x32xf32>
    %53 = vector.extract_strided_slice %43 {offsets = [0, 96], sizes = [2, 32], strides = [1, 1]} : vector<2x128xf32> to vector<2x32xf32>
    %54 = math.tanh %53 : vector<2x32xf32>
    %55 = arith.mulf %51, %32 : vector<2x32xf32>
    %56 = arith.mulf %50, %54 : vector<2x32xf32>
    %57 = arith.addf %55, %56 : vector<2x32xf32>
    %58 = math.tanh %57 : vector<2x32xf32>
    %59 = arith.mulf %52, %58 : vector<2x32xf32>
    %60 = arith.index_cast %c1_i32 : i32 to index
    %c0_27 = arith.constant 0 : index
    %c0_28 = arith.constant 0 : index
    %61 = vector.load %arg15[%60, %c0_27, %c0_28] : memref<8x2x32xf32, #tpu.memory_space<vmem>>, vector<1x2x32xf32>
    %62 = vector.shape_cast %61 : vector<1x2x32xf32> to vector<2x32xf32>
    %63 = vector.shape_cast %59 : vector<2x32xf32> to vector<1x2x32xf32>
    tpu.vector_store %arg15[%60, %c0_27, %c0_28], %63 {strides = array<i32>} : memref<8x2x32xf32, #tpu.memory_space<vmem>>, vector<1x2x32xf32>,
    %c2_i32 = arith.constant 2 : i32
    %64 = arith.index_cast %c2_i32 : i32 to index
    %c0_29 = arith.constant 0 : index
    %c0_30 = arith.constant 0 : index
    %65 = vector.load %arg16[%64, %c0_29, %c0_30] : memref<8x2x128xf32, #tpu.memory_space<vmem>>, vector<1x2x128xf32>
    %66 = vector.shape_cast %65 : vector<1x2x128xf32> to vector<2x128xf32>
    %cst_31 = arith.constant dense<0.000000e+00> : vector<2x128xf32>
    %67 = tpu.matmul %59, %1, %cst_31 {dimension_numbers = #tpu.dot_dimension_numbers<[1], [0], [0], [1], [0, 0, 1, 1], [], []>} : vector<2x32xf32>, vector<32x128xf32>, vector<2x128xf32> -> vector<2x128xf32>
    %68 = arith.addf %66, %67 : vector<2x128xf32>
    %69 = vector.extract_strided_slice %68 {offsets = [0, 0], sizes = [2, 96], strides = [1, 1]} : vector<2x128xf32> to vector<2x96xf32>
    %70 = arith.negf %69 : vector<2x96xf32>
    %71 = math.exp %70 : vector<2x96xf32>
    %cst_32 = arith.constant 1.000000e+00 : f32
    %72 = vector.broadcast %cst_32 : f32 to vector<2x96xf32>
    %73 = arith.addf %72, %71 : vector<2x96xf32>
    %74 = arith.divf %72, %73 : vector<2x96xf32>
    %75 = vector.extract_strided_slice %74 {offsets = [0, 0], sizes = [2, 32], strides = [1, 1]} : vector<2x96xf32> to vector<2x32xf32>
    %76 = vector.extract_strided_slice %74 {offsets = [0, 32], sizes = [2, 32], strides = [1, 1]} : vector<2x96xf32> to vector<2x32xf32>
    %77 = vector.extract_strided_slice %74 {offsets = [0, 64], sizes = [2, 32], strides = [1, 1]} : vector<2x96xf32> to vector<2x32xf32>
    %78 = vector.extract_strided_slice %68 {offsets = [0, 96], sizes = [2, 32], strides = [1, 1]} : vector<2x128xf32> to vector<2x32xf32>
    %79 = math.tanh %78 : vector<2x32xf32>
    %80 = arith.mulf %76, %57 : vector<2x32xf32>
    %81 = arith.mulf %75, %79 : vector<2x32xf32>
    %82 = arith.addf %80, %81 : vector<2x32xf32>
    %83 = math.tanh %82 : vector<2x32xf32>
    %84 = arith.mulf %77, %83 : vector<2x32xf32>
    %85 = arith.index_cast %c2_i32 : i32 to index
    %c0_33 = arith.constant 0 : index
    %c0_34 = arith.constant 0 : index
    %86 = vector.load %arg15[%85, %c0_33, %c0_34] : memref<8x2x32xf32, #tpu.memory_space<vmem>>, vector<1x2x32xf32>
    %87 = vector.shape_cast %86 : vector<1x2x32xf32> to vector<2x32xf32>
    %88 = vector.shape_cast %84 : vector<2x32xf32> to vector<1x2x32xf32>
    tpu.vector_store %arg15[%85, %c0_33, %c0_34], %88 {strides = array<i32>} : memref<8x2x32xf32, #tpu.memory_space<vmem>>, vector<1x2x32xf32>,
    %c3_i32 = arith.constant 3 : i32
    %89 = arith.index_cast %c3_i32 : i32 to index
    %c0_35 = arith.constant 0 : index
    %c0_36 = arith.constant 0 : index
    %90 = vector.load %arg16[%89, %c0_35, %c0_36] : memref<8x2x128xf32, #tpu.memory_space<vmem>>, vector<1x2x128xf32>
    %91 = vector.shape_cast %90 : vector<1x2x128xf32> to vector<2x128xf32>
    %cst_37 = arith.constant dense<0.000000e+00> : vector<2x128xf32>
    %92 = tpu.matmul %84, %1, %cst_37 {dimension_numbers = #tpu.dot_dimension_numbers<[1], [0], [0], [1], [0, 0, 1, 1], [], []>} : vector<2x32xf32>, vector<32x128xf32>, vector<2x128xf32> -> vector<2x128xf32>
    %93 = arith.addf %91, %92 : vector<2x128xf32>
    %94 = vector.extract_strided_slice %93 {offsets = [0, 0], sizes = [2, 96], strides = [1, 1]} : vector<2x128xf32> to vector<2x96xf32>
    %95 = arith.negf %94 : vector<2x96xf32>
    %96 = math.exp %95 : vector<2x96xf32>
    %cst_38 = arith.constant 1.000000e+00 : f32
    %97 = vector.broadcast %cst_38 : f32 to vector<2x96xf32>
    %98 = arith.addf %97, %96 : vector<2x96xf32>
    %99 = arith.divf %97, %98 : vector<2x96xf32>
    %100 = vector.extract_strided_slice %99 {offsets = [0, 0], sizes = [2, 32], strides = [1, 1]} : vector<2x96xf32> to vector<2x32xf32>
    %101 = vector.extract_strided_slice %99 {offsets = [0, 32], sizes = [2, 32], strides = [1, 1]} : vector<2x96xf32> to vector<2x32xf32>
    %102 = vector.extract_strided_slice %99 {offsets = [0, 64], sizes = [2, 32], strides = [1, 1]} : vector<2x96xf32> to vector<2x32xf32>
    %103 = vector.extract_strided_slice %93 {offsets = [0, 96], sizes = [2, 32], strides = [1, 1]} : vector<2x128xf32> to vector<2x32xf32>
    %104 = math.tanh %103 : vector<2x32xf32>
    %105 = arith.mulf %101, %82 : vector<2x32xf32>
    %106 = arith.mulf %100, %104 : vector<2x32xf32>
    %107 = arith.addf %105, %106 : vector<2x32xf32>
    %108 = math.tanh %107 : vector<2x32xf32>
    %109 = arith.mulf %102, %108 : vector<2x32xf32>
    %110 = arith.index_cast %c3_i32 : i32 to index
    %c0_39 = arith.constant 0 : index
    %c0_40 = arith.constant 0 : index
    %111 = vector.load %arg15[%110, %c0_39, %c0_40] : memref<8x2x32xf32, #tpu.memory_space<vmem>>, vector<1x2x32xf32>
    %112 = vector.shape_cast %111 : vector<1x2x32xf32> to vector<2x32xf32>
    %113 = vector.shape_cast %109 : vector<2x32xf32> to vector<1x2x32xf32>
    tpu.vector_store %arg15[%110, %c0_39, %c0_40], %113 {strides = array<i32>} : memref<8x2x32xf32, #tpu.memory_space<vmem>>, vector<1x2x32xf32>,
    %c4_i32 = arith.constant 4 : i32
    %114 = arith.index_cast %c4_i32 : i32 to index
    %c0_41 = arith.constant 0 : index
    %c0_42 = arith.constant 0 : index
    %115 = vector.load %arg16[%114, %c0_41, %c0_42] : memref<8x2x128xf32, #tpu.memory_space<vmem>>, vector<1x2x128xf32>
    %116 = vector.shape_cast %115 : vector<1x2x128xf32> to vector<2x128xf32>
    %cst_43 = arith.constant dense<0.000000e+00> : vector<2x128xf32>
    %117 = tpu.matmul %109, %1, %cst_43 {dimension_numbers = #tpu.dot_dimension_numbers<[1], [0], [0], [1], [0, 0, 1, 1], [], []>} : vector<2x32xf32>, vector<32x128xf32>, vector<2x128xf32> -> vector<2x128xf32>
    %118 = arith.addf %116, %117 : vector<2x128xf32>
    %119 = vector.extract_strided_slice %118 {offsets = [0, 0], sizes = [2, 96], strides = [1, 1]} : vector<2x128xf32> to vector<2x96xf32>
    %120 = arith.negf %119 : vector<2x96xf32>
    %121 = math.exp %120 : vector<2x96xf32>
    %cst_44 = arith.constant 1.000000e+00 : f32
    %122 = vector.broadcast %cst_44 : f32 to vector<2x96xf32>
    %123 = arith.addf %122, %121 : vector<2x96xf32>
    %124 = arith.divf %122, %123 : vector<2x96xf32>
    %125 = vector.extract_strided_slice %124 {offsets = [0, 0], sizes = [2, 32], strides = [1, 1]} : vector<2x96xf32> to vector<2x32xf32>
    %126 = vector.extract_strided_slice %124 {offsets = [0, 32], sizes = [2, 32], strides = [1, 1]} : vector<2x96xf32> to vector<2x32xf32>
    %127 = vector.extract_strided_slice %124 {offsets = [0, 64], sizes = [2, 32], strides = [1, 1]} : vector<2x96xf32> to vector<2x32xf32>
    %128 = vector.extract_strided_slice %118 {offsets = [0, 96], sizes = [2, 32], strides = [1, 1]} : vector<2x128xf32> to vector<2x32xf32>
    %129 = math.tanh %128 : vector<2x32xf32>
    %130 = arith.mulf %126, %107 : vector<2x32xf32>
    %131 = arith.mulf %125, %129 : vector<2x32xf32>
    %132 = arith.addf %130, %131 : vector<2x32xf32>
    %133 = math.tanh %132 : vector<2x32xf32>
    %134 = arith.mulf %127, %133 : vector<2x32xf32>
    %135 = arith.index_cast %c4_i32 : i32 to index
    %c0_45 = arith.constant 0 : index
    %c0_46 = arith.constant 0 : index
    %136 = vector.load %arg15[%135, %c0_45, %c0_46] : memref<8x2x32xf32, #tpu.memory_space<vmem>>, vector<1x2x32xf32>
    %137 = vector.shape_cast %136 : vector<1x2x32xf32> to vector<2x32xf32>
    %138 = vector.shape_cast %134 : vector<2x32xf32> to vector<1x2x32xf32>
    tpu.vector_store %arg15[%135, %c0_45, %c0_46], %138 {strides = array<i32>} : memref<8x2x32xf32, #tpu.memory_space<vmem>>, vector<1x2x32xf32>,
    %c5_i32 = arith.constant 5 : i32
    %139 = arith.index_cast %c5_i32 : i32 to index
    %c0_47 = arith.constant 0 : index
    %c0_48 = arith.constant 0 : index
    %140 = vector.load %arg16[%139, %c0_47, %c0_48] : memref<8x2x128xf32, #tpu.memory_space<vmem>>, vector<1x2x128xf32>
    %141 = vector.shape_cast %140 : vector<1x2x128xf32> to vector<2x128xf32>
    %cst_49 = arith.constant dense<0.000000e+00> : vector<2x128xf32>
    %142 = tpu.matmul %134, %1, %cst_49 {dimension_numbers = #tpu.dot_dimension_numbers<[1], [0], [0], [1], [0, 0, 1, 1], [], []>} : vector<2x32xf32>, vector<32x128xf32>, vector<2x128xf32> -> vector<2x128xf32>
    %143 = arith.addf %141, %142 : vector<2x128xf32>
    %144 = vector.extract_strided_slice %143 {offsets = [0, 0], sizes = [2, 96], strides = [1, 1]} : vector<2x128xf32> to vector<2x96xf32>
    %145 = arith.negf %144 : vector<2x96xf32>
    %146 = math.exp %145 : vector<2x96xf32>
    %cst_50 = arith.constant 1.000000e+00 : f32
    %147 = vector.broadcast %cst_50 : f32 to vector<2x96xf32>
    %148 = arith.addf %147, %146 : vector<2x96xf32>
    %149 = arith.divf %147, %148 : vector<2x96xf32>
    %150 = vector.extract_strided_slice %149 {offsets = [0, 0], sizes = [2, 32], strides = [1, 1]} : vector<2x96xf32> to vector<2x32xf32>
    %151 = vector.extract_strided_slice %149 {offsets = [0, 32], sizes = [2, 32], strides = [1, 1]} : vector<2x96xf32> to vector<2x32xf32>
    %152 = vector.extract_strided_slice %149 {offsets = [0, 64], sizes = [2, 32], strides = [1, 1]} : vector<2x96xf32> to vector<2x32xf32>
    %153 = vector.extract_strided_slice %143 {offsets = [0, 96], sizes = [2, 32], strides = [1, 1]} : vector<2x128xf32> to vector<2x32xf32>
    %154 = math.tanh %153 : vector<2x32xf32>
    %155 = arith.mulf %151, %132 : vector<2x32xf32>
    %156 = arith.mulf %150, %154 : vector<2x32xf32>
    %157 = arith.addf %155, %156 : vector<2x32xf32>
    %158 = math.tanh %157 : vector<2x32xf32>
    %159 = arith.mulf %152, %158 : vector<2x32xf32>
    %160 = arith.index_cast %c5_i32 : i32 to index
    %c0_51 = arith.constant 0 : index
    %c0_52 = arith.constant 0 : index
    %161 = vector.load %arg15[%160, %c0_51, %c0_52] : memref<8x2x32xf32, #tpu.memory_space<vmem>>, vector<1x2x32xf32>
    %162 = vector.shape_cast %161 : vector<1x2x32xf32> to vector<2x32xf32>
    %163 = vector.shape_cast %159 : vector<2x32xf32> to vector<1x2x32xf32>
    tpu.vector_store %arg15[%160, %c0_51, %c0_52], %163 {strides = array<i32>} : memref<8x2x32xf32, #tpu.memory_space<vmem>>, vector<1x2x32xf32>,
    %c6_i32 = arith.constant 6 : i32
    %164 = arith.index_cast %c6_i32 : i32 to index
    %c0_53 = arith.constant 0 : index
    %c0_54 = arith.constant 0 : index
    %165 = vector.load %arg16[%164, %c0_53, %c0_54] : memref<8x2x128xf32, #tpu.memory_space<vmem>>, vector<1x2x128xf32>
    %166 = vector.shape_cast %165 : vector<1x2x128xf32> to vector<2x128xf32>
    %cst_55 = arith.constant dense<0.000000e+00> : vector<2x128xf32>
    %167 = tpu.matmul %159, %1, %cst_55 {dimension_numbers = #tpu.dot_dimension_numbers<[1], [0], [0], [1], [0, 0, 1, 1], [], []>} : vector<2x32xf32>, vector<32x128xf32>, vector<2x128xf32> -> vector<2x128xf32>
    %168 = arith.addf %166, %167 : vector<2x128xf32>
    %169 = vector.extract_strided_slice %168 {offsets = [0, 0], sizes = [2, 96], strides = [1, 1]} : vector<2x128xf32> to vector<2x96xf32>
    %170 = arith.negf %169 : vector<2x96xf32>
    %171 = math.exp %170 : vector<2x96xf32>
    %cst_56 = arith.constant 1.000000e+00 : f32
    %172 = vector.broadcast %cst_56 : f32 to vector<2x96xf32>
    %173 = arith.addf %172, %171 : vector<2x96xf32>
    %174 = arith.divf %172, %173 : vector<2x96xf32>
    %175 = vector.extract_strided_slice %174 {offsets = [0, 0], sizes = [2, 32], strides = [1, 1]} : vector<2x96xf32> to vector<2x32xf32>
    %176 = vector.extract_strided_slice %174 {offsets = [0, 32], sizes = [2, 32], strides = [1, 1]} : vector<2x96xf32> to vector<2x32xf32>
    %177 = vector.extract_strided_slice %174 {offsets = [0, 64], sizes = [2, 32], strides = [1, 1]} : vector<2x96xf32> to vector<2x32xf32>
    %178 = vector.extract_strided_slice %168 {offsets = [0, 96], sizes = [2, 32], strides = [1, 1]} : vector<2x128xf32> to vector<2x32xf32>
    %179 = math.tanh %178 : vector<2x32xf32>
    %180 = arith.mulf %176, %157 : vector<2x32xf32>
    %181 = arith.mulf %175, %179 : vector<2x32xf32>
    %182 = arith.addf %180, %181 : vector<2x32xf32>
    %183 = math.tanh %182 : vector<2x32xf32>
    %184 = arith.mulf %177, %183 : vector<2x32xf32>
    %185 = arith.index_cast %c6_i32 : i32 to index
    %c0_57 = arith.constant 0 : index
    %c0_58 = arith.constant 0 : index
    %186 = vector.load %arg15[%185, %c0_57, %c0_58] : memref<8x2x32xf32, #tpu.memory_space<vmem>>, vector<1x2x32xf32>
    %187 = vector.shape_cast %186 : vector<1x2x32xf32> to vector<2x32xf32>
    %188 = vector.shape_cast %184 : vector<2x32xf32> to vector<1x2x32xf32>
    tpu.vector_store %arg15[%185, %c0_57, %c0_58], %188 {strides = array<i32>} : memref<8x2x32xf32, #tpu.memory_space<vmem>>, vector<1x2x32xf32>,
    %c7_i32 = arith.constant 7 : i32
    %189 = arith.index_cast %c7_i32 : i32 to index
    %c0_59 = arith.constant 0 : index
    %c0_60 = arith.constant 0 : index
    %190 = vector.load %arg16[%189, %c0_59, %c0_60] : memref<8x2x128xf32, #tpu.memory_space<vmem>>, vector<1x2x128xf32>
    %191 = vector.shape_cast %190 : vector<1x2x128xf32> to vector<2x128xf32>
    %cst_61 = arith.constant dense<0.000000e+00> : vector<2x128xf32>
    %192 = tpu.matmul %184, %1, %cst_61 {dimension_numbers = #tpu.dot_dimension_numbers<[1], [0], [0], [1], [0, 0, 1, 1], [], []>} : vector<2x32xf32>, vector<32x128xf32>, vector<2x128xf32> -> vector<2x128xf32>
    %193 = arith.addf %191, %192 : vector<2x128xf32>
    %194 = vector.extract_strided_slice %193 {offsets = [0, 0], sizes = [2, 96], strides = [1, 1]} : vector<2x128xf32> to vector<2x96xf32>
    %195 = arith.negf %194 : vector<2x96xf32>
    %196 = math.exp %195 : vector<2x96xf32>
    %cst_62 = arith.constant 1.000000e+00 : f32
    %197 = vector.broadcast %cst_62 : f32 to vector<2x96xf32>
    %198 = arith.addf %197, %196 : vector<2x96xf32>
    %199 = arith.divf %197, %198 : vector<2x96xf32>
    %200 = vector.extract_strided_slice %199 {offsets = [0, 0], sizes = [2, 32], strides = [1, 1]} : vector<2x96xf32> to vector<2x32xf32>
    %201 = vector.extract_strided_slice %199 {offsets = [0, 32], sizes = [2, 32], strides = [1, 1]} : vector<2x96xf32> to vector<2x32xf32>
    %202 = vector.extract_strided_slice %199 {offsets = [0, 64], sizes = [2, 32], strides = [1, 1]} : vector<2x96xf32> to vector<2x32xf32>
    %203 = vector.extract_strided_slice %193 {offsets = [0, 96], sizes = [2, 32], strides = [1, 1]} : vector<2x128xf32> to vector<2x32xf32>
    %204 = math.tanh %203 : vector<2x32xf32>
    %205 = arith.mulf %201, %182 : vector<2x32xf32>
    %206 = arith.mulf %200, %204 : vector<2x32xf32>
    %207 = arith.addf %205, %206 : vector<2x32xf32>
    %208 = math.tanh %207 : vector<2x32xf32>
    %209 = arith.mulf %202, %208 : vector<2x32xf32>
    %210 = arith.index_cast %c7_i32 : i32 to index
    %c0_63 = arith.constant 0 : index
    %c0_64 = arith.constant 0 : index
    %211 = vector.load %arg15[%210, %c0_63, %c0_64] : memref<8x2x32xf32, #tpu.memory_space<vmem>>, vector<1x2x32xf32>
    %212 = vector.shape_cast %211 : vector<1x2x32xf32> to vector<2x32xf32>
    %213 = vector.shape_cast %209 : vector<2x32xf32> to vector<1x2x32xf32>
    tpu.vector_store %arg15[%210, %c0_63, %c0_64], %213 {strides = array<i32>} : memref<8x2x32xf32, #tpu.memory_space<vmem>>, vector<1x2x32xf32>,
    %c8_i32 = arith.constant 8 : i32
    %c0_65 = arith.constant 0 : index
    %c0_66 = arith.constant 0 : index
    %c0_67 = arith.constant 0 : index
    %214 = vector.load %arg13[%c0_65, %c0_66, %c0_67] : memref<2x2x32xf32, #tpu.memory_space<vmem>>, vector<1x2x32xf32>
    %215 = vector.shape_cast %214 : vector<1x2x32xf32> to vector<2x32xf32>
    %216 = vector.shape_cast %209 : vector<2x32xf32> to vector<1x2x32xf32>
    tpu.vector_store %arg13[%c0_65, %c0_66, %c0_67], %216 {strides = array<i32>} : memref<2x2x32xf32, #tpu.memory_space<vmem>>, vector<1x2x32xf32>,
    %c0_68 = arith.constant 0 : index
    %c0_69 = arith.constant 0 : index
    %c0_70 = arith.constant 0 : index
    %217 = vector.load %arg14[%c0_68, %c0_69, %c0_70] : memref<2x2x32xf32, #tpu.memory_space<vmem>>, vector<1x2x32xf32>
    %218 = vector.shape_cast %217 : vector<1x2x32xf32> to vector<2x32xf32>
    %219 = vector.shape_cast %207 : vector<2x32xf32> to vector<1x2x32xf32>
    tpu.vector_store %arg14[%c0_68, %c0_69, %c0_70], %219 {strides = array<i32>} : memref<2x2x32xf32, #tpu.memory_space<vmem>>, vector<1x2x32xf32>,
    %c0_71 = arith.constant 0 : index
    %c0_72 = arith.constant 0 : index
    %220 = vector.load %arg7[%c0_71, %c0_72] : memref<32x128xf32, #tpu.memory_space<vmem>>, vector<32x128xf32>
    %c0_73 = arith.constant 0 : index
    %c0_74 = arith.constant 0 : index
    %221 = vector.load %arg8[%c0_73, %c0_74] : memref<32x128xf32, #tpu.memory_space<vmem>>, vector<32x128xf32>
    %c0_75 = arith.constant 0 : index
    %c0_76 = arith.constant 0 : index
    %222 = vector.load %arg9[%c0_75, %c0_76] : memref<1x128xf32, #tpu.memory_space<vmem>>, vector<1x128xf32>
    %c0_77 = arith.constant 0 : index
    %c0_78 = arith.constant 0 : index
    %c0_79 = arith.constant 0 : index
    %223 = vector.load %arg15[%c0_77, %c0_78, %c0_79] : memref<8x2x32xf32, #tpu.memory_space<vmem>>, vector<8x2x32xf32>
    %224 = vector.shape_cast %223 : vector<8x2x32xf32> to vector<16x32xf32>
    %cst_80 = arith.constant dense<0.000000e+00> : vector<16x128xf32>
    %225 = tpu.matmul %224, %220, %cst_80 {dimension_numbers = #tpu.dot_dimension_numbers<[1], [0], [0], [1], [0, 0, 1, 1], [], []>} : vector<16x32xf32>, vector<32x128xf32>, vector<16x128xf32> -> vector<16x128xf32>
    %226 = vector.broadcast %222 : vector<1x128xf32> to vector<16x128xf32>
    %227 = arith.addf %225, %226 : vector<16x128xf32>
    %228 = vector.shape_cast %227 : vector<16x128xf32> to vector<8x2x128xf32>
    %c0_81 = arith.constant 0 : index
    %c0_82 = arith.constant 0 : index
    %c0_83 = arith.constant 0 : index
    %229 = vector.load %arg16[%c0_81, %c0_82, %c0_83] : memref<8x2x128xf32, #tpu.memory_space<vmem>>, vector<8x2x128xf32>
    tpu.vector_store %arg16[%c0_81, %c0_82, %c0_83], %228 {strides = array<i32>} : memref<8x2x128xf32, #tpu.memory_space<vmem>>, vector<8x2x128xf32>,
    %c1 = arith.constant 1 : index
    %c0_84 = arith.constant 0 : index
    %c0_85 = arith.constant 0 : index
    %230 = vector.load %arg2[%c1, %c0_84, %c0_85] : memref<2x2x32xf32, #tpu.memory_space<vmem>>, vector<1x2x32xf32>
    %231 = vector.shape_cast %230 : vector<1x2x32xf32> to vector<2x32xf32>
    %c1_86 = arith.constant 1 : index
    %c0_87 = arith.constant 0 : index
    %c0_88 = arith.constant 0 : index
    %232 = vector.load %arg3[%c1_86, %c0_87, %c0_88] : memref<2x2x32xf32, #tpu.memory_space<vmem>>, vector<1x2x32xf32>
    %233 = vector.shape_cast %232 : vector<1x2x32xf32> to vector<2x32xf32>
    %c0_i32_89 = arith.constant 0 : i32
    %234 = arith.index_cast %c0_i32_89 : i32 to index
    %c0_90 = arith.constant 0 : index
    %c0_91 = arith.constant 0 : index
    %235 = vector.load %arg16[%234, %c0_90, %c0_91] : memref<8x2x128xf32, #tpu.memory_space<vmem>>, vector<1x2x128xf32>
    %236 = vector.shape_cast %235 : vector<1x2x128xf32> to vector<2x128xf32>
    %cst_92 = arith.constant dense<0.000000e+00> : vector<2x128xf32>
    %237 = tpu.matmul %231, %221, %cst_92 {dimension_numbers = #tpu.dot_dimension_numbers<[1], [0], [0], [1], [0, 0, 1, 1], [], []>} : vector<2x32xf32>, vector<32x128xf32>, vector<2x128xf32> -> vector<2x128xf32>
    %238 = arith.addf %236, %237 : vector<2x128xf32>
    %239 = vector.extract_strided_slice %238 {offsets = [0, 0], sizes = [2, 96], strides = [1, 1]} : vector<2x128xf32> to vector<2x96xf32>
    %240 = arith.negf %239 : vector<2x96xf32>
    %241 = math.exp %240 : vector<2x96xf32>
    %cst_93 = arith.constant 1.000000e+00 : f32
    %242 = vector.broadcast %cst_93 : f32 to vector<2x96xf32>
    %243 = arith.addf %242, %241 : vector<2x96xf32>
    %244 = arith.divf %242, %243 : vector<2x96xf32>
    %245 = vector.extract_strided_slice %244 {offsets = [0, 0], sizes = [2, 32], strides = [1, 1]} : vector<2x96xf32> to vector<2x32xf32>
    %246 = vector.extract_strided_slice %244 {offsets = [0, 32], sizes = [2, 32], strides = [1, 1]} : vector<2x96xf32> to vector<2x32xf32>
    %247 = vector.extract_strided_slice %244 {offsets = [0, 64], sizes = [2, 32], strides = [1, 1]} : vector<2x96xf32> to vector<2x32xf32>
    %248 = vector.extract_strided_slice %238 {offsets = [0, 96], sizes = [2, 32], strides = [1, 1]} : vector<2x128xf32> to vector<2x32xf32>
    %249 = math.tanh %248 : vector<2x32xf32>
    %250 = arith.mulf %246, %233 : vector<2x32xf32>
    %251 = arith.mulf %245, %249 : vector<2x32xf32>
    %252 = arith.addf %250, %251 : vector<2x32xf32>
    %253 = math.tanh %252 : vector<2x32xf32>
    %254 = arith.mulf %247, %253 : vector<2x32xf32>
    %255 = arith.index_cast %c0_i32_89 : i32 to index
    %c0_94 = arith.constant 0 : index
    %c0_95 = arith.constant 0 : index
    %256 = vector.load %arg15[%255, %c0_94, %c0_95] : memref<8x2x32xf32, #tpu.memory_space<vmem>>, vector<1x2x32xf32>
    %257 = vector.shape_cast %256 : vector<1x2x32xf32> to vector<2x32xf32>
    %258 = vector.shape_cast %254 : vector<2x32xf32> to vector<1x2x32xf32>
    tpu.vector_store %arg15[%255, %c0_94, %c0_95], %258 {strides = array<i32>} : memref<8x2x32xf32, #tpu.memory_space<vmem>>, vector<1x2x32xf32>,
    %c1_i32_96 = arith.constant 1 : i32
    %259 = arith.index_cast %c1_i32_96 : i32 to index
    %c0_97 = arith.constant 0 : index
    %c0_98 = arith.constant 0 : index
    %260 = vector.load %arg16[%259, %c0_97, %c0_98] : memref<8x2x128xf32, #tpu.memory_space<vmem>>, vector<1x2x128xf32>
    %261 = vector.shape_cast %260 : vector<1x2x128xf32> to vector<2x128xf32>
    %cst_99 = arith.constant dense<0.000000e+00> : vector<2x128xf32>
    %262 = tpu.matmul %254, %221, %cst_99 {dimension_numbers = #tpu.dot_dimension_numbers<[1], [0], [0], [1], [0, 0, 1, 1], [], []>} : vector<2x32xf32>, vector<32x128xf32>, vector<2x128xf32> -> vector<2x128xf32>
    %263 = arith.addf %261, %262 : vector<2x128xf32>
    %264 = vector.extract_strided_slice %263 {offsets = [0, 0], sizes = [2, 96], strides = [1, 1]} : vector<2x128xf32> to vector<2x96xf32>
    %265 = arith.negf %264 : vector<2x96xf32>
    %266 = math.exp %265 : vector<2x96xf32>
    %cst_100 = arith.constant 1.000000e+00 : f32
    %267 = vector.broadcast %cst_100 : f32 to vector<2x96xf32>
    %268 = arith.addf %267, %266 : vector<2x96xf32>
    %269 = arith.divf %267, %268 : vector<2x96xf32>
    %270 = vector.extract_strided_slice %269 {offsets = [0, 0], sizes = [2, 32], strides = [1, 1]} : vector<2x96xf32> to vector<2x32xf32>
    %271 = vector.extract_strided_slice %269 {offsets = [0, 32], sizes = [2, 32], strides = [1, 1]} : vector<2x96xf32> to vector<2x32xf32>
    %272 = vector.extract_strided_slice %269 {offsets = [0, 64], sizes = [2, 32], strides = [1, 1]} : vector<2x96xf32> to vector<2x32xf32>
    %273 = vector.extract_strided_slice %263 {offsets = [0, 96], sizes = [2, 32], strides = [1, 1]} : vector<2x128xf32> to vector<2x32xf32>
    %274 = math.tanh %273 : vector<2x32xf32>
    %275 = arith.mulf %271, %252 : vector<2x32xf32>
    %276 = arith.mulf %270, %274 : vector<2x32xf32>
    %277 = arith.addf %275, %276 : vector<2x32xf32>
    %278 = math.tanh %277 : vector<2x32xf32>
    %279 = arith.mulf %272, %278 : vector<2x32xf32>
    %280 = arith.index_cast %c1_i32_96 : i32 to index
    %c0_101 = arith.constant 0 : index
    %c0_102 = arith.constant 0 : index
    %281 = vector.load %arg15[%280, %c0_101, %c0_102] : memref<8x2x32xf32, #tpu.memory_space<vmem>>, vector<1x2x32xf32>
    %282 = vector.shape_cast %281 : vector<1x2x32xf32> to vector<2x32xf32>
    %283 = vector.shape_cast %279 : vector<2x32xf32> to vector<1x2x32xf32>
    tpu.vector_store %arg15[%280, %c0_101, %c0_102], %283 {strides = array<i32>} : memref<8x2x32xf32, #tpu.memory_space<vmem>>, vector<1x2x32xf32>,
    %c2_i32_103 = arith.constant 2 : i32
    %284 = arith.index_cast %c2_i32_103 : i32 to index
    %c0_104 = arith.constant 0 : index
    %c0_105 = arith.constant 0 : index
    %285 = vector.load %arg16[%284, %c0_104, %c0_105] : memref<8x2x128xf32, #tpu.memory_space<vmem>>, vector<1x2x128xf32>
    %286 = vector.shape_cast %285 : vector<1x2x128xf32> to vector<2x128xf32>
    %cst_106 = arith.constant dense<0.000000e+00> : vector<2x128xf32>
    %287 = tpu.matmul %279, %221, %cst_106 {dimension_numbers = #tpu.dot_dimension_numbers<[1], [0], [0], [1], [0, 0, 1, 1], [], []>} : vector<2x32xf32>, vector<32x128xf32>, vector<2x128xf32> -> vector<2x128xf32>
    %288 = arith.addf %286, %287 : vector<2x128xf32>
    %289 = vector.extract_strided_slice %288 {offsets = [0, 0], sizes = [2, 96], strides = [1, 1]} : vector<2x128xf32> to vector<2x96xf32>
    %290 = arith.negf %289 : vector<2x96xf32>
    %291 = math.exp %290 : vector<2x96xf32>
    %cst_107 = arith.constant 1.000000e+00 : f32
    %292 = vector.broadcast %cst_107 : f32 to vector<2x96xf32>
    %293 = arith.addf %292, %291 : vector<2x96xf32>
    %294 = arith.divf %292, %293 : vector<2x96xf32>
    %295 = vector.extract_strided_slice %294 {offsets = [0, 0], sizes = [2, 32], strides = [1, 1]} : vector<2x96xf32> to vector<2x32xf32>
    %296 = vector.extract_strided_slice %294 {offsets = [0, 32], sizes = [2, 32], strides = [1, 1]} : vector<2x96xf32> to vector<2x32xf32>
    %297 = vector.extract_strided_slice %294 {offsets = [0, 64], sizes = [2, 32], strides = [1, 1]} : vector<2x96xf32> to vector<2x32xf32>
    %298 = vector.extract_strided_slice %288 {offsets = [0, 96], sizes = [2, 32], strides = [1, 1]} : vector<2x128xf32> to vector<2x32xf32>
    %299 = math.tanh %298 : vector<2x32xf32>
    %300 = arith.mulf %296, %277 : vector<2x32xf32>
    %301 = arith.mulf %295, %299 : vector<2x32xf32>
    %302 = arith.addf %300, %301 : vector<2x32xf32>
    %303 = math.tanh %302 : vector<2x32xf32>
    %304 = arith.mulf %297, %303 : vector<2x32xf32>
    %305 = arith.index_cast %c2_i32_103 : i32 to index
    %c0_108 = arith.constant 0 : index
    %c0_109 = arith.constant 0 : index
    %306 = vector.load %arg15[%305, %c0_108, %c0_109] : memref<8x2x32xf32, #tpu.memory_space<vmem>>, vector<1x2x32xf32>
    %307 = vector.shape_cast %306 : vector<1x2x32xf32> to vector<2x32xf32>
    %308 = vector.shape_cast %304 : vector<2x32xf32> to vector<1x2x32xf32>
    tpu.vector_store %arg15[%305, %c0_108, %c0_109], %308 {strides = array<i32>} : memref<8x2x32xf32, #tpu.memory_space<vmem>>, vector<1x2x32xf32>,
    %c3_i32_110 = arith.constant 3 : i32
    %309 = arith.index_cast %c3_i32_110 : i32 to index
    %c0_111 = arith.constant 0 : index
    %c0_112 = arith.constant 0 : index
    %310 = vector.load %arg16[%309, %c0_111, %c0_112] : memref<8x2x128xf32, #tpu.memory_space<vmem>>, vector<1x2x128xf32>
    %311 = vector.shape_cast %310 : vector<1x2x128xf32> to vector<2x128xf32>
    %cst_113 = arith.constant dense<0.000000e+00> : vector<2x128xf32>
    %312 = tpu.matmul %304, %221, %cst_113 {dimension_numbers = #tpu.dot_dimension_numbers<[1], [0], [0], [1], [0, 0, 1, 1], [], []>} : vector<2x32xf32>, vector<32x128xf32>, vector<2x128xf32> -> vector<2x128xf32>
    %313 = arith.addf %311, %312 : vector<2x128xf32>
    %314 = vector.extract_strided_slice %313 {offsets = [0, 0], sizes = [2, 96], strides = [1, 1]} : vector<2x128xf32> to vector<2x96xf32>
    %315 = arith.negf %314 : vector<2x96xf32>
    %316 = math.exp %315 : vector<2x96xf32>
    %cst_114 = arith.constant 1.000000e+00 : f32
    %317 = vector.broadcast %cst_114 : f32 to vector<2x96xf32>
    %318 = arith.addf %317, %316 : vector<2x96xf32>
    %319 = arith.divf %317, %318 : vector<2x96xf32>
    %320 = vector.extract_strided_slice %319 {offsets = [0, 0], sizes = [2, 32], strides = [1, 1]} : vector<2x96xf32> to vector<2x32xf32>
    %321 = vector.extract_strided_slice %319 {offsets = [0, 32], sizes = [2, 32], strides = [1, 1]} : vector<2x96xf32> to vector<2x32xf32>
    %322 = vector.extract_strided_slice %319 {offsets = [0, 64], sizes = [2, 32], strides = [1, 1]} : vector<2x96xf32> to vector<2x32xf32>
    %323 = vector.extract_strided_slice %313 {offsets = [0, 96], sizes = [2, 32], strides = [1, 1]} : vector<2x128xf32> to vector<2x32xf32>
    %324 = math.tanh %323 : vector<2x32xf32>
    %325 = arith.mulf %321, %302 : vector<2x32xf32>
    %326 = arith.mulf %320, %324 : vector<2x32xf32>
    %327 = arith.addf %325, %326 : vector<2x32xf32>
    %328 = math.tanh %327 : vector<2x32xf32>
    %329 = arith.mulf %322, %328 : vector<2x32xf32>
    %330 = arith.index_cast %c3_i32_110 : i32 to index
    %c0_115 = arith.constant 0 : index
    %c0_116 = arith.constant 0 : index
    %331 = vector.load %arg15[%330, %c0_115, %c0_116] : memref<8x2x32xf32, #tpu.memory_space<vmem>>, vector<1x2x32xf32>
    %332 = vector.shape_cast %331 : vector<1x2x32xf32> to vector<2x32xf32>
    %333 = vector.shape_cast %329 : vector<2x32xf32> to vector<1x2x32xf32>
    tpu.vector_store %arg15[%330, %c0_115, %c0_116], %333 {strides = array<i32>} : memref<8x2x32xf32, #tpu.memory_space<vmem>>, vector<1x2x32xf32>,
    %c4_i32_117 = arith.constant 4 : i32
    %334 = arith.index_cast %c4_i32_117 : i32 to index
    %c0_118 = arith.constant 0 : index
    %c0_119 = arith.constant 0 : index
    %335 = vector.load %arg16[%334, %c0_118, %c0_119] : memref<8x2x128xf32, #tpu.memory_space<vmem>>, vector<1x2x128xf32>
    %336 = vector.shape_cast %335 : vector<1x2x128xf32> to vector<2x128xf32>
    %cst_120 = arith.constant dense<0.000000e+00> : vector<2x128xf32>
    %337 = tpu.matmul %329, %221, %cst_120 {dimension_numbers = #tpu.dot_dimension_numbers<[1], [0], [0], [1], [0, 0, 1, 1], [], []>} : vector<2x32xf32>, vector<32x128xf32>, vector<2x128xf32> -> vector<2x128xf32>
    %338 = arith.addf %336, %337 : vector<2x128xf32>
    %339 = vector.extract_strided_slice %338 {offsets = [0, 0], sizes = [2, 96], strides = [1, 1]} : vector<2x128xf32> to vector<2x96xf32>
    %340 = arith.negf %339 : vector<2x96xf32>
    %341 = math.exp %340 : vector<2x96xf32>
    %cst_121 = arith.constant 1.000000e+00 : f32
    %342 = vector.broadcast %cst_121 : f32 to vector<2x96xf32>
    %343 = arith.addf %342, %341 : vector<2x96xf32>
    %344 = arith.divf %342, %343 : vector<2x96xf32>
    %345 = vector.extract_strided_slice %344 {offsets = [0, 0], sizes = [2, 32], strides = [1, 1]} : vector<2x96xf32> to vector<2x32xf32>
    %346 = vector.extract_strided_slice %344 {offsets = [0, 32], sizes = [2, 32], strides = [1, 1]} : vector<2x96xf32> to vector<2x32xf32>
    %347 = vector.extract_strided_slice %344 {offsets = [0, 64], sizes = [2, 32], strides = [1, 1]} : vector<2x96xf32> to vector<2x32xf32>
    %348 = vector.extract_strided_slice %338 {offsets = [0, 96], sizes = [2, 32], strides = [1, 1]} : vector<2x128xf32> to vector<2x32xf32>
    %349 = math.tanh %348 : vector<2x32xf32>
    %350 = arith.mulf %346, %327 : vector<2x32xf32>
    %351 = arith.mulf %345, %349 : vector<2x32xf32>
    %352 = arith.addf %350, %351 : vector<2x32xf32>
    %353 = math.tanh %352 : vector<2x32xf32>
    %354 = arith.mulf %347, %353 : vector<2x32xf32>
    %355 = arith.index_cast %c4_i32_117 : i32 to index
    %c0_122 = arith.constant 0 : index
    %c0_123 = arith.constant 0 : index
    %356 = vector.load %arg15[%355, %c0_122, %c0_123] : memref<8x2x32xf32, #tpu.memory_space<vmem>>, vector<1x2x32xf32>
    %357 = vector.shape_cast %356 : vector<1x2x32xf32> to vector<2x32xf32>
    %358 = vector.shape_cast %354 : vector<2x32xf32> to vector<1x2x32xf32>
    tpu.vector_store %arg15[%355, %c0_122, %c0_123], %358 {strides = array<i32>} : memref<8x2x32xf32, #tpu.memory_space<vmem>>, vector<1x2x32xf32>,
    %c5_i32_124 = arith.constant 5 : i32
    %359 = arith.index_cast %c5_i32_124 : i32 to index
    %c0_125 = arith.constant 0 : index
    %c0_126 = arith.constant 0 : index
    %360 = vector.load %arg16[%359, %c0_125, %c0_126] : memref<8x2x128xf32, #tpu.memory_space<vmem>>, vector<1x2x128xf32>
    %361 = vector.shape_cast %360 : vector<1x2x128xf32> to vector<2x128xf32>
    %cst_127 = arith.constant dense<0.000000e+00> : vector<2x128xf32>
    %362 = tpu.matmul %354, %221, %cst_127 {dimension_numbers = #tpu.dot_dimension_numbers<[1], [0], [0], [1], [0, 0, 1, 1], [], []>} : vector<2x32xf32>, vector<32x128xf32>, vector<2x128xf32> -> vector<2x128xf32>
    %363 = arith.addf %361, %362 : vector<2x128xf32>
    %364 = vector.extract_strided_slice %363 {offsets = [0, 0], sizes = [2, 96], strides = [1, 1]} : vector<2x128xf32> to vector<2x96xf32>
    %365 = arith.negf %364 : vector<2x96xf32>
    %366 = math.exp %365 : vector<2x96xf32>
    %cst_128 = arith.constant 1.000000e+00 : f32
    %367 = vector.broadcast %cst_128 : f32 to vector<2x96xf32>
    %368 = arith.addf %367, %366 : vector<2x96xf32>
    %369 = arith.divf %367, %368 : vector<2x96xf32>
    %370 = vector.extract_strided_slice %369 {offsets = [0, 0], sizes = [2, 32], strides = [1, 1]} : vector<2x96xf32> to vector<2x32xf32>
    %371 = vector.extract_strided_slice %369 {offsets = [0, 32], sizes = [2, 32], strides = [1, 1]} : vector<2x96xf32> to vector<2x32xf32>
    %372 = vector.extract_strided_slice %369 {offsets = [0, 64], sizes = [2, 32], strides = [1, 1]} : vector<2x96xf32> to vector<2x32xf32>
    %373 = vector.extract_strided_slice %363 {offsets = [0, 96], sizes = [2, 32], strides = [1, 1]} : vector<2x128xf32> to vector<2x32xf32>
    %374 = math.tanh %373 : vector<2x32xf32>
    %375 = arith.mulf %371, %352 : vector<2x32xf32>
    %376 = arith.mulf %370, %374 : vector<2x32xf32>
    %377 = arith.addf %375, %376 : vector<2x32xf32>
    %378 = math.tanh %377 : vector<2x32xf32>
    %379 = arith.mulf %372, %378 : vector<2x32xf32>
    %380 = arith.index_cast %c5_i32_124 : i32 to index
    %c0_129 = arith.constant 0 : index
    %c0_130 = arith.constant 0 : index
    %381 = vector.load %arg15[%380, %c0_129, %c0_130] : memref<8x2x32xf32, #tpu.memory_space<vmem>>, vector<1x2x32xf32>
    %382 = vector.shape_cast %381 : vector<1x2x32xf32> to vector<2x32xf32>
    %383 = vector.shape_cast %379 : vector<2x32xf32> to vector<1x2x32xf32>
    tpu.vector_store %arg15[%380, %c0_129, %c0_130], %383 {strides = array<i32>} : memref<8x2x32xf32, #tpu.memory_space<vmem>>, vector<1x2x32xf32>,
    %c6_i32_131 = arith.constant 6 : i32
    %384 = arith.index_cast %c6_i32_131 : i32 to index
    %c0_132 = arith.constant 0 : index
    %c0_133 = arith.constant 0 : index
    %385 = vector.load %arg16[%384, %c0_132, %c0_133] : memref<8x2x128xf32, #tpu.memory_space<vmem>>, vector<1x2x128xf32>
    %386 = vector.shape_cast %385 : vector<1x2x128xf32> to vector<2x128xf32>
    %cst_134 = arith.constant dense<0.000000e+00> : vector<2x128xf32>
    %387 = tpu.matmul %379, %221, %cst_134 {dimension_numbers = #tpu.dot_dimension_numbers<[1], [0], [0], [1], [0, 0, 1, 1], [], []>} : vector<2x32xf32>, vector<32x128xf32>, vector<2x128xf32> -> vector<2x128xf32>
    %388 = arith.addf %386, %387 : vector<2x128xf32>
    %389 = vector.extract_strided_slice %388 {offsets = [0, 0], sizes = [2, 96], strides = [1, 1]} : vector<2x128xf32> to vector<2x96xf32>
    %390 = arith.negf %389 : vector<2x96xf32>
    %391 = math.exp %390 : vector<2x96xf32>
    %cst_135 = arith.constant 1.000000e+00 : f32
    %392 = vector.broadcast %cst_135 : f32 to vector<2x96xf32>
    %393 = arith.addf %392, %391 : vector<2x96xf32>
    %394 = arith.divf %392, %393 : vector<2x96xf32>
    %395 = vector.extract_strided_slice %394 {offsets = [0, 0], sizes = [2, 32], strides = [1, 1]} : vector<2x96xf32> to vector<2x32xf32>
    %396 = vector.extract_strided_slice %394 {offsets = [0, 32], sizes = [2, 32], strides = [1, 1]} : vector<2x96xf32> to vector<2x32xf32>
    %397 = vector.extract_strided_slice %394 {offsets = [0, 64], sizes = [2, 32], strides = [1, 1]} : vector<2x96xf32> to vector<2x32xf32>
    %398 = vector.extract_strided_slice %388 {offsets = [0, 96], sizes = [2, 32], strides = [1, 1]} : vector<2x128xf32> to vector<2x32xf32>
    %399 = math.tanh %398 : vector<2x32xf32>
    %400 = arith.mulf %396, %377 : vector<2x32xf32>
    %401 = arith.mulf %395, %399 : vector<2x32xf32>
    %402 = arith.addf %400, %401 : vector<2x32xf32>
    %403 = math.tanh %402 : vector<2x32xf32>
    %404 = arith.mulf %397, %403 : vector<2x32xf32>
    %405 = arith.index_cast %c6_i32_131 : i32 to index
    %c0_136 = arith.constant 0 : index
    %c0_137 = arith.constant 0 : index
    %406 = vector.load %arg15[%405, %c0_136, %c0_137] : memref<8x2x32xf32, #tpu.memory_space<vmem>>, vector<1x2x32xf32>
    %407 = vector.shape_cast %406 : vector<1x2x32xf32> to vector<2x32xf32>
    %408 = vector.shape_cast %404 : vector<2x32xf32> to vector<1x2x32xf32>
    tpu.vector_store %arg15[%405, %c0_136, %c0_137], %408 {strides = array<i32>} : memref<8x2x32xf32, #tpu.memory_space<vmem>>, vector<1x2x32xf32>,
    %c7_i32_138 = arith.constant 7 : i32
    %409 = arith.index_cast %c7_i32_138 : i32 to index
    %c0_139 = arith.constant 0 : index
    %c0_140 = arith.constant 0 : index
    %410 = vector.load %arg16[%409, %c0_139, %c0_140] : memref<8x2x128xf32, #tpu.memory_space<vmem>>, vector<1x2x128xf32>
    %411 = vector.shape_cast %410 : vector<1x2x128xf32> to vector<2x128xf32>
    %cst_141 = arith.constant dense<0.000000e+00> : vector<2x128xf32>
    %412 = tpu.matmul %404, %221, %cst_141 {dimension_numbers = #tpu.dot_dimension_numbers<[1], [0], [0], [1], [0, 0, 1, 1], [], []>} : vector<2x32xf32>, vector<32x128xf32>, vector<2x128xf32> -> vector<2x128xf32>
    %413 = arith.addf %411, %412 : vector<2x128xf32>
    %414 = vector.extract_strided_slice %413 {offsets = [0, 0], sizes = [2, 96], strides = [1, 1]} : vector<2x128xf32> to vector<2x96xf32>
    %415 = arith.negf %414 : vector<2x96xf32>
    %416 = math.exp %415 : vector<2x96xf32>
    %cst_142 = arith.constant 1.000000e+00 : f32
    %417 = vector.broadcast %cst_142 : f32 to vector<2x96xf32>
    %418 = arith.addf %417, %416 : vector<2x96xf32>
    %419 = arith.divf %417, %418 : vector<2x96xf32>
    %420 = vector.extract_strided_slice %419 {offsets = [0, 0], sizes = [2, 32], strides = [1, 1]} : vector<2x96xf32> to vector<2x32xf32>
    %421 = vector.extract_strided_slice %419 {offsets = [0, 32], sizes = [2, 32], strides = [1, 1]} : vector<2x96xf32> to vector<2x32xf32>
    %422 = vector.extract_strided_slice %419 {offsets = [0, 64], sizes = [2, 32], strides = [1, 1]} : vector<2x96xf32> to vector<2x32xf32>
    %423 = vector.extract_strided_slice %413 {offsets = [0, 96], sizes = [2, 32], strides = [1, 1]} : vector<2x128xf32> to vector<2x32xf32>
    %424 = math.tanh %423 : vector<2x32xf32>
    %425 = arith.mulf %421, %402 : vector<2x32xf32>
    %426 = arith.mulf %420, %424 : vector<2x32xf32>
    %427 = arith.addf %425, %426 : vector<2x32xf32>
    %428 = math.tanh %427 : vector<2x32xf32>
    %429 = arith.mulf %422, %428 : vector<2x32xf32>
    %430 = arith.index_cast %c7_i32_138 : i32 to index
    %c0_143 = arith.constant 0 : index
    %c0_144 = arith.constant 0 : index
    %431 = vector.load %arg15[%430, %c0_143, %c0_144] : memref<8x2x32xf32, #tpu.memory_space<vmem>>, vector<1x2x32xf32>
    %432 = vector.shape_cast %431 : vector<1x2x32xf32> to vector<2x32xf32>
    %433 = vector.shape_cast %429 : vector<2x32xf32> to vector<1x2x32xf32>
    tpu.vector_store %arg15[%430, %c0_143, %c0_144], %433 {strides = array<i32>} : memref<8x2x32xf32, #tpu.memory_space<vmem>>, vector<1x2x32xf32>,
    %c8_i32_145 = arith.constant 8 : i32
    %c1_146 = arith.constant 1 : index
    %c0_147 = arith.constant 0 : index
    %c0_148 = arith.constant 0 : index
    %434 = vector.load %arg13[%c1_146, %c0_147, %c0_148] : memref<2x2x32xf32, #tpu.memory_space<vmem>>, vector<1x2x32xf32>
    %435 = vector.shape_cast %434 : vector<1x2x32xf32> to vector<2x32xf32>
    %436 = vector.shape_cast %429 : vector<2x32xf32> to vector<1x2x32xf32>
    tpu.vector_store %arg13[%c1_146, %c0_147, %c0_148], %436 {strides = array<i32>} : memref<2x2x32xf32, #tpu.memory_space<vmem>>, vector<1x2x32xf32>,
    %c1_149 = arith.constant 1 : index
    %c0_150 = arith.constant 0 : index
    %c0_151 = arith.constant 0 : index
    %437 = vector.load %arg14[%c1_149, %c0_150, %c0_151] : memref<2x2x32xf32, #tpu.memory_space<vmem>>, vector<1x2x32xf32>
    %438 = vector.shape_cast %437 : vector<1x2x32xf32> to vector<2x32xf32>
    %439 = vector.shape_cast %427 : vector<2x32xf32> to vector<1x2x32xf32>
    tpu.vector_store %arg14[%c1_149, %c0_150, %c0_151], %439 {strides = array<i32>} : memref<2x2x32xf32, #tpu.memory_space<vmem>>, vector<1x2x32xf32>,
    %c0_152 = arith.constant 0 : index
    %c0_153 = arith.constant 0 : index
    %c0_154 = arith.constant 0 : index
    %440 = vector.load %arg15[%c0_152, %c0_153, %c0_154] : memref<8x2x32xf32, #tpu.memory_space<vmem>>, vector<8x2x32xf32>
    %441 = vector.shape_cast %440 : vector<8x2x32xf32> to vector<16x32xf32>
    %c0_155 = arith.constant 0 : index
    %c0_156 = arith.constant 0 : index
    %442 = vector.load %arg10[%c0_155, %c0_156] : memref<32x16xf32, #tpu.memory_space<vmem>>, vector<32x16xf32>
    %cst_157 = arith.constant dense<0.000000e+00> : vector<16x16xf32>
    %443 = tpu.matmul %441, %442, %cst_157 {dimension_numbers = #tpu.dot_dimension_numbers<[1], [0], [0], [1], [0, 0, 1, 1], [], []>} : vector<16x32xf32>, vector<32x16xf32>, vector<16x16xf32> -> vector<16x16xf32>
    %c0_158 = arith.constant 0 : index
    %c0_159 = arith.constant 0 : index
    %444 = vector.load %arg11[%c0_158, %c0_159] : memref<1x16xf32, #tpu.memory_space<vmem>>, vector<1x16xf32>
    %445 = vector.broadcast %444 : vector<1x16xf32> to vector<16x16xf32>
    %446 = arith.addf %443, %445 : vector<16x16xf32>
    %447 = vector.shape_cast %446 : vector<16x16xf32> to vector<8x2x16xf32>
    %c0_160 = arith.constant 0 : index
    %c0_161 = arith.constant 0 : index
    %c0_162 = arith.constant 0 : index
    %448 = vector.load %arg12[%c0_160, %c0_161, %c0_162] : memref<8x2x16xf32, #tpu.memory_space<vmem>>, vector<8x2x16xf32>
    tpu.vector_store %arg12[%c0_160, %c0_161, %c0_162], %447 {strides = array<i32>} : memref<8x2x16xf32, #tpu.memory_space<vmem>>, vector<8x2x16xf32>,
    return
  }
  func.func @transform_0(%arg0: i32) -> (i32, i32, i32) {
    %c0_i32 = arith.constant 0 : i32
    %c0_i32_0 = arith.constant 0 : i32
    %c0_i32_1 = arith.constant 0 : i32
    return %c0_i32, %arg0, %c0_i32_0 : i32, i32, i32
  }
  func.func @transform_1(%arg0: i32) -> (i32, i32, i32) {
    %c0_i32 = arith.constant 0 : i32
    %c0_i32_0 = arith.constant 0 : i32
    %c0_i32_1 = arith.constant 0 : i32
    return %c0_i32, %arg0, %c0_i32_0 : i32, i32, i32
  }
  func.func @transform_2(%arg0: i32) -> (i32, i32, i32) {
    %c0_i32 = arith.constant 0 : i32
    %c0_i32_0 = arith.constant 0 : i32
    %c0_i32_1 = arith.constant 0 : i32
    return %c0_i32, %arg0, %c0_i32_0 : i32, i32, i32
  }
  func.func @transform_3(%arg0: i32) -> (i32, i32) {
    %c0_i32 = arith.constant 0 : i32
    %c0_i32_0 = arith.constant 0 : i32
    %c0_i32_1 = arith.constant 0 : i32
    return %c0_i32, %c0_i32_0 : i32, i32
  }
  func.func @transform_4(%arg0: i32) -> (i32, i32) {
    %c0_i32 = arith.constant 0 : i32
    %c0_i32_0 = arith.constant 0 : i32
    %c0_i32_1 = arith.constant 0 : i32
    return %c0_i32, %c0_i32_0 : i32, i32
  }
  func.func @transform_5(%arg0: i32) -> (i32, i32) {
    %c0_i32 = arith.constant 0 : i32
    %c0_i32_0 = arith.constant 0 : i32
    %c0_i32_1 = arith.constant 0 : i32
    return %c0_i32, %c0_i32_0 : i32, i32
  }
  func.func @transform_6(%arg0: i32) -> (i32, i32) {
    %c0_i32 = arith.constant 0 : i32
    %c0_i32_0 = arith.constant 0 : i32
    %c0_i32_1 = arith.constant 0 : i32
    return %c0_i32, %c0_i32_0 : i32, i32
  }
  func.func @transform_7(%arg0: i32) -> (i32, i32) {
    %c0_i32 = arith.constant 0 : i32
    %c0_i32_0 = arith.constant 0 : i32
    %c0_i32_1 = arith.constant 0 : i32
    return %c0_i32, %c0_i32_0 : i32, i32
  }
  func.func @transform_8(%arg0: i32) -> (i32, i32) {
    %c0_i32 = arith.constant 0 : i32
    %c0_i32_0 = arith.constant 0 : i32
    %c0_i32_1 = arith.constant 0 : i32
    return %c0_i32, %c0_i32_0 : i32, i32
  }
  func.func @transform_9(%arg0: i32) -> (i32, i32) {
    %c0_i32 = arith.constant 0 : i32
    %c0_i32_0 = arith.constant 0 : i32
    %c0_i32_1 = arith.constant 0 : i32
    return %c0_i32, %c0_i32_0 : i32, i32
  }
  func.func @transform_10(%arg0: i32) -> (i32, i32) {
    %c0_i32 = arith.constant 0 : i32
    %c0_i32_0 = arith.constant 0 : i32
    %c0_i32_1 = arith.constant 0 : i32
    return %c0_i32, %c0_i32_0 : i32, i32
  }
  func.func @transform_11(%arg0: i32) -> (i32, i32, i32) {
    %c0_i32 = arith.constant 0 : i32
    %c0_i32_0 = arith.constant 0 : i32
    %c0_i32_1 = arith.constant 0 : i32
    return %c0_i32, %arg0, %c0_i32_0 : i32, i32, i32
  }
  func.func @transform_12(%arg0: i32) -> (i32, i32, i32) {
    %c0_i32 = arith.constant 0 : i32
    %c0_i32_0 = arith.constant 0 : i32
    %c0_i32_1 = arith.constant 0 : i32
    return %c0_i32, %arg0, %c0_i32_0 : i32, i32, i32
  }
  func.func @transform_13(%arg0: i32) -> (i32, i32, i32) {
    %c0_i32 = arith.constant 0 : i32
    %c0_i32_0 = arith.constant 0 : i32
    %c0_i32_1 = arith.constant 0 : i32
    return %c0_i32, %arg0, %c0_i32_0 : i32, i32, i32
  }
}

</mosaic_0001>

<llo_original>
// kernel: tpu_custom_call.1
$region0: #{tpu_custom_call.1}
  #allocation0 [shape = 'u32[]', space=smem, size = 0x4, offset = 0x4, fixed_abs, tag = 'smem constant byte address 0x4 - core index']
  #allocation1 [shape = 'u32[144,128]{1,0:T(1,128)}', space=vmem, size = 0x12000, scoped, tag = 'internal scratch']
  #allocation2 [shape = 'f32[8,2,32]{2,1,0:T(2,128)}', space=vmem, size = 0x2000, scoped, tag = 'scratch operand']
  #allocation3 [shape = 'f32[8,2,128]{2,1,0:T(2,128)}', space=vmem, size = 0x2000, scoped, tag = 'scratch operand']
  %s0 = inlined_call_operand.hbm [shape: f32[8,2,16], index: 0, kind: input, shape index: {}]
  %s1 = inlined_call_operand.hbm [shape: f32[2,2,32], index: 1, kind: input, shape index: {}]
  %s2 = inlined_call_operand.hbm [shape: f32[2,2,32], index: 2, kind: input, shape index: {}]
  %s3 = inlined_call_operand.hbm [shape: f32[16,128], index: 3, kind: input, shape index: {}]
  %s4 = inlined_call_operand.vmem [shape: f32[32,128], index: 4, kind: input, shape index: {}]
  %s5 = inlined_call_operand.vmem [shape: f32[1,128], index: 5, kind: input, shape index: {}]
  %s6 = inlined_call_operand.vmem [shape: f32[32,128], index: 6, kind: input, shape index: {}]
  %s7 = inlined_call_operand.hbm [shape: f32[32,128], index: 7, kind: input, shape index: {}]
  %s8 = inlined_call_operand.vmem [shape: f32[1,128], index: 8, kind: input, shape index: {}]
  %s9 = inlined_call_operand.vmem [shape: f32[32,16], index: 9, kind: input, shape index: {}]
  %s10 = inlined_call_operand.vmem [shape: f32[1,16], index: 10, kind: input, shape index: {}]
  %s11 = inlined_call_operand.hbm [shape: f32[8,2,16], index: 11, kind: output, shape index: {0}]
  %s12 = inlined_call_operand.hbm [shape: f32[2,2,32], index: 12, kind: output, shape index: {1}]
  %s13 = inlined_call_operand.hbm [shape: f32[2,2,32], index: 13, kind: output, shape index: {2}]
  %14 = xla_tuple %s11, %s12, %s13
  %s15 = sld [smem:[#allocation0]]
  $region90: #{tpu_custom_call.1} parent=0
    _
  %s17 = ssub.s32 1, %s15
  %s18 = scalar_select 0, %s17, %s15
  $region1: #{tpu_custom_call.1} parent=0
    #allocation4 [shape = 'u8[8192]{0}', space=vmem, size = 0x2000, scoped, tag = 'input window, operand 0, single buffered']
    #allocation5 [shape = 's32[1]{0}', space=sflag, size = 0x4, scoped, tag = 'scoped memory for tpu_custom_call.1']
    #allocation6 [shape = 's32[1]{0}', space=sflag, size = 0x4, scoped, tag = 'scoped memory for tpu_custom_call.1']
    #allocation7 [shape = 'u8[2048]{0}', space=vmem, size = 0x800, scoped, tag = 'input window, operand 1, single buffered']
    #allocation8 [shape = 's32[1]{0}', space=sflag, size = 0x4, scoped, tag = 'scoped memory for tpu_custom_call.1']
    #allocation9 [shape = 'u8[2048]{0}', space=vmem, size = 0x800, scoped, tag = 'input window, operand 2, single buffered']
    #allocation10 [shape = 'u8[8192]{0}', space=vmem, size = 0x2000, scoped, tag = 'input window, operand 3, single buffered']
    #allocation11 [shape = 's32[1]{0}', space=sflag, size = 0x4, scoped, tag = 'scoped memory for tpu_custom_call.1']
    #allocation12 [shape = 'u8[16384]{0}', space=vmem, size = 0x4000, scoped, tag = 'input window, operand 7, single buffered']
    #allocation13 [shape = 'u8[8192]{0}', space=vmem, size = 0x2000, scoped, tag = 'output window, operand 0, single buffered']
    #allocation14 [shape = 'u8[2048]{0}', space=vmem, size = 0x800, scoped, tag = 'output window, operand 1, single buffered']
    #allocation15 [shape = 's32[1]{0}', space=sflag, size = 0x4, scoped, tag = 'scoped memory for tpu_custom_call.1']
    #allocation16 [shape = 'u8[2048]{0}', space=vmem, size = 0x800, scoped, tag = 'output window, operand 2, single buffered']
    %19 = vsyncpa [#allocation5], 0
    %20 = vsyncpa [#allocation8], 0
    %21 = vsyncpa [#allocation11], 0
    %22 = vsyncpa [#allocation6], 0
    %23 = vsyncpa [#allocation15], 0
    // Predicated region
    $region2: #{tpu_custom_call.1} parent=1 // pred_check
      _
    $region3: #{tpu_custom_call.1} parent=1 // pred_check_branch
      %25 = sbr.rel (0) target = $region5
    $region4: #{tpu_custom_call.1} parent=1 // pred_region
      %s27 = ssub.s32 256, 256
      %28 = vsyncadd [#allocation5], %s27
      %s29 = sshll.u32 [#allocation4], 4
      %s30 = int_to_ptr.vmem [resolvable:$true] %s29
      %35 = dma.hbm_to_vmem [thread:$0]  %s0, 256, %s30, [#allocation5], 32, 32, 2
    $region5: #{tpu_custom_call.1} parent=1 // pred_fallthru
      _
    // Predicated region
    $region6: #{tpu_custom_call.1} parent=1 // pred_check
      _
    $region7: #{tpu_custom_call.1} parent=1 // pred_check_branch
      %37 = sbr.rel (0) target = $region9
    $region8: #{tpu_custom_call.1} parent=1 // pred_region
      %s39 = ssub.s32 64, 64
      %40 = vsyncadd [#allocation8], %s39
      %s41 = sshll.u32 [#allocation7], 4
      %s42 = int_to_ptr.vmem [resolvable:$true] %s41
      %47 = dma.hbm_to_vmem [thread:$0]  %s1, 64, %s42, [#allocation8], 32, 32, 2
    $region9: #{tpu_custom_call.1} parent=1 // pred_fallthru
      _
    // Predicated region
    $region10: #{tpu_custom_call.1} parent=1 // pred_check
      _
    $region11: #{tpu_custom_call.1} parent=1 // pred_check_branch
      %49 = sbr.rel (0) target = $region13
    $region12: #{tpu_custom_call.1} parent=1 // pred_region
      %s51 = ssub.s32 64, 64
      %52 = vsyncadd [#allocation8], %s51
      %s53 = sshll.u32 [#allocation9], 4
      %s54 = int_to_ptr.vmem [resolvable:$true] %s53
      %59 = dma.hbm_to_vmem [thread:$0]  %s2, 64, %s54, [#allocation8], 32, 32, 2
    $region13: #{tpu_custom_call.1} parent=1 // pred_fallthru
      _
    // Predicated region
    $region14: #{tpu_custom_call.1} parent=1 // pred_check
      _
    $region15: #{tpu_custom_call.1} parent=1 // pred_check_branch
      %61 = sbr.rel (0) target = $region17
    $region16: #{tpu_custom_call.1} parent=1 // pred_region
      %s63 = ssub.s32 256, 256
      %64 = vsyncadd [#allocation11], %s63
      %s65 = sshll.u32 [#allocation10], 4
      %s66 = int_to_ptr.vmem [resolvable:$true] %s65
      %71 = dma.hbm_to_vmem [thread:$0]  %s3, 256, %s66, [#allocation11], 128, 128, 8
    $region17: #{tpu_custom_call.1} parent=1 // pred_fallthru
      _
    // Predicated region
    $region18: #{tpu_custom_call.1} parent=1 // pred_check
      _
    $region19: #{tpu_custom_call.1} parent=1 // pred_check_branch
      %73 = sbr.rel (0) target = $region21
    $region20: #{tpu_custom_call.1} parent=1 // pred_region
      _
    $region21: #{tpu_custom_call.1} parent=1 // pred_fallthru
      _
    // Predicated region
    $region22: #{tpu_custom_call.1} parent=1 // pred_check
      _
    $region23: #{tpu_custom_call.1} parent=1 // pred_check_branch
      %75 = sbr.rel (0) target = $region25
    $region24: #{tpu_custom_call.1} parent=1 // pred_region
      _
    $region25: #{tpu_custom_call.1} parent=1 // pred_fallthru
      _
    // Predicated region
    $region26: #{tpu_custom_call.1} parent=1 // pred_check
      _
    $region27: #{tpu_custom_call.1} parent=1 // pred_check_branch
      %77 = sbr.rel (0) target = $region29
    $region28: #{tpu_custom_call.1} parent=1 // pred_region
      _
    $region29: #{tpu_custom_call.1} parent=1 // pred_fallthru
      _
    // Predicated region
    $region30: #{tpu_custom_call.1} parent=1 // pred_check
      _
    $region31: #{tpu_custom_call.1} parent=1 // pred_check_branch
      %79 = sbr.rel (0) target = $region33
    $region32: #{tpu_custom_call.1} parent=1 // pred_region
      %s81 = ssub.s32 512, 512
      %82 = vsyncadd [#allocation11], %s81
      %s83 = sshll.u32 [#allocation12], 4
      %s84 = int_to_ptr.vmem [resolvable:$true] %s83
      %89 = dma.hbm_to_vmem [thread:$0]  %s7, 512, %s84, [#allocation11], 128, 128, 8
    $region33: #{tpu_custom_call.1} parent=1 // pred_fallthru
      _
    // Predicated region
    $region34: #{tpu_custom_call.1} parent=1 // pred_check
      _
    $region35: #{tpu_custom_call.1} parent=1 // pred_check_branch
      %91 = sbr.rel (0) target = $region37
    $region36: #{tpu_custom_call.1} parent=1 // pred_region
      _
    $region37: #{tpu_custom_call.1} parent=1 // pred_fallthru
      _
    // Predicated region
    $region38: #{tpu_custom_call.1} parent=1 // pred_check
      _
    $region39: #{tpu_custom_call.1} parent=1 // pred_check_branch
      %93 = sbr.rel (0) target = $region41
    $region40: #{tpu_custom_call.1} parent=1 // pred_region
      _
    $region41: #{tpu_custom_call.1} parent=1 // pred_fallthru
      _
    // Predicated region
    $region42: #{tpu_custom_call.1} parent=1 // pred_check
      _
    $region43: #{tpu_custom_call.1} parent=1 // pred_check_branch
      %95 = sbr.rel (0) target = $region45
    $region44: #{tpu_custom_call.1} parent=1 // pred_region
      _
    $region45: #{tpu_custom_call.1} parent=1 // pred_fallthru
      _
    // Predicated region
    $region46: #{tpu_custom_call.1} parent=1 // pred_check
      _
    $region47: #{tpu_custom_call.1} parent=1 // pred_check_branch
      %97 = sbr.rel (0) target = $region49
    $region48: #{tpu_custom_call.1} parent=1 // pred_region
      %98 = dma.done [#allocation5], 256
    $region49: #{tpu_custom_call.1} parent=1 // pred_fallthru
      _
    // Predicated region
    $region50: #{tpu_custom_call.1} parent=1 // pred_check
      _
    $region51: #{tpu_custom_call.1} parent=1 // pred_check_branch
      %100 = sbr.rel (0) target = $region53
    $region52: #{tpu_custom_call.1} parent=1 // pred_region
      %101 = dma.done [#allocation8], 64
    $region53: #{tpu_custom_call.1} parent=1 // pred_fallthru
      _
    // Predicated region
    $region54: #{tpu_custom_call.1} parent=1 // pred_check
      _
    $region55: #{tpu_custom_call.1} parent=1 // pred_check_branch
      %103 = sbr.rel (0) target = $region57
    $region56: #{tpu_custom_call.1} parent=1 // pred_region
      %104 = dma.done [#allocation8], 64
    $region57: #{tpu_custom_call.1} parent=1 // pred_fallthru
      _
    // Predicated region
    $region58: #{tpu_custom_call.1} parent=1 // pred_check
      _
    $region59: #{tpu_custom_call.1} parent=1 // pred_check_branch
      %106 = sbr.rel (0) target = $region61
    $region60: #{tpu_custom_call.1} parent=1 // pred_region
      %107 = dma.done [#allocation11], 256
    $region61: #{tpu_custom_call.1} parent=1 // pred_fallthru
      _
    // Predicated region
    $region62: #{tpu_custom_call.1} parent=1 // pred_check
      _
    $region63: #{tpu_custom_call.1} parent=1 // pred_check_branch
      %109 = sbr.rel (0) target = $region65
    $region64: #{tpu_custom_call.1} parent=1 // pred_region
      %110 = dma.done [#allocation11], 512
    $region65: #{tpu_custom_call.1} parent=1 // pred_fallthru
      _
    %v111 = vld [vmem:[#allocation10] sm:$0xff]
    %v112 = vld [vmem:[#allocation10 + $0x8] sm:$0xff]
    %v113 = vld [vmem:[%s4] sm:$0xff]
    %v114 = vld [vmem:[%s4 + $0x8] sm:$0xff]
    %v115 = vld [vmem:[%s4 + $0x10] sm:$0xff]
    %v116 = vld [vmem:[%s4 + $0x18] sm:$0xff]
    %v117 = vld [vmem:[%s5] sm:$0x1]
    %v118 = vld [vmem:[#allocation4] sm:$0x3]
    %v119 = vld [vmem:[#allocation4 + $0x2] sm:$0x3]
    %v120 = vld [vmem:[#allocation4 + $0x4] sm:$0x3]
    %v121 = vld [vmem:[#allocation4 + $0x6] sm:$0x3]
    %v122 = vld [vmem:[#allocation4 + $0x8] sm:$0x3]
    %v123 = vld [vmem:[#allocation4 + $0xa] sm:$0x3]
    %v124 = vld [vmem:[#allocation4 + $0xc] sm:$0x3]
    %v125 = vld [vmem:[#allocation4 + $0xe] sm:$0x3]
    %v127 = vlaneseq
    %v128 = vshrl.u32 %v127, 7
    %v129 = vsub.s32 0, %v128
    %v130 = vrot.slane %v117, %v129
    %v140 = vcombine.low %v118, %v119
    %v141 = vcombine.low %v120, %v121
    %v143 = vunpack.c.l.s4 1983009808
    %v144 = vunpack.c.0.s8 %v143
    %v145 = vlaneseq
    %v146 = vshrl.u32 %v145, 7
    %v147 = vsub.s32 %v144, %v146
    %v148 = vrot.slane %v140, %v147
    %v150 = vunpack.c.l.s4 1983009808
    %v151 = vunpack.c.0.s8 %v150
    %v152 = vlaneseq
    %v153 = vshrl.u32 %v152, 7
    %v154 = vsub.s32 %v151, %v153
    %v155 = vrot.slane %v141, %v154
    %v156 = vcombine.low %v148, %v155
    %v157 = vcombine.low %v122, %v123
    %v158 = vcombine.low %v124, %v125
    %v160 = vunpack.c.l.s4 1983009808
    %v161 = vunpack.c.0.s8 %v160
    %v162 = vlaneseq
    %v163 = vshrl.u32 %v162, 7
    %v164 = vsub.s32 %v161, %v163
    %v165 = vrot.slane %v157, %v164
    %v167 = vunpack.c.l.s4 1983009808
    %v168 = vunpack.c.0.s8 %v167
    %v169 = vlaneseq
    %v170 = vshrl.u32 %v169, 7
    %v171 = vsub.s32 %v168, %v170
    %v172 = vrot.slane %v158, %v171
    %v173 = vcombine.low %v165, %v172
    %vm174 = vcmask 130048
    %v175 = vsel %vm174, %v156, 0
    %v177 = vsel %vm174, %v173, 0
    %179 = vmatprep.subr.mxu0 0.0
    %180 = vmatpush1.msra.mxu0 %v111
    %181 = vmatprep.subr.mxu0 0.0
    %182 = vmatpush1.msra.mxu0 %v112
    %183 = vmatprep.subr.mxu0 0.0
    %184 = vmatpush1.msra.mxu0 0.0
    %185 = vmatprep.subr.mxu0 0.0
    %186 = vmatpush1.msra.mxu0 0.0
    %187 = vmatprep.subr.mxu0 0.0
    %188 = vmatpush1.msra.mxu0 0.0
    %189 = vmatprep.subr.mxu0 0.0
    %190 = vmatpush1.msra.mxu0 0.0
    %191 = vmatprep.subr.mxu0 0.0
    %192 = vmatpush1.msra.mxu0 0.0
    %193 = vmatprep.subr.mxu0 0.0
    %194 = vmatpush1.msra.mxu0 0.0
    %195 = vmatprep.subr.mxu0 0.0
    %196 = vmatpush1.msra.mxu0 0.0
    %197 = vmatprep.subr.mxu0 0.0
    %198 = vmatpush1.msra.mxu0 0.0
    %199 = vmatprep.subr.mxu0 0.0
    %200 = vmatpush1.msra.mxu0 0.0
    %201 = vmatprep.subr.mxu0 0.0
    %202 = vmatpush1.msra.mxu0 0.0
    %203 = vmatprep.subr.mxu0 0.0
    %204 = vmatpush1.msra.mxu0 0.0
    %205 = vmatprep.subr.mxu0 0.0
    %206 = vmatpush1.msra.mxu0 0.0
    %207 = vmatprep.subr.mxu0 0.0
    %208 = vmatpush1.msra.mxu0 0.0
    %209 = vmatprep.subr.mxu0 0.0
    %210 = vmatpush1.msra.mxu0 0.0
    %211 = vmatprep.subr.mxu0 0.0
    %212 = vmatpush1.msra.mxu0 0.0
    %213 = vmatprep.subr.mxu0 0.0
    %214 = vmatpush1.msra.mxu0 0.0
    %215 = vmatprep.subr.mxu0 0.0
    %216 = vmatpush1.msra.mxu0 0.0
    %217 = vmatprep.subr.mxu0 0.0
    %218 = vmatpush1.msra.mxu0 0.0
    %219 = vmatprep.subr.mxu0 0.0
    %220 = vmatpush1.msra.mxu0 0.0
    %221 = vmatprep.subr.mxu0 0.0
    %222 = vmatpush1.msra.mxu0 0.0
    %223 = vmatprep.subr.mxu0 0.0
    %224 = vmatpush1.msra.mxu0 0.0
    %225 = vmatprep.subr.mxu0 0.0
    %226 = vmatpush1.msra.mxu0 0.0
    %227 = vmatprep.subr.mxu0 0.0
    %228 = vmatpush1.msra.mxu0 0.0
    %229 = vmatprep.subr.mxu0 0.0
    %230 = vmatpush1.msra.mxu0 0.0
    %231 = vmatprep.subr.mxu0 0.0
    %232 = vmatpush1.msra.mxu0 0.0
    %233 = vmatprep.subr.mxu0 0.0
    %234 = vmatpush1.msra.mxu0 0.0
    %235 = vmatprep.subr.mxu0 0.0
    %236 = vmatpush1.msra.mxu0 0.0
    %237 = vmatprep.subr.mxu0 0.0
    %238 = vmatpush1.msra.mxu0 0.0
    %239 = vmatprep.subr.mxu0 0.0
    %240 = vmatpush1.msra.mxu0 0.0
    %241 = vmatprep.subr.mxu0 0.0
    %242 = vmatpush1.msra.mxu0 0.0
    %243 = vmatprep.mubr.f32.mxu0 0.0
    %244 = vmatmul.mubr.f32.gmra.mrb[0].mxu0 %v175
    %v245 = vpop.f32.mrb[0].mxu0
    %v246 = vadd.f32 %v130, %v245
    %v247 = vpop.f32.mrb[0].mxu0
    %248 = vmatprep.mubr.f32.mxu0 0.0
    %249 = vmatmul.mubr.f32.gmra.mrb[0].mxu0 %v177
    %v250 = vpop.f32.mrb[0].mxu0
    %v251 = vadd.f32 %v130, %v250
    %v252 = vpop.f32.mrb[0].mxu0
    %253 = vdwg.mxu0
    %v256 = vcombine.high %v246, %v246
    %v258 = vunpack.c.l.s4 1983009808
    %v259 = vunpack.c.0.s8 %v258
    %v260 = vlaneseq
    %v261 = vshrl.u32 %v260, 7
    %v262 = vsub.s32 %v259, %v261
    %v263 = vrot.slane %v246, %v262
    %v265 = vunpack.c.l.s4 1983009808
    %v266 = vunpack.c.0.s8 %v265
    %v267 = vlaneseq
    %v268 = vshrl.u32 %v267, 7
    %v269 = vsub.s32 %v266, %v268
    %v270 = vrot.slane %v256, %v269
    %v271 = vcombine.high %v263, %v263
    %v272 = vcombine.high %v270, %v270
    %v273 = vcombine.high %v251, %v251
    %v275 = vunpack.c.l.s4 1983009808
    %v276 = vunpack.c.0.s8 %v275
    %v277 = vlaneseq
    %v278 = vshrl.u32 %v277, 7
    %v279 = vsub.s32 %v276, %v278
    %v280 = vrot.slane %v251, %v279
    %v282 = vunpack.c.l.s4 1983009808
    %v283 = vunpack.c.0.s8 %v282
    %v284 = vlaneseq
    %v285 = vshrl.u32 %v284, 7
    %v286 = vsub.s32 %v283, %v285
    %v287 = vrot.slane %v273, %v286
    %v288 = vcombine.high %v280, %v280
    %v289 = vcombine.high %v287, %v287
    %298 = vst [vmem:[#allocation3] sm:$0x3] %v263
    %299 = vst [vmem:[#allocation3 + $0x2] sm:$0x3] %v271
    %300 = vst [vmem:[#allocation3 + $0x4] sm:$0x3] %v270
    %301 = vst [vmem:[#allocation3 + $0x6] sm:$0x3] %v272
    %302 = vst [vmem:[#allocation3 + $0x8] sm:$0x3] %v280
    %303 = vst [vmem:[#allocation3 + $0xa] sm:$0x3] %v288
    %304 = vst [vmem:[#allocation3 + $0xc] sm:$0x3] %v287
    %305 = vst [vmem:[#allocation3 + $0xe] sm:$0x3] %v289
    %v306 = vld [vmem:[#allocation7] sm:$0x3]
    %v307 = vld [vmem:[#allocation9] sm:$0x3]
    %v308 = vld [vmem:[#allocation3] sm:$0x3]
    %vm309 = vcmask 261120
    %v311 = vsel %vm309, %v306, 0
    %313 = vmatprep.subr.mxu0 0.0
    %314 = vmatpush1.msra.mxu0 %v113
    %315 = vmatprep.subr.mxu0 0.0
    %316 = vmatpush1.msra.mxu0 %v114
    %317 = vmatprep.subr.mxu0 0.0
    %318 = vmatpush1.msra.mxu0 %v115
    %319 = vmatprep.subr.mxu0 0.0
    %320 = vmatpush1.msra.mxu0 %v116
    %321 = vmatprep.subr.mxu0 0.0
    %322 = vmatpush1.msra.mxu0 0.0
    %323 = vmatprep.subr.mxu0 0.0
    %324 = vmatpush1.msra.mxu0 0.0
    %325 = vmatprep.subr.mxu0 0.0
    %326 = vmatpush1.msra.mxu0 0.0
    %327 = vmatprep.subr.mxu0 0.0
    %328 = vmatpush1.msra.mxu0 0.0
    %329 = vmatprep.subr.mxu0 0.0
    %330 = vmatpush1.msra.mxu0 0.0
    %331 = vmatprep.subr.mxu0 0.0
    %332 = vmatpush1.msra.mxu0 0.0
    %333 = vmatprep.subr.mxu0 0.0
    %334 = vmatpush1.msra.mxu0 0.0
    %335 = vmatprep.subr.mxu0 0.0
    %336 = vmatpush1.msra.mxu0 0.0
    %337 = vmatprep.subr.mxu0 0.0
    %338 = vmatpush1.msra.mxu0 0.0
    %339 = vmatprep.subr.mxu0 0.0
    %340 = vmatpush1.msra.mxu0 0.0
    %341 = vmatprep.subr.mxu0 0.0
    %342 = vmatpush1.msra.mxu0 0.0
    %343 = vmatprep.subr.mxu0 0.0
    %344 = vmatpush1.msra.mxu0 0.0
    %345 = vmatprep.subr.mxu0 0.0
    %346 = vmatpush1.msra.mxu0 0.0
    %347 = vmatprep.subr.mxu0 0.0
    %348 = vmatpush1.msra.mxu0 0.0
    %349 = vmatprep.subr.mxu0 0.0
    %350 = vmatpush1.msra.mxu0 0.0
    %351 = vmatprep.subr.mxu0 0.0
    %352 = vmatpush1.msra.mxu0 0.0
    %353 = vmatprep.subr.mxu0 0.0
    %354 = vmatpush1.msra.mxu0 0.0
    %355 = vmatprep.subr.mxu0 0.0
    %356 = vmatpush1.msra.mxu0 0.0
    %357 = vmatprep.subr.mxu0 0.0
    %358 = vmatpush1.msra.mxu0 0.0
    %359 = vmatprep.subr.mxu0 0.0
    %360 = vmatpush1.msra.mxu0 0.0
    %361 = vmatprep.subr.mxu0 0.0
    %362 = vmatpush1.msra.mxu0 0.0
    %363 = vmatprep.subr.mxu0 0.0
    %364 = vmatpush1.msra.mxu0 0.0
    %365 = vmatprep.subr.mxu0 0.0
    %366 = vmatpush1.msra.mxu0 0.0
    %367 = vmatprep.subr.mxu0 0.0
    %368 = vmatpush1.msra.mxu0 0.0
    %369 = vmatprep.subr.mxu0 0.0
    %370 = vmatpush1.msra.mxu0 0.0
    %371 = vmatprep.subr.mxu0 0.0
    %372 = vmatpush1.msra.mxu0 0.0
    %373 = vmatprep.subr.mxu0 0.0
    %374 = vmatpush1.msra.mxu0 0.0
    %375 = vmatprep.subr.mxu0 0.0
    %376 = vmatpush1.msra.mxu0 0.0
    %377 = vmatprep.mubr.f32.mxu0 0.0
    %378 = vmatmul.mubr.f32.gmra.mrb[0].mxu0 %v311
    %v379 = vpop.f32.mrb[0].mxu0
    %v380 = vadd.f32 0.0, %v379
    %v381 = vpop.f32.mrb[0].mxu0
    %382 = vdwg.mxu0
    %v383 = vadd.f32 %v308, %v380
    %v384 = vxor.u32 %v383, 2147483648
    %v385 = vmul.f32 %v384, 1.442695
    %v386 = vpow.pop %v385
    %v387 = vadd.f32 %v386, 1.0
    %v388 = vrcp.pop %v387
    %v389 = vmul.f32 1.0, %v388
    %v390 = vtanh.pop %v383
    %392 = vrot.lane.b32.xlu0 %v307, 32
    %v393 = vpop.permute.xlu0 %392
    %v395 = vmul.f32 %v389, %v393
    %397 = vrot.lane.b32.xlu0 %v390, 32
    %v398 = vpop.permute.xlu0 %397
    %v400 = vmul.f32 %v389, %v398
    %402 = vrot.lane.b32.xlu0 %v400, 32
    %v403 = vpop.permute.xlu0 %402
    %v405 = vadd.f32 %v395, %v403
    %v406 = vtanh.pop %v405
    %408 = vrot.lane.b32.xlu0 %v406, 32
    %v409 = vpop.permute.xlu0 %408
    %v411 = vmul.f32 %v389, %v409
    %413 = vrot.lane.b32.xlu0 %v411, 64
    %v414 = vpop.permute.xlu0 %413
    %vm416 = vcmask 254976
    %417 = vst.msk [vmem:[#allocation2] sm:$0x3] %vm416, %v414
    %s418 = scalar_lea.vmem [#allocation3], 2
    %v419 = vld [vmem:[%s418] sm:$0x3]
    %v420 = vsel %vm309, %v414, 0
    %422 = vmatprep.subr.mxu0 0.0
    %423 = vmatpush1.msra.mxu0 %v113
    %424 = vmatprep.subr.mxu0 0.0
    %425 = vmatpush1.msra.mxu0 %v114
    %426 = vmatprep.subr.mxu0 0.0
    %427 = vmatpush1.msra.mxu0 %v115
    %428 = vmatprep.subr.mxu0 0.0
    %429 = vmatpush1.msra.mxu0 %v116
    %430 = vmatprep.subr.mxu0 0.0
    %431 = vmatpush1.msra.mxu0 0.0
    %432 = vmatprep.subr.mxu0 0.0
    %433 = vmatpush1.msra.mxu0 0.0
    %434 = vmatprep.subr.mxu0 0.0
    %435 = vmatpush1.msra.mxu0 0.0
    %436 = vmatprep.subr.mxu0 0.0
    %437 = vmatpush1.msra.mxu0 0.0
    %438 = vmatprep.subr.mxu0 0.0
    %439 = vmatpush1.msra.mxu0 0.0
    %440 = vmatprep.subr.mxu0 0.0
    %441 = vmatpush1.msra.mxu0 0.0
    %442 = vmatprep.subr.mxu0 0.0
    %443 = vmatpush1.msra.mxu0 0.0
    %444 = vmatprep.subr.mxu0 0.0
    %445 = vmatpush1.msra.mxu0 0.0
    %446 = vmatprep.subr.mxu0 0.0
    %447 = vmatpush1.msra.mxu0 0.0
    %448 = vmatprep.subr.mxu0 0.0
    %449 = vmatpush1.msra.mxu0 0.0
    %450 = vmatprep.subr.mxu0 0.0
    %451 = vmatpush1.msra.mxu0 0.0
    %452 = vmatprep.subr.mxu0 0.0
    %453 = vmatpush1.msra.mxu0 0.0
    %454 = vmatprep.subr.mxu0 0.0
    %455 = vmatpush1.msra.mxu0 0.0
    %456 = vmatprep.subr.mxu0 0.0
    %457 = vmatpush1.msra.mxu0 0.0
    %458 = vmatprep.subr.mxu0 0.0
    %459 = vmatpush1.msra.mxu0 0.0
    %460 = vmatprep.subr.mxu0 0.0
    %461 = vmatpush1.msra.mxu0 0.0
    %462 = vmatprep.subr.mxu0 0.0
    %463 = vmatpush1.msra.mxu0 0.0
    %464 = vmatprep.subr.mxu0 0.0
    %465 = vmatpush1.msra.mxu0 0.0
    %466 = vmatprep.subr.mxu0 0.0
    %467 = vmatpush1.msra.mxu0 0.0
    %468 = vmatprep.subr.mxu0 0.0
    %469 = vmatpush1.msra.mxu0 0.0
    %470 = vmatprep.subr.mxu0 0.0
    %471 = vmatpush1.msra.mxu0 0.0
    %472 = vmatprep.subr.mxu0 0.0
    %473 = vmatpush1.msra.mxu0 0.0
    %474 = vmatprep.subr.mxu0 0.0
    %475 = vmatpush1.msra.mxu0 0.0
    %476 = vmatprep.subr.mxu0 0.0
    %477 = vmatpush1.msra.mxu0 0.0
    %478 = vmatprep.subr.mxu0 0.0
    %479 = vmatpush1.msra.mxu0 0.0
    %480 = vmatprep.subr.mxu0 0.0
    %481 = vmatpush1.msra.mxu0 0.0
    %482 = vmatprep.subr.mxu0 0.0
    %483 = vmatpush1.msra.mxu0 0.0
    %484 = vmatprep.subr.mxu0 0.0
    %485 = vmatpush1.msra.mxu0 0.0
    %486 = vmatprep.mubr.f32.mxu0 0.0
    %487 = vmatmul.mubr.f32.gmra.mrb[0].mxu0 %v420
    %v488 = vpop.f32.mrb[0].mxu0
    %v489 = vadd.f32 0.0, %v488
    %v490 = vpop.f32.mrb[0].mxu0
    %491 = vdwg.mxu0
    %v492 = vadd.f32 %v419, %v489
    %v493 = vxor.u32 %v492, 2147483648
    %v494 = vmul.f32 %v493, 1.442695
    %v495 = vpow.pop %v494
    %v496 = vadd.f32 %v495, 1.0
    %v497 = vrcp.pop %v496
    %v498 = vmul.f32 1.0, %v497
    %v499 = vtanh.pop %v492
    %v500 = vmul.f32 %v498, %v405
    %502 = vrot.lane.b32.xlu0 %v499, 32
    %v503 = vpop.permute.xlu0 %502
    %v505 = vmul.f32 %v498, %v503
    %507 = vrot.lane.b32.xlu0 %v505, 32
    %v508 = vpop.permute.xlu0 %507
    %v510 = vadd.f32 %v500, %v508
    %v511 = vtanh.pop %v510
    %513 = vrot.lane.b32.xlu0 %v511, 32
    %v514 = vpop.permute.xlu0 %513
    %v516 = vmul.f32 %v498, %v514
    %518 = vrot.lane.b32.xlu0 %v516, 64
    %v519 = vpop.permute.xlu0 %518
    %s521 = scalar_lea.vmem [#allocation2], 2
    %522 = vst.msk [vmem:[%s521] sm:$0x3] %vm416, %v519
    %s523 = scalar_lea.vmem [#allocation3], 4
    %v524 = vld [vmem:[%s523] sm:$0x3]
    %v525 = vsel %vm309, %v519, 0
    %527 = vmatprep.subr.mxu0 0.0
    %528 = vmatpush1.msra.mxu0 %v113
    %529 = vmatprep.subr.mxu0 0.0
    %530 = vmatpush1.msra.mxu0 %v114
    %531 = vmatprep.subr.mxu0 0.0
    %532 = vmatpush1.msra.mxu0 %v115
    %533 = vmatprep.subr.mxu0 0.0
    %534 = vmatpush1.msra.mxu0 %v116
    %535 = vmatprep.subr.mxu0 0.0
    %536 = vmatpush1.msra.mxu0 0.0
    %537 = vmatprep.subr.mxu0 0.0
    %538 = vmatpush1.msra.mxu0 0.0
    %539 = vmatprep.subr.mxu0 0.0
    %540 = vmatpush1.msra.mxu0 0.0
    %541 = vmatprep.subr.mxu0 0.0
    %542 = vmatpush1.msra.mxu0 0.0
    %543 = vmatprep.subr.mxu0 0.0
    %544 = vmatpush1.msra.mxu0 0.0
    %545 = vmatprep.subr.mxu0 0.0
    %546 = vmatpush1.msra.mxu0 0.0
    %547 = vmatprep.subr.mxu0 0.0
    %548 = vmatpush1.msra.mxu0 0.0
    %549 = vmatprep.subr.mxu0 0.0
    %550 = vmatpush1.msra.mxu0 0.0
    %551 = vmatprep.subr.mxu0 0.0
    %552 = vmatpush1.msra.mxu0 0.0
    %553 = vmatprep.subr.mxu0 0.0
    %554 = vmatpush1.msra.mxu0 0.0
    %555 = vmatprep.subr.mxu0 0.0
    %556 = vmatpush1.msra.mxu0 0.0
    %557 = vmatprep.subr.mxu0 0.0
    %558 = vmatpush1.msra.mxu0 0.0
    %559 = vmatprep.subr.mxu0 0.0
    %560 = vmatpush1.msra.mxu0 0.0
    %561 = vmatprep.subr.mxu0 0.0
    %562 = vmatpush1.msra.mxu0 0.0
    %563 = vmatprep.subr.mxu0 0.0
    %564 = vmatpush1.msra.mxu0 0.0
    %565 = vmatprep.subr.mxu0 0.0
    %566 = vmatpush1.msra.mxu0 0.0
    %567 = vmatprep.subr.mxu0 0.0
    %568 = vmatpush1.msra.mxu0 0.0
    %569 = vmatprep.subr.mxu0 0.0
    %570 = vmatpush1.msra.mxu0 0.0
    %571 = vmatprep.subr.mxu0 0.0
    %572 = vmatpush1.msra.mxu0 0.0
    %573 = vmatprep.subr.mxu0 0.0
    %574 = vmatpush1.msra.mxu0 0.0
    %575 = vmatprep.subr.mxu0 0.0
    %576 = vmatpush1.msra.mxu0 0.0
    %577 = vmatprep.subr.mxu0 0.0
    %578 = vmatpush1.msra.mxu0 0.0
    %579 = vmatprep.subr.mxu0 0.0
    %580 = vmatpush1.msra.mxu0 0.0
    %581 = vmatprep.subr.mxu0 0.0
    %582 = vmatpush1.msra.mxu0 0.0
    %583 = vmatprep.subr.mxu0 0.0
    %584 = vmatpush1.msra.mxu0 0.0
    %585 = vmatprep.subr.mxu0 0.0
    %586 = vmatpush1.msra.mxu0 0.0
    %587 = vmatprep.subr.mxu0 0.0
    %588 = vmatpush1.msra.mxu0 0.0
    %589 = vmatprep.subr.mxu0 0.0
    %590 = vmatpush1.msra.mxu0 0.0
    %591 = vmatprep.mubr.f32.mxu0 0.0
    %592 = vmatmul.mubr.f32.gmra.mrb[0].mxu0 %v525
    %v593 = vpop.f32.mrb[0].mxu0
    %v594 = vadd.f32 0.0, %v593
    %v595 = vpop.f32.mrb[0].mxu0
    %596 = vdwg.mxu0
    %v597 = vadd.f32 %v524, %v594
    %v598 = vxor.u32 %v597, 2147483648
    %v599 = vmul.f32 %v598, 1.442695
    %v600 = vpow.pop %v599
    %v601 = vadd.f32 %v600, 1.0
    %v602 = vrcp.pop %v601
    %v603 = vmul.f32 1.0, %v602
    %v604 = vtanh.pop %v597
    %v605 = vmul.f32 %v603, %v510
    %607 = vrot.lane.b32.xlu0 %v604, 32
    %v608 = vpop.permute.xlu0 %607
    %v610 = vmul.f32 %v603, %v608
    %612 = vrot.lane.b32.xlu0 %v610, 32
    %v613 = vpop.permute.xlu0 %612
    %v615 = vadd.f32 %v605, %v613
    %v616 = vtanh.pop %v615
    %618 = vrot.lane.b32.xlu0 %v616, 32
    %v619 = vpop.permute.xlu0 %618
    %v621 = vmul.f32 %v603, %v619
    %623 = vrot.lane.b32.xlu0 %v621, 64
    %v624 = vpop.permute.xlu0 %623
    %s626 = scalar_lea.vmem [#allocation2], 4
    %627 = vst.msk [vmem:[%s626] sm:$0x3] %vm416, %v624
    %s628 = scalar_lea.vmem [#allocation3], 6
    %v629 = vld [vmem:[%s628] sm:$0x3]
    %v630 = vsel %vm309, %v624, 0
    %632 = vmatprep.subr.mxu0 0.0
    %633 = vmatpush1.msra.mxu0 %v113
    %634 = vmatprep.subr.mxu0 0.0
    %635 = vmatpush1.msra.mxu0 %v114
    %636 = vmatprep.subr.mxu0 0.0
    %637 = vmatpush1.msra.mxu0 %v115
    %638 = vmatprep.subr.mxu0 0.0
    %639 = vmatpush1.msra.mxu0 %v116
    %640 = vmatprep.subr.mxu0 0.0
    %641 = vmatpush1.msra.mxu0 0.0
    %642 = vmatprep.subr.mxu0 0.0
    %643 = vmatpush1.msra.mxu0 0.0
    %644 = vmatprep.subr.mxu0 0.0
    %645 = vmatpush1.msra.mxu0 0.0
    %646 = vmatprep.subr.mxu0 0.0
    %647 = vmatpush1.msra.mxu0 0.0
    %648 = vmatprep.subr.mxu0 0.0
    %649 = vmatpush1.msra.mxu0 0.0
    %650 = vmatprep.subr.mxu0 0.0
    %651 = vmatpush1.msra.mxu0 0.0
    %652 = vmatprep.subr.mxu0 0.0
    %653 = vmatpush1.msra.mxu0 0.0
    %654 = vmatprep.subr.mxu0 0.0
    %655 = vmatpush1.msra.mxu0 0.0
    %656 = vmatprep.subr.mxu0 0.0
    %657 = vmatpush1.msra.mxu0 0.0
    %658 = vmatprep.subr.mxu0 0.0
    %659 = vmatpush1.msra.mxu0 0.0
    %660 = vmatprep.subr.mxu0 0.0
    %661 = vmatpush1.msra.mxu0 0.0
    %662 = vmatprep.subr.mxu0 0.0
    %663 = vmatpush1.msra.mxu0 0.0
    %664 = vmatprep.subr.mxu0 0.0
    %665 = vmatpush1.msra.mxu0 0.0
    %666 = vmatprep.subr.mxu0 0.0
    %667 = vmatpush1.msra.mxu0 0.0
    %668 = vmatprep.subr.mxu0 0.0
    %669 = vmatpush1.msra.mxu0 0.0
    %670 = vmatprep.subr.mxu0 0.0
    %671 = vmatpush1.msra.mxu0 0.0
    %672 = vmatprep.subr.mxu0 0.0
    %673 = vmatpush1.msra.mxu0 0.0
    %674 = vmatprep.subr.mxu0 0.0
    %675 = vmatpush1.msra.mxu0 0.0
    %676 = vmatprep.subr.mxu0 0.0
    %677 = vmatpush1.msra.mxu0 0.0
    %678 = vmatprep.subr.mxu0 0.0
    %679 = vmatpush1.msra.mxu0 0.0
    %680 = vmatprep.subr.mxu0 0.0
    %681 = vmatpush1.msra.mxu0 0.0
    %682 = vmatprep.subr.mxu0 0.0
    %683 = vmatpush1.msra.mxu0 0.0
    %684 = vmatprep.subr.mxu0 0.0
    %685 = vmatpush1.msra.mxu0 0.0
    %686 = vmatprep.subr.mxu0 0.0
    %687 = vmatpush1.msra.mxu0 0.0
    %688 = vmatprep.subr.mxu0 0.0
    %689 = vmatpush1.msra.mxu0 0.0
    %690 = vmatprep.subr.mxu0 0.0
    %691 = vmatpush1.msra.mxu0 0.0
    %692 = vmatprep.subr.mxu0 0.0
    %693 = vmatpush1.msra.mxu0 0.0
    %694 = vmatprep.subr.mxu0 0.0
    %695 = vmatpush1.msra.mxu0 0.0
    %696 = vmatprep.mubr.f32.mxu0 0.0
    %697 = vmatmul.mubr.f32.gmra.mrb[0].mxu0 %v630
    %v698 = vpop.f32.mrb[0].mxu0
    %v699 = vadd.f32 0.0, %v698
    %v700 = vpop.f32.mrb[0].mxu0
    %701 = vdwg.mxu0
    %v702 = vadd.f32 %v629, %v699
    %v703 = vxor.u32 %v702, 2147483648
    %v704 = vmul.f32 %v703, 1.442695
    %v705 = vpow.pop %v704
    %v706 = vadd.f32 %v705, 1.0
    %v707 = vrcp.pop %v706
    %v708 = vmul.f32 1.0, %v707
    %v709 = vtanh.pop %v702
    %v710 = vmul.f32 %v708, %v615
    %712 = vrot.lane.b32.xlu0 %v709, 32
    %v713 = vpop.permute.xlu0 %712
    %v715 = vmul.f32 %v708, %v713
    %717 = vrot.lane.b32.xlu0 %v715, 32
    %v718 = vpop.permute.xlu0 %717
    %v720 = vadd.f32 %v710, %v718
    %v721 = vtanh.pop %v720
    %723 = vrot.lane.b32.xlu0 %v721, 32
    %v724 = vpop.permute.xlu0 %723
    %v726 = vmul.f32 %v708, %v724
    %728 = vrot.lane.b32.xlu0 %v726, 64
    %v729 = vpop.permute.xlu0 %728
    %s731 = scalar_lea.vmem [#allocation2], 6
    %732 = vst.msk [vmem:[%s731] sm:$0x3] %vm416, %v729
    %s733 = scalar_lea.vmem [#allocation3], 8
    %v734 = vld [vmem:[%s733] sm:$0x3]
    %v735 = vsel %vm309, %v729, 0
    %737 = vmatprep.subr.mxu0 0.0
    %738 = vmatpush1.msra.mxu0 %v113
    %739 = vmatprep.subr.mxu0 0.0
    %740 = vmatpush1.msra.mxu0 %v114
    %741 = vmatprep.subr.mxu0 0.0
    %742 = vmatpush1.msra.mxu0 %v115
    %743 = vmatprep.subr.mxu0 0.0
    %744 = vmatpush1.msra.mxu0 %v116
    %745 = vmatprep.subr.mxu0 0.0
    %746 = vmatpush1.msra.mxu0 0.0
    %747 = vmatprep.subr.mxu0 0.0
    %748 = vmatpush1.msra.mxu0 0.0
    %749 = vmatprep.subr.mxu0 0.0
    %750 = vmatpush1.msra.mxu0 0.0
    %751 = vmatprep.subr.mxu0 0.0
    %752 = vmatpush1.msra.mxu0 0.0
    %753 = vmatprep.subr.mxu0 0.0
    %754 = vmatpush1.msra.mxu0 0.0
    %755 = vmatprep.subr.mxu0 0.0
    %756 = vmatpush1.msra.mxu0 0.0
    %757 = vmatprep.subr.mxu0 0.0
    %758 = vmatpush1.msra.mxu0 0.0
    %759 = vmatprep.subr.mxu0 0.0
    %760 = vmatpush1.msra.mxu0 0.0
    %761 = vmatprep.subr.mxu0 0.0
    %762 = vmatpush1.msra.mxu0 0.0
    %763 = vmatprep.subr.mxu0 0.0
    %764 = vmatpush1.msra.mxu0 0.0
    %765 = vmatprep.subr.mxu0 0.0
    %766 = vmatpush1.msra.mxu0 0.0
    %767 = vmatprep.subr.mxu0 0.0
    %768 = vmatpush1.msra.mxu0 0.0
    %769 = vmatprep.subr.mxu0 0.0
    %770 = vmatpush1.msra.mxu0 0.0
    %771 = vmatprep.subr.mxu0 0.0
    %772 = vmatpush1.msra.mxu0 0.0
    %773 = vmatprep.subr.mxu0 0.0
    %774 = vmatpush1.msra.mxu0 0.0
    %775 = vmatprep.subr.mxu0 0.0
    %776 = vmatpush1.msra.mxu0 0.0
    %777 = vmatprep.subr.mxu0 0.0
    %778 = vmatpush1.msra.mxu0 0.0
    %779 = vmatprep.subr.mxu0 0.0
    %780 = vmatpush1.msra.mxu0 0.0
    %781 = vmatprep.subr.mxu0 0.0
    %782 = vmatpush1.msra.mxu0 0.0
    %783 = vmatprep.subr.mxu0 0.0
    %784 = vmatpush1.msra.mxu0 0.0
    %785 = vmatprep.subr.mxu0 0.0
    %786 = vmatpush1.msra.mxu0 0.0
    %787 = vmatprep.subr.mxu0 0.0
    %788 = vmatpush1.msra.mxu0 0.0
    %789 = vmatprep.subr.mxu0 0.0
    %790 = vmatpush1.msra.mxu0 0.0
    %791 = vmatprep.subr.mxu0 0.0
    %792 = vmatpush1.msra.mxu0 0.0
    %793 = vmatprep.subr.mxu0 0.0
    %794 = vmatpush1.msra.mxu0 0.0
    %795 = vmatprep.subr.mxu0 0.0
    %796 = vmatpush1.msra.mxu0 0.0
    %797 = vmatprep.subr.mxu0 0.0
    %798 = vmatpush1.msra.mxu0 0.0
    %799 = vmatprep.subr.mxu0 0.0
    %800 = vmatpush1.msra.mxu0 0.0
    %801 = vmatprep.mubr.f32.mxu0 0.0
    %802 = vmatmul.mubr.f32.gmra.mrb[0].mxu0 %v735
    %v803 = vpop.f32.mrb[0].mxu0
    %v804 = vadd.f32 0.0, %v803
    %v805 = vpop.f32.mrb[0].mxu0
    %806 = vdwg.mxu0
    %v807 = vadd.f32 %v734, %v804
    %v808 = vxor.u32 %v807, 2147483648
    %v809 = vmul.f32 %v808, 1.442695
    %v810 = vpow.pop %v809
    %v811 = vadd.f32 %v810, 1.0
    %v812 = vrcp.pop %v811
    %v813 = vmul.f32 1.0, %v812
    %v814 = vtanh.pop %v807
    %v815 = vmul.f32 %v813, %v720
    %817 = vrot.lane.b32.xlu0 %v814, 32
    %v818 = vpop.permute.xlu0 %817
    %v820 = vmul.f32 %v813, %v818
    %822 = vrot.lane.b32.xlu0 %v820, 32
    %v823 = vpop.permute.xlu0 %822
    %v825 = vadd.f32 %v815, %v823
    %v826 = vtanh.pop %v825
    %828 = vrot.lane.b32.xlu0 %v826, 32
    %v829 = vpop.permute.xlu0 %828
    %v831 = vmul.f32 %v813, %v829
    %833 = vrot.lane.b32.xlu0 %v831, 64
    %v834 = vpop.permute.xlu0 %833
    %s836 = scalar_lea.vmem [#allocation2], 8
    %837 = vst.msk [vmem:[%s836] sm:$0x3] %vm416, %v834
    %s838 = scalar_lea.vmem [#allocation3], 10
    %v839 = vld [vmem:[%s838] sm:$0x3]
    %v840 = vsel %vm309, %v834, 0
    %842 = vmatprep.subr.mxu0 0.0
    %843 = vmatpush1.msra.mxu0 %v113
    %844 = vmatprep.subr.mxu0 0.0
    %845 = vmatpush1.msra.mxu0 %v114
    %846 = vmatprep.subr.mxu0 0.0
    %847 = vmatpush1.msra.mxu0 %v115
    %848 = vmatprep.subr.mxu0 0.0
    %849 = vmatpush1.msra.mxu0 %v116
    %850 = vmatprep.subr.mxu0 0.0
    %851 = vmatpush1.msra.mxu0 0.0
    %852 = vmatprep.subr.mxu0 0.0
    %853 = vmatpush1.msra.mxu0 0.0
    %854 = vmatprep.subr.mxu0 0.0
    %855 = vmatpush1.msra.mxu0 0.0
    %856 = vmatprep.subr.mxu0 0.0
    %857 = vmatpush1.msra.mxu0 0.0
    %858 = vmatprep.subr.mxu0 0.0
    %859 = vmatpush1.msra.mxu0 0.0
    %860 = vmatprep.subr.mxu0 0.0
    %861 = vmatpush1.msra.mxu0 0.0
    %862 = vmatprep.subr.mxu0 0.0
    %863 = vmatpush1.msra.mxu0 0.0
    %864 = vmatprep.subr.mxu0 0.0
    %865 = vmatpush1.msra.mxu0 0.0
    %866 = vmatprep.subr.mxu0 0.0
    %867 = vmatpush1.msra.mxu0 0.0
    %868 = vmatprep.subr.mxu0 0.0
    %869 = vmatpush1.msra.mxu0 0.0
    %870 = vmatprep.subr.mxu0 0.0
    %871 = vmatpush1.msra.mxu0 0.0
    %872 = vmatprep.subr.mxu0 0.0
    %873 = vmatpush1.msra.mxu0 0.0
    %874 = vmatprep.subr.mxu0 0.0
    %875 = vmatpush1.msra.mxu0 0.0
    %876 = vmatprep.subr.mxu0 0.0
    %877 = vmatpush1.msra.mxu0 0.0
    %878 = vmatprep.subr.mxu0 0.0
    %879 = vmatpush1.msra.mxu0 0.0
    %880 = vmatprep.subr.mxu0 0.0
    %881 = vmatpush1.msra.mxu0 0.0
    %882 = vmatprep.subr.mxu0 0.0
    %883 = vmatpush1.msra.mxu0 0.0
    %884 = vmatprep.subr.mxu0 0.0
    %885 = vmatpush1.msra.mxu0 0.0
    %886 = vmatprep.subr.mxu0 0.0
    %887 = vmatpush1.msra.mxu0 0.0
    %888 = vmatprep.subr.mxu0 0.0
    %889 = vmatpush1.msra.mxu0 0.0
    %890 = vmatprep.subr.mxu0 0.0
    %891 = vmatpush1.msra.mxu0 0.0
    %892 = vmatprep.subr.mxu0 0.0
    %893 = vmatpush1.msra.mxu0 0.0
    %894 = vmatprep.subr.mxu0 0.0
    %895 = vmatpush1.msra.mxu0 0.0
    %896 = vmatprep.subr.mxu0 0.0
    %897 = vmatpush1.msra.mxu0 0.0
    %898 = vmatprep.subr.mxu0 0.0
    %899 = vmatpush1.msra.mxu0 0.0
    %900 = vmatprep.subr.mxu0 0.0
    %901 = vmatpush1.msra.mxu0 0.0
    %902 = vmatprep.subr.mxu0 0.0
    %903 = vmatpush1.msra.mxu0 0.0
    %904 = vmatprep.subr.mxu0 0.0
    %905 = vmatpush1.msra.mxu0 0.0
    %906 = vmatprep.mubr.f32.mxu0 0.0
    %907 = vmatmul.mubr.f32.gmra.mrb[0].mxu0 %v840
    %v908 = vpop.f32.mrb[0].mxu0
    %v909 = vadd.f32 0.0, %v908
    %v910 = vpop.f32.mrb[0].mxu0
    %911 = vdwg.mxu0
    %v912 = vadd.f32 %v839, %v909
    %v913 = vxor.u32 %v912, 2147483648
    %v914 = vmul.f32 %v913, 1.442695
    %v915 = vpow.pop %v914
    %v916 = vadd.f32 %v915, 1.0
    %v917 = vrcp.pop %v916
    %v918 = vmul.f32 1.0, %v917
    %v919 = vtanh.pop %v912
    %v920 = vmul.f32 %v918, %v825
    %922 = vrot.lane.b32.xlu0 %v919, 32
    %v923 = vpop.permute.xlu0 %922
    %v925 = vmul.f32 %v918, %v923
    %927 = vrot.lane.b32.xlu0 %v925, 32
    %v928 = vpop.permute.xlu0 %927
    %v930 = vadd.f32 %v920, %v928
    %v931 = vtanh.pop %v930
    %933 = vrot.lane.b32.xlu0 %v931, 32
    %v934 = vpop.permute.xlu0 %933
    %v936 = vmul.f32 %v918, %v934
    %938 = vrot.lane.b32.xlu0 %v936, 64
    %v939 = vpop.permute.xlu0 %938
    %s941 = scalar_lea.vmem [#allocation2], 10
    %942 = vst.msk [vmem:[%s941] sm:$0x3] %vm416, %v939
    %s943 = scalar_lea.vmem [#allocation3], 12
    %v944 = vld [vmem:[%s943] sm:$0x3]
    %v945 = vsel %vm309, %v939, 0
    %947 = vmatprep.subr.mxu0 0.0
    %948 = vmatpush1.msra.mxu0 %v113
    %949 = vmatprep.subr.mxu0 0.0
    %950 = vmatpush1.msra.mxu0 %v114
    %951 = vmatprep.subr.mxu0 0.0
    %952 = vmatpush1.msra.mxu0 %v115
    %953 = vmatprep.subr.mxu0 0.0
    %954 = vmatpush1.msra.mxu0 %v116
    %955 = vmatprep.subr.mxu0 0.0
    %956 = vmatpush1.msra.mxu0 0.0
    %957 = vmatprep.subr.mxu0 0.0
    %958 = vmatpush1.msra.mxu0 0.0
    %959 = vmatprep.subr.mxu0 0.0
    %960 = vmatpush1.msra.mxu0 0.0
    %961 = vmatprep.subr.mxu0 0.0
    %962 = vmatpush1.msra.mxu0 0.0
    %963 = vmatprep.subr.mxu0 0.0
    %964 = vmatpush1.msra.mxu0 0.0
    %965 = vmatprep.subr.mxu0 0.0
    %966 = vmatpush1.msra.mxu0 0.0
    %967 = vmatprep.subr.mxu0 0.0
    %968 = vmatpush1.msra.mxu0 0.0
    %969 = vmatprep.subr.mxu0 0.0
    %970 = vmatpush1.msra.mxu0 0.0
    %971 = vmatprep.subr.mxu0 0.0
    %972 = vmatpush1.msra.mxu0 0.0
    %973 = vmatprep.subr.mxu0 0.0
    %974 = vmatpush1.msra.mxu0 0.0
    %975 = vmatprep.subr.mxu0 0.0
    %976 = vmatpush1.msra.mxu0 0.0
    %977 = vmatprep.subr.mxu0 0.0
    %978 = vmatpush1.msra.mxu0 0.0
    %979 = vmatprep.subr.mxu0 0.0
    %980 = vmatpush1.msra.mxu0 0.0
    %981 = vmatprep.subr.mxu0 0.0
    %982 = vmatpush1.msra.mxu0 0.0
    %983 = vmatprep.subr.mxu0 0.0
    %984 = vmatpush1.msra.mxu0 0.0
    %985 = vmatprep.subr.mxu0 0.0
    %986 = vmatpush1.msra.mxu0 0.0
    %987 = vmatprep.subr.mxu0 0.0
    %988 = vmatpush1.msra.mxu0 0.0
    %989 = vmatprep.subr.mxu0 0.0
    %990 = vmatpush1.msra.mxu0 0.0
    %991 = vmatprep.subr.mxu0 0.0
    %992 = vmatpush1.msra.mxu0 0.0
    %993 = vmatprep.subr.mxu0 0.0
    %994 = vmatpush1.msra.mxu0 0.0
    %995 = vmatprep.subr.mxu0 0.0
    %996 = vmatpush1.msra.mxu0 0.0
    %997 = vmatprep.subr.mxu0 0.0
    %998 = vmatpush1.msra.mxu0 0.0
    %999 = vmatprep.subr.mxu0 0.0
    %1000 = vmatpush1.msra.mxu0 0.0
    %1001 = vmatprep.subr.mxu0 0.0
    %1002 = vmatpush1.msra.mxu0 0.0
    %1003 = vmatprep.subr.mxu0 0.0
    %1004 = vmatpush1.msra.mxu0 0.0
    %1005 = vmatprep.subr.mxu0 0.0
    %1006 = vmatpush1.msra.mxu0 0.0
    %1007 = vmatprep.subr.mxu0 0.0
    %1008 = vmatpush1.msra.mxu0 0.0
    %1009 = vmatprep.subr.mxu0 0.0
    %1010 = vmatpush1.msra.mxu0 0.0
    %1011 = vmatprep.mubr.f32.mxu0 0.0
    %1012 = vmatmul.mubr.f32.gmra.mrb[0].mxu0 %v945
    %v1013 = vpop.f32.mrb[0].mxu0
    %v1014 = vadd.f32 0.0, %v1013
    %v1015 = vpop.f32.mrb[0].mxu0
    %1016 = vdwg.mxu0
    %v1017 = vadd.f32 %v944, %v1014
    %v1018 = vxor.u32 %v1017, 2147483648
    %v1019 = vmul.f32 %v1018, 1.442695
    %v1020 = vpow.pop %v1019
    %v1021 = vadd.f32 %v1020, 1.0
    %v1022 = vrcp.pop %v1021
    %v1023 = vmul.f32 1.0, %v1022
    %v1024 = vtanh.pop %v1017
    %v1025 = vmul.f32 %v1023, %v930
    %1027 = vrot.lane.b32.xlu0 %v1024, 32
    %v1028 = vpop.permute.xlu0 %1027
    %v1030 = vmul.f32 %v1023, %v1028
    %1032 = vrot.lane.b32.xlu0 %v1030, 32
    %v1033 = vpop.permute.xlu0 %1032
    %v1035 = vadd.f32 %v1025, %v1033
    %v1036 = vtanh.pop %v1035
    %1038 = vrot.lane.b32.xlu0 %v1036, 32
    %v1039 = vpop.permute.xlu0 %1038
    %v1041 = vmul.f32 %v1023, %v1039
    %1043 = vrot.lane.b32.xlu0 %v1041, 64
    %v1044 = vpop.permute.xlu0 %1043
    %s1046 = scalar_lea.vmem [#allocation2], 12
    %1047 = vst.msk [vmem:[%s1046] sm:$0x3] %vm416, %v1044
    %s1048 = scalar_lea.vmem [#allocation3], 14
    %v1049 = vld [vmem:[%s1048] sm:$0x3]
    %v1050 = vsel %vm309, %v1044, 0
    %1052 = vmatprep.subr.mxu0 0.0
    %1053 = vmatpush1.msra.mxu0 %v113
    %1054 = vmatprep.subr.mxu0 0.0
    %1055 = vmatpush1.msra.mxu0 %v114
    %1056 = vmatprep.subr.mxu0 0.0
    %1057 = vmatpush1.msra.mxu0 %v115
    %1058 = vmatprep.subr.mxu0 0.0
    %1059 = vmatpush1.msra.mxu0 %v116
    %1060 = vmatprep.subr.mxu0 0.0
    %1061 = vmatpush1.msra.mxu0 0.0
    %1062 = vmatprep.subr.mxu0 0.0
    %1063 = vmatpush1.msra.mxu0 0.0
    %1064 = vmatprep.subr.mxu0 0.0
    %1065 = vmatpush1.msra.mxu0 0.0
    %1066 = vmatprep.subr.mxu0 0.0
    %1067 = vmatpush1.msra.mxu0 0.0
    %1068 = vmatprep.subr.mxu0 0.0
    %1069 = vmatpush1.msra.mxu0 0.0
    %1070 = vmatprep.subr.mxu0 0.0
    %1071 = vmatpush1.msra.mxu0 0.0
    %1072 = vmatprep.subr.mxu0 0.0
    %1073 = vmatpush1.msra.mxu0 0.0
    %1074 = vmatprep.subr.mxu0 0.0
    %1075 = vmatpush1.msra.mxu0 0.0
    %1076 = vmatprep.subr.mxu0 0.0
    %1077 = vmatpush1.msra.mxu0 0.0
    %1078 = vmatprep.subr.mxu0 0.0
    %1079 = vmatpush1.msra.mxu0 0.0
    %1080 = vmatprep.subr.mxu0 0.0
    %1081 = vmatpush1.msra.mxu0 0.0
    %1082 = vmatprep.subr.mxu0 0.0
    %1083 = vmatpush1.msra.mxu0 0.0
    %1084 = vmatprep.subr.mxu0 0.0
    %1085 = vmatpush1.msra.mxu0 0.0
    %1086 = vmatprep.subr.mxu0 0.0
    %1087 = vmatpush1.msra.mxu0 0.0
    %1088 = vmatprep.subr.mxu0 0.0
    %1089 = vmatpush1.msra.mxu0 0.0
    %1090 = vmatprep.subr.mxu0 0.0
    %1091 = vmatpush1.msra.mxu0 0.0
    %1092 = vmatprep.subr.mxu0 0.0
    %1093 = vmatpush1.msra.mxu0 0.0
    %1094 = vmatprep.subr.mxu0 0.0
    %1095 = vmatpush1.msra.mxu0 0.0
    %1096 = vmatprep.subr.mxu0 0.0
    %1097 = vmatpush1.msra.mxu0 0.0
    %1098 = vmatprep.subr.mxu0 0.0
    %1099 = vmatpush1.msra.mxu0 0.0
    %1100 = vmatprep.subr.mxu0 0.0
    %1101 = vmatpush1.msra.mxu0 0.0
    %1102 = vmatprep.subr.mxu0 0.0
    %1103 = vmatpush1.msra.mxu0 0.0
    %1104 = vmatprep.subr.mxu0 0.0
    %1105 = vmatpush1.msra.mxu0 0.0
    %1106 = vmatprep.subr.mxu0 0.0
    %1107 = vmatpush1.msra.mxu0 0.0
    %1108 = vmatprep.subr.mxu0 0.0
    %1109 = vmatpush1.msra.mxu0 0.0
    %1110 = vmatprep.subr.mxu0 0.0
    %1111 = vmatpush1.msra.mxu0 0.0
    %1112 = vmatprep.subr.mxu0 0.0
    %1113 = vmatpush1.msra.mxu0 0.0
    %1114 = vmatprep.subr.mxu0 0.0
    %1115 = vmatpush1.msra.mxu0 0.0
    %1116 = vmatprep.mubr.f32.mxu0 0.0
    %1117 = vmatmul.mubr.f32.gmra.mrb[0].mxu0 %v1050
    %v1118 = vpop.f32.mrb[0].mxu0
    %v1119 = vadd.f32 0.0, %v1118
    %v1120 = vpop.f32.mrb[0].mxu0
    %1121 = vdwg.mxu0
    %v1122 = vadd.f32 %v1049, %v1119
    %v1123 = vxor.u32 %v1122, 2147483648
    %v1124 = vmul.f32 %v1123, 1.442695
    %v1125 = vpow.pop %v1124
    %v1126 = vadd.f32 %v1125, 1.0
    %v1127 = vrcp.pop %v1126
    %v1128 = vmul.f32 1.0, %v1127
    %v1129 = vtanh.pop %v1122
    %v1130 = vmul.f32 %v1128, %v1035
    %1132 = vrot.lane.b32.xlu0 %v1129, 32
    %v1133 = vpop.permute.xlu0 %1132
    %v1135 = vmul.f32 %v1128, %v1133
    %1137 = vrot.lane.b32.xlu0 %v1135, 32
    %v1138 = vpop.permute.xlu0 %1137
    %v1140 = vadd.f32 %v1130, %v1138
    %v1141 = vtanh.pop %v1140
    %1143 = vrot.lane.b32.xlu0 %v1141, 32
    %v1144 = vpop.permute.xlu0 %1143
    %v1146 = vmul.f32 %v1128, %v1144
    %1148 = vrot.lane.b32.xlu0 %v1146, 64
    %v1149 = vpop.permute.xlu0 %1148
    %s1151 = scalar_lea.vmem [#allocation2], 14
    %1152 = vst.msk [vmem:[%s1151] sm:$0x3] %vm416, %v1149
    %1153 = vst.msk [vmem:[#allocation14] sm:$0x3] %vm416, %v1149
    %1155 = vrot.lane.b32.xlu0 %v1140, 96
    %v1156 = vpop.permute.xlu0 %1155
    %1158 = vst.msk [vmem:[#allocation16] sm:$0x3] %vm416, %v1156
    %v1159 = vld [vmem:[%s6] sm:$0xff]
    %v1160 = vld [vmem:[%s6 + $0x8] sm:$0xff]
    %v1161 = vld [vmem:[%s6 + $0x10] sm:$0xff]
    %v1162 = vld [vmem:[%s6 + $0x18] sm:$0xff]
    %v1163 = vld [vmem:[#allocation12] sm:$0xff]
    %v1164 = vld [vmem:[#allocation12 + $0x8] sm:$0xff]
    %v1165 = vld [vmem:[#allocation12 + $0x10] sm:$0xff]
    %v1166 = vld [vmem:[#allocation12 + $0x18] sm:$0xff]
    %v1167 = vld [vmem:[%s8] sm:$0x1]
    %v1168 = vld [vmem:[#allocation2] sm:$0x3]
    %v1169 = vld [vmem:[#allocation2 + $0x2] sm:$0x3]
    %v1170 = vld [vmem:[#allocation2 + $0x4] sm:$0x3]
    %v1171 = vld [vmem:[#allocation2 + $0x6] sm:$0x3]
    %v1172 = vld [vmem:[#allocation2 + $0x8] sm:$0x3]
    %v1173 = vld [vmem:[#allocation2 + $0xa] sm:$0x3]
    %v1174 = vld [vmem:[#allocation2 + $0xc] sm:$0x3]
    %v1175 = vld [vmem:[#allocation2 + $0xe] sm:$0x3]
    %v1177 = vlaneseq
    %v1178 = vshrl.u32 %v1177, 7
    %v1179 = vsub.s32 0, %v1178
    %v1180 = vrot.slane %v1167, %v1179
    %v1190 = vcombine.low %v1168, %v1169
    %v1191 = vcombine.low %v1170, %v1171
    %v1193 = vunpack.c.l.s4 1983009808
    %v1194 = vunpack.c.0.s8 %v1193
    %v1195 = vlaneseq
    %v1196 = vshrl.u32 %v1195, 7
    %v1197 = vsub.s32 %v1194, %v1196
    %v1198 = vrot.slane %v1190, %v1197
    %v1200 = vunpack.c.l.s4 1983009808
    %v1201 = vunpack.c.0.s8 %v1200
    %v1202 = vlaneseq
    %v1203 = vshrl.u32 %v1202, 7
    %v1204 = vsub.s32 %v1201, %v1203
    %v1205 = vrot.slane %v1191, %v1204
    %v1206 = vcombine.low %v1198, %v1205
    %v1207 = vcombine.low %v1172, %v1173
    %v1208 = vcombine.low %v1174, %v1175
    %v1210 = vunpack.c.l.s4 1983009808
    %v1211 = vunpack.c.0.s8 %v1210
    %v1212 = vlaneseq
    %v1213 = vshrl.u32 %v1212, 7
    %v1214 = vsub.s32 %v1211, %v1213
    %v1215 = vrot.slane %v1207, %v1214
    %v1217 = vunpack.c.l.s4 1983009808
    %v1218 = vunpack.c.0.s8 %v1217
    %v1219 = vlaneseq
    %v1220 = vshrl.u32 %v1219, 7
    %v1221 = vsub.s32 %v1218, %v1220
    %v1222 = vrot.slane %v1208, %v1221
    %v1223 = vcombine.low %v1215, %v1222
    %v1224 = vsel %vm309, %v1206, 0
    %v1226 = vsel %vm309, %v1223, 0
    %1228 = vmatprep.subr.mxu0 0.0
    %1229 = vmatpush1.msra.mxu0 %v1159
    %1230 = vmatprep.subr.mxu0 0.0
    %1231 = vmatpush1.msra.mxu0 %v1160
    %1232 = vmatprep.subr.mxu0 0.0
    %1233 = vmatpush1.msra.mxu0 %v1161
    %1234 = vmatprep.subr.mxu0 0.0
    %1235 = vmatpush1.msra.mxu0 %v1162
    %1236 = vmatprep.subr.mxu0 0.0
    %1237 = vmatpush1.msra.mxu0 0.0
    %1238 = vmatprep.subr.mxu0 0.0
    %1239 = vmatpush1.msra.mxu0 0.0
    %1240 = vmatprep.subr.mxu0 0.0
    %1241 = vmatpush1.msra.mxu0 0.0
    %1242 = vmatprep.subr.mxu0 0.0
    %1243 = vmatpush1.msra.mxu0 0.0
    %1244 = vmatprep.subr.mxu0 0.0
    %1245 = vmatpush1.msra.mxu0 0.0
    %1246 = vmatprep.subr.mxu0 0.0
    %1247 = vmatpush1.msra.mxu0 0.0
    %1248 = vmatprep.subr.mxu0 0.0
    %1249 = vmatpush1.msra.mxu0 0.0
    %1250 = vmatprep.subr.mxu0 0.0
    %1251 = vmatpush1.msra.mxu0 0.0
    %1252 = vmatprep.subr.mxu0 0.0
    %1253 = vmatpush1.msra.mxu0 0.0
    %1254 = vmatprep.subr.mxu0 0.0
    %1255 = vmatpush1.msra.mxu0 0.0
    %1256 = vmatprep.subr.mxu0 0.0
    %1257 = vmatpush1.msra.mxu0 0.0
    %1258 = vmatprep.subr.mxu0 0.0
    %1259 = vmatpush1.msra.mxu0 0.0
    %1260 = vmatprep.subr.mxu0 0.0
    %1261 = vmatpush1.msra.mxu0 0.0
    %1262 = vmatprep.subr.mxu0 0.0
    %1263 = vmatpush1.msra.mxu0 0.0
    %1264 = vmatprep.subr.mxu0 0.0
    %1265 = vmatpush1.msra.mxu0 0.0
    %1266 = vmatprep.subr.mxu0 0.0
    %1267 = vmatpush1.msra.mxu0 0.0
    %1268 = vmatprep.subr.mxu0 0.0
    %1269 = vmatpush1.msra.mxu0 0.0
    %1270 = vmatprep.subr.mxu0 0.0
    %1271 = vmatpush1.msra.mxu0 0.0
    %1272 = vmatprep.subr.mxu0 0.0
    %1273 = vmatpush1.msra.mxu0 0.0
    %1274 = vmatprep.subr.mxu0 0.0
    %1275 = vmatpush1.msra.mxu0 0.0
    %1276 = vmatprep.subr.mxu0 0.0
    %1277 = vmatpush1.msra.mxu0 0.0
    %1278 = vmatprep.subr.mxu0 0.0
    %1279 = vmatpush1.msra.mxu0 0.0
    %1280 = vmatprep.subr.mxu0 0.0
    %1281 = vmatpush1.msra.mxu0 0.0
    %1282 = vmatprep.subr.mxu0 0.0
    %1283 = vmatpush1.msra.mxu0 0.0
    %1284 = vmatprep.subr.mxu0 0.0
    %1285 = vmatpush1.msra.mxu0 0.0
    %1286 = vmatprep.subr.mxu0 0.0
    %1287 = vmatpush1.msra.mxu0 0.0
    %1288 = vmatprep.subr.mxu0 0.0
    %1289 = vmatpush1.msra.mxu0 0.0
    %1290 = vmatprep.subr.mxu0 0.0
    %1291 = vmatpush1.msra.mxu0 0.0
    %1292 = vmatprep.mubr.f32.mxu0 0.0
    %1293 = vmatmul.mubr.f32.gmra.mrb[0].mxu0 %v1224
    %v1294 = vpop.f32.mrb[0].mxu0
    %v1295 = vadd.f32 %v1180, %v1294
    %v1296 = vpop.f32.mrb[0].mxu0
    %1297 = vmatprep.mubr.f32.mxu0 0.0
    %1298 = vmatmul.mubr.f32.gmra.mrb[0].mxu0 %v1226
    %v1299 = vpop.f32.mrb[0].mxu0
    %v1300 = vadd.f32 %v1180, %v1299
    %v1301 = vpop.f32.mrb[0].mxu0
    %1302 = vdwg.mxu0
    %v1305 = vcombine.high %v1295, %v1295
    %v1307 = vunpack.c.l.s4 1983009808
    %v1308 = vunpack.c.0.s8 %v1307
    %v1309 = vlaneseq
    %v1310 = vshrl.u32 %v1309, 7
    %v1311 = vsub.s32 %v1308, %v1310
    %v1312 = vrot.slane %v1295, %v1311
    %v1314 = vunpack.c.l.s4 1983009808
    %v1315 = vunpack.c.0.s8 %v1314
    %v1316 = vlaneseq
    %v1317 = vshrl.u32 %v1316, 7
    %v1318 = vsub.s32 %v1315, %v1317
    %v1319 = vrot.slane %v1305, %v1318
    %v1320 = vcombine.high %v1312, %v1312
    %v1321 = vcombine.high %v1319, %v1319
    %v1322 = vcombine.high %v1300, %v1300
    %v1324 = vunpack.c.l.s4 1983009808
    %v1325 = vunpack.c.0.s8 %v1324
    %v1326 = vlaneseq
    %v1327 = vshrl.u32 %v1326, 7
    %v1328 = vsub.s32 %v1325, %v1327
    %v1329 = vrot.slane %v1300, %v1328
    %v1331 = vunpack.c.l.s4 1983009808
    %v1332 = vunpack.c.0.s8 %v1331
    %v1333 = vlaneseq
    %v1334 = vshrl.u32 %v1333, 7
    %v1335 = vsub.s32 %v1332, %v1334
    %v1336 = vrot.slane %v1322, %v1335
    %v1337 = vcombine.high %v1329, %v1329
    %v1338 = vcombine.high %v1336, %v1336
    %1347 = vst [vmem:[#allocation3] sm:$0x3] %v1312
    %1348 = vst [vmem:[#allocation3 + $0x2] sm:$0x3] %v1320
    %1349 = vst [vmem:[#allocation3 + $0x4] sm:$0x3] %v1319
    %1350 = vst [vmem:[#allocation3 + $0x6] sm:$0x3] %v1321
    %1351 = vst [vmem:[#allocation3 + $0x8] sm:$0x3] %v1329
    %1352 = vst [vmem:[#allocation3 + $0xa] sm:$0x3] %v1337
    %1353 = vst [vmem:[#allocation3 + $0xc] sm:$0x3] %v1336
    %1354 = vst [vmem:[#allocation3 + $0xe] sm:$0x3] %v1338
    %s1355 = scalar_lea.vmem [#allocation7], 2
    %v1356 = vld [vmem:[%s1355] sm:$0x3]
    %s1357 = scalar_lea.vmem [#allocation9], 2
    %v1358 = vld [vmem:[%s1357] sm:$0x3]
    %v1359 = vld [vmem:[#allocation3] sm:$0x3]
    %v1361 = vsel %vm309, %v1356, 0
    %1363 = vmatprep.subr.mxu0 0.0
    %1364 = vmatpush1.msra.mxu0 %v1163
    %1365 = vmatprep.subr.mxu0 0.0
    %1366 = vmatpush1.msra.mxu0 %v1164
    %1367 = vmatprep.subr.mxu0 0.0
    %1368 = vmatpush1.msra.mxu0 %v1165
    %1369 = vmatprep.subr.mxu0 0.0
    %1370 = vmatpush1.msra.mxu0 %v1166
    %1371 = vmatprep.subr.mxu0 0.0
    %1372 = vmatpush1.msra.mxu0 0.0
    %1373 = vmatprep.subr.mxu0 0.0
    %1374 = vmatpush1.msra.mxu0 0.0
    %1375 = vmatprep.subr.mxu0 0.0
    %1376 = vmatpush1.msra.mxu0 0.0
    %1377 = vmatprep.subr.mxu0 0.0
    %1378 = vmatpush1.msra.mxu0 0.0
    %1379 = vmatprep.subr.mxu0 0.0
    %1380 = vmatpush1.msra.mxu0 0.0
    %1381 = vmatprep.subr.mxu0 0.0
    %1382 = vmatpush1.msra.mxu0 0.0
    %1383 = vmatprep.subr.mxu0 0.0
    %1384 = vmatpush1.msra.mxu0 0.0
    %1385 = vmatprep.subr.mxu0 0.0
    %1386 = vmatpush1.msra.mxu0 0.0
    %1387 = vmatprep.subr.mxu0 0.0
    %1388 = vmatpush1.msra.mxu0 0.0
    %1389 = vmatprep.subr.mxu0 0.0
    %1390 = vmatpush1.msra.mxu0 0.0
    %1391 = vmatprep.subr.mxu0 0.0
    %1392 = vmatpush1.msra.mxu0 0.0
    %1393 = vmatprep.subr.mxu0 0.0
    %1394 = vmatpush1.msra.mxu0 0.0
    %1395 = vmatprep.subr.mxu0 0.0
    %1396 = vmatpush1.msra.mxu0 0.0
    %1397 = vmatprep.subr.mxu0 0.0
    %1398 = vmatpush1.msra.mxu0 0.0
    %1399 = vmatprep.subr.mxu0 0.0
    %1400 = vmatpush1.msra.mxu0 0.0
    %1401 = vmatprep.subr.mxu0 0.0
    %1402 = vmatpush1.msra.mxu0 0.0
    %1403 = vmatprep.subr.mxu0 0.0
    %1404 = vmatpush1.msra.mxu0 0.0
    %1405 = vmatprep.subr.mxu0 0.0
    %1406 = vmatpush1.msra.mxu0 0.0
    %1407 = vmatprep.subr.mxu0 0.0
    %1408 = vmatpush1.msra.mxu0 0.0
    %1409 = vmatprep.subr.mxu0 0.0
    %1410 = vmatpush1.msra.mxu0 0.0
    %1411 = vmatprep.subr.mxu0 0.0
    %1412 = vmatpush1.msra.mxu0 0.0
    %1413 = vmatprep.subr.mxu0 0.0
    %1414 = vmatpush1.msra.mxu0 0.0
    %1415 = vmatprep.subr.mxu0 0.0
    %1416 = vmatpush1.msra.mxu0 0.0
    %1417 = vmatprep.subr.mxu0 0.0
    %1418 = vmatpush1.msra.mxu0 0.0
    %1419 = vmatprep.subr.mxu0 0.0
    %1420 = vmatpush1.msra.mxu0 0.0
    %1421 = vmatprep.subr.mxu0 0.0
    %1422 = vmatpush1.msra.mxu0 0.0
    %1423 = vmatprep.subr.mxu0 0.0
    %1424 = vmatpush1.msra.mxu0 0.0
    %1425 = vmatprep.subr.mxu0 0.0
    %1426 = vmatpush1.msra.mxu0 0.0
    %1427 = vmatprep.mubr.f32.mxu0 0.0
    %1428 = vmatmul.mubr.f32.gmra.mrb[0].mxu0 %v1361
    %v1429 = vpop.f32.mrb[0].mxu0
    %v1430 = vadd.f32 0.0, %v1429
    %v1431 = vpop.f32.mrb[0].mxu0
    %1432 = vdwg.mxu0
    %v1433 = vadd.f32 %v1359, %v1430
    %v1434 = vxor.u32 %v1433, 2147483648
    %v1435 = vmul.f32 %v1434, 1.442695
    %v1436 = vpow.pop %v1435
    %v1437 = vadd.f32 %v1436, 1.0
    %v1438 = vrcp.pop %v1437
    %v1439 = vmul.f32 1.0, %v1438
    %v1440 = vtanh.pop %v1433
    %1442 = vrot.lane.b32.xlu0 %v1358, 32
    %v1443 = vpop.permute.xlu0 %1442
    %v1445 = vmul.f32 %v1439, %v1443
    %1447 = vrot.lane.b32.xlu0 %v1440, 32
    %v1448 = vpop.permute.xlu0 %1447
    %v1450 = vmul.f32 %v1439, %v1448
    %1452 = vrot.lane.b32.xlu0 %v1450, 32
    %v1453 = vpop.permute.xlu0 %1452
    %v1455 = vadd.f32 %v1445, %v1453
    %v1456 = vtanh.pop %v1455
    %1458 = vrot.lane.b32.xlu0 %v1456, 32
    %v1459 = vpop.permute.xlu0 %1458
    %v1461 = vmul.f32 %v1439, %v1459
    %1463 = vrot.lane.b32.xlu0 %v1461, 64
    %v1464 = vpop.permute.xlu0 %1463
    %1466 = vst.msk [vmem:[#allocation2] sm:$0x3] %vm416, %v1464
    %v1467 = vld [vmem:[%s418] sm:$0x3]
    %v1468 = vsel %vm309, %v1464, 0
    %1470 = vmatprep.subr.mxu0 0.0
    %1471 = vmatpush1.msra.mxu0 %v1163
    %1472 = vmatprep.subr.mxu0 0.0
    %1473 = vmatpush1.msra.mxu0 %v1164
    %1474 = vmatprep.subr.mxu0 0.0
    %1475 = vmatpush1.msra.mxu0 %v1165
    %1476 = vmatprep.subr.mxu0 0.0
    %1477 = vmatpush1.msra.mxu0 %v1166
    %1478 = vmatprep.subr.mxu0 0.0
    %1479 = vmatpush1.msra.mxu0 0.0
    %1480 = vmatprep.subr.mxu0 0.0
    %1481 = vmatpush1.msra.mxu0 0.0
    %1482 = vmatprep.subr.mxu0 0.0
    %1483 = vmatpush1.msra.mxu0 0.0
    %1484 = vmatprep.subr.mxu0 0.0
    %1485 = vmatpush1.msra.mxu0 0.0
    %1486 = vmatprep.subr.mxu0 0.0
    %1487 = vmatpush1.msra.mxu0 0.0
    %1488 = vmatprep.subr.mxu0 0.0
    %1489 = vmatpush1.msra.mxu0 0.0
    %1490 = vmatprep.subr.mxu0 0.0
    %1491 = vmatpush1.msra.mxu0 0.0
    %1492 = vmatprep.subr.mxu0 0.0
    %1493 = vmatpush1.msra.mxu0 0.0
    %1494 = vmatprep.subr.mxu0 0.0
    %1495 = vmatpush1.msra.mxu0 0.0
    %1496 = vmatprep.subr.mxu0 0.0
    %1497 = vmatpush1.msra.mxu0 0.0
    %1498 = vmatprep.subr.mxu0 0.0
    %1499 = vmatpush1.msra.mxu0 0.0
    %1500 = vmatprep.subr.mxu0 0.0
    %1501 = vmatpush1.msra.mxu0 0.0
    %1502 = vmatprep.subr.mxu0 0.0
    %1503 = vmatpush1.msra.mxu0 0.0
    %1504 = vmatprep.subr.mxu0 0.0
    %1505 = vmatpush1.msra.mxu0 0.0
    %1506 = vmatprep.subr.mxu0 0.0
    %1507 = vmatpush1.msra.mxu0 0.0
    %1508 = vmatprep.subr.mxu0 0.0
    %1509 = vmatpush1.msra.mxu0 0.0
    %1510 = vmatprep.subr.mxu0 0.0
    %1511 = vmatpush1.msra.mxu0 0.0
    %1512 = vmatprep.subr.mxu0 0.0
    %1513 = vmatpush1.msra.mxu0 0.0
    %1514 = vmatprep.subr.mxu0 0.0
    %1515 = vmatpush1.msra.mxu0 0.0
    %1516 = vmatprep.subr.mxu0 0.0
    %1517 = vmatpush1.msra.mxu0 0.0
    %1518 = vmatprep.subr.mxu0 0.0
    %1519 = vmatpush1.msra.mxu0 0.0
    %1520 = vmatprep.subr.mxu0 0.0
    %1521 = vmatpush1.msra.mxu0 0.0
    %1522 = vmatprep.subr.mxu0 0.0
    %1523 = vmatpush1.msra.mxu0 0.0
    %1524 = vmatprep.subr.mxu0 0.0
    %1525 = vmatpush1.msra.mxu0 0.0
    %1526 = vmatprep.subr.mxu0 0.0
    %1527 = vmatpush1.msra.mxu0 0.0
    %1528 = vmatprep.subr.mxu0 0.0
    %1529 = vmatpush1.msra.mxu0 0.0
    %1530 = vmatprep.subr.mxu0 0.0
    %1531 = vmatpush1.msra.mxu0 0.0
    %1532 = vmatprep.subr.mxu0 0.0
    %1533 = vmatpush1.msra.mxu0 0.0
    %1534 = vmatprep.mubr.f32.mxu0 0.0
    %1535 = vmatmul.mubr.f32.gmra.mrb[0].mxu0 %v1468
    %v1536 = vpop.f32.mrb[0].mxu0
    %v1537 = vadd.f32 0.0, %v1536
    %v1538 = vpop.f32.mrb[0].mxu0
    %1539 = vdwg.mxu0
    %v1540 = vadd.f32 %v1467, %v1537
    %v1541 = vxor.u32 %v1540, 2147483648
    %v1542 = vmul.f32 %v1541, 1.442695
    %v1543 = vpow.pop %v1542
    %v1544 = vadd.f32 %v1543, 1.0
    %v1545 = vrcp.pop %v1544
    %v1546 = vmul.f32 1.0, %v1545
    %v1547 = vtanh.pop %v1540
    %v1548 = vmul.f32 %v1546, %v1455
    %1550 = vrot.lane.b32.xlu0 %v1547, 32
    %v1551 = vpop.permute.xlu0 %1550
    %v1553 = vmul.f32 %v1546, %v1551
    %1555 = vrot.lane.b32.xlu0 %v1553, 32
    %v1556 = vpop.permute.xlu0 %1555
    %v1558 = vadd.f32 %v1548, %v1556
    %v1559 = vtanh.pop %v1558
    %1561 = vrot.lane.b32.xlu0 %v1559, 32
    %v1562 = vpop.permute.xlu0 %1561
    %v1564 = vmul.f32 %v1546, %v1562
    %1566 = vrot.lane.b32.xlu0 %v1564, 64
    %v1567 = vpop.permute.xlu0 %1566
    %1569 = vst.msk [vmem:[%s521] sm:$0x3] %vm416, %v1567
    %v1570 = vld [vmem:[%s523] sm:$0x3]
    %v1571 = vsel %vm309, %v1567, 0
    %1573 = vmatprep.subr.mxu0 0.0
    %1574 = vmatpush1.msra.mxu0 %v1163
    %1575 = vmatprep.subr.mxu0 0.0
    %1576 = vmatpush1.msra.mxu0 %v1164
    %1577 = vmatprep.subr.mxu0 0.0
    %1578 = vmatpush1.msra.mxu0 %v1165
    %1579 = vmatprep.subr.mxu0 0.0
    %1580 = vmatpush1.msra.mxu0 %v1166
    %1581 = vmatprep.subr.mxu0 0.0
    %1582 = vmatpush1.msra.mxu0 0.0
    %1583 = vmatprep.subr.mxu0 0.0
    %1584 = vmatpush1.msra.mxu0 0.0
    %1585 = vmatprep.subr.mxu0 0.0
    %1586 = vmatpush1.msra.mxu0 0.0
    %1587 = vmatprep.subr.mxu0 0.0
    %1588 = vmatpush1.msra.mxu0 0.0
    %1589 = vmatprep.subr.mxu0 0.0
    %1590 = vmatpush1.msra.mxu0 0.0
    %1591 = vmatprep.subr.mxu0 0.0
    %1592 = vmatpush1.msra.mxu0 0.0
    %1593 = vmatprep.subr.mxu0 0.0
    %1594 = vmatpush1.msra.mxu0 0.0
    %1595 = vmatprep.subr.mxu0 0.0
    %1596 = vmatpush1.msra.mxu0 0.0
    %1597 = vmatprep.subr.mxu0 0.0
    %1598 = vmatpush1.msra.mxu0 0.0
    %1599 = vmatprep.subr.mxu0 0.0
    %1600 = vmatpush1.msra.mxu0 0.0
    %1601 = vmatprep.subr.mxu0 0.0
    %1602 = vmatpush1.msra.mxu0 0.0
    %1603 = vmatprep.subr.mxu0 0.0
    %1604 = vmatpush1.msra.mxu0 0.0
    %1605 = vmatprep.subr.mxu0 0.0
    %1606 = vmatpush1.msra.mxu0 0.0
    %1607 = vmatprep.subr.mxu0 0.0
    %1608 = vmatpush1.msra.mxu0 0.0
    %1609 = vmatprep.subr.mxu0 0.0
    %1610 = vmatpush1.msra.mxu0 0.0
    %1611 = vmatprep.subr.mxu0 0.0
    %1612 = vmatpush1.msra.mxu0 0.0
    %1613 = vmatprep.subr.mxu0 0.0
    %1614 = vmatpush1.msra.mxu0 0.0
    %1615 = vmatprep.subr.mxu0 0.0
    %1616 = vmatpush1.msra.mxu0 0.0
    %1617 = vmatprep.subr.mxu0 0.0
    %1618 = vmatpush1.msra.mxu0 0.0
    %1619 = vmatprep.subr.mxu0 0.0
    %1620 = vmatpush1.msra.mxu0 0.0
    %1621 = vmatprep.subr.mxu0 0.0
    %1622 = vmatpush1.msra.mxu0 0.0
    %1623 = vmatprep.subr.mxu0 0.0
    %1624 = vmatpush1.msra.mxu0 0.0
    %1625 = vmatprep.subr.mxu0 0.0
    %1626 = vmatpush1.msra.mxu0 0.0
    %1627 = vmatprep.subr.mxu0 0.0
    %1628 = vmatpush1.msra.mxu0 0.0
    %1629 = vmatprep.subr.mxu0 0.0
    %1630 = vmatpush1.msra.mxu0 0.0
    %1631 = vmatprep.subr.mxu0 0.0
    %1632 = vmatpush1.msra.mxu0 0.0
    %1633 = vmatprep.subr.mxu0 0.0
    %1634 = vmatpush1.msra.mxu0 0.0
    %1635 = vmatprep.subr.mxu0 0.0
    %1636 = vmatpush1.msra.mxu0 0.0
    %1637 = vmatprep.mubr.f32.mxu0 0.0
    %1638 = vmatmul.mubr.f32.gmra.mrb[0].mxu0 %v1571
    %v1639 = vpop.f32.mrb[0].mxu0
    %v1640 = vadd.f32 0.0, %v1639
    %v1641 = vpop.f32.mrb[0].mxu0
    %1642 = vdwg.mxu0
    %v1643 = vadd.f32 %v1570, %v1640
    %v1644 = vxor.u32 %v1643, 2147483648
    %v1645 = vmul.f32 %v1644, 1.442695
    %v1646 = vpow.pop %v1645
    %v1647 = vadd.f32 %v1646, 1.0
    %v1648 = vrcp.pop %v1647
    %v1649 = vmul.f32 1.0, %v1648
    %v1650 = vtanh.pop %v1643
    %v1651 = vmul.f32 %v1649, %v1558
    %1653 = vrot.lane.b32.xlu0 %v1650, 32
    %v1654 = vpop.permute.xlu0 %1653
    %v1656 = vmul.f32 %v1649, %v1654
    %1658 = vrot.lane.b32.xlu0 %v1656, 32
    %v1659 = vpop.permute.xlu0 %1658
    %v1661 = vadd.f32 %v1651, %v1659
    %v1662 = vtanh.pop %v1661
    %1664 = vrot.lane.b32.xlu0 %v1662, 32
    %v1665 = vpop.permute.xlu0 %1664
    %v1667 = vmul.f32 %v1649, %v1665
    %1669 = vrot.lane.b32.xlu0 %v1667, 64
    %v1670 = vpop.permute.xlu0 %1669
    %1672 = vst.msk [vmem:[%s626] sm:$0x3] %vm416, %v1670
    %v1673 = vld [vmem:[%s628] sm:$0x3]
    %v1674 = vsel %vm309, %v1670, 0
    %1676 = vmatprep.subr.mxu0 0.0
    %1677 = vmatpush1.msra.mxu0 %v1163
    %1678 = vmatprep.subr.mxu0 0.0
    %1679 = vmatpush1.msra.mxu0 %v1164
    %1680 = vmatprep.subr.mxu0 0.0
    %1681 = vmatpush1.msra.mxu0 %v1165
    %1682 = vmatprep.subr.mxu0 0.0
    %1683 = vmatpush1.msra.mxu0 %v1166
    %1684 = vmatprep.subr.mxu0 0.0
    %1685 = vmatpush1.msra.mxu0 0.0
    %1686 = vmatprep.subr.mxu0 0.0
    %1687 = vmatpush1.msra.mxu0 0.0
    %1688 = vmatprep.subr.mxu0 0.0
    %1689 = vmatpush1.msra.mxu0 0.0
    %1690 = vmatprep.subr.mxu0 0.0
    %1691 = vmatpush1.msra.mxu0 0.0
    %1692 = vmatprep.subr.mxu0 0.0
    %1693 = vmatpush1.msra.mxu0 0.0
    %1694 = vmatprep.subr.mxu0 0.0
    %1695 = vmatpush1.msra.mxu0 0.0
    %1696 = vmatprep.subr.mxu0 0.0
    %1697 = vmatpush1.msra.mxu0 0.0
    %1698 = vmatprep.subr.mxu0 0.0
    %1699 = vmatpush1.msra.mxu0 0.0
    %1700 = vmatprep.subr.mxu0 0.0
    %1701 = vmatpush1.msra.mxu0 0.0
    %1702 = vmatprep.subr.mxu0 0.0
    %1703 = vmatpush1.msra.mxu0 0.0
    %1704 = vmatprep.subr.mxu0 0.0
    %1705 = vmatpush1.msra.mxu0 0.0
    %1706 = vmatprep.subr.mxu0 0.0
    %1707 = vmatpush1.msra.mxu0 0.0
    %1708 = vmatprep.subr.mxu0 0.0
    %1709 = vmatpush1.msra.mxu0 0.0
    %1710 = vmatprep.subr.mxu0 0.0
    %1711 = vmatpush1.msra.mxu0 0.0
    %1712 = vmatprep.subr.mxu0 0.0
    %1713 = vmatpush1.msra.mxu0 0.0
    %1714 = vmatprep.subr.mxu0 0.0
    %1715 = vmatpush1.msra.mxu0 0.0
    %1716 = vmatprep.subr.mxu0 0.0
    %1717 = vmatpush1.msra.mxu0 0.0
    %1718 = vmatprep.subr.mxu0 0.0
    %1719 = vmatpush1.msra.mxu0 0.0
    %1720 = vmatprep.subr.mxu0 0.0
    %1721 = vmatpush1.msra.mxu0 0.0
    %1722 = vmatprep.subr.mxu0 0.0
    %1723 = vmatpush1.msra.mxu0 0.0
    %1724 = vmatprep.subr.mxu0 0.0
    %1725 = vmatpush1.msra.mxu0 0.0
    %1726 = vmatprep.subr.mxu0 0.0
    %1727 = vmatpush1.msra.mxu0 0.0
    %1728 = vmatprep.subr.mxu0 0.0
    %1729 = vmatpush1.msra.mxu0 0.0
    %1730 = vmatprep.subr.mxu0 0.0
    %1731 = vmatpush1.msra.mxu0 0.0
    %1732 = vmatprep.subr.mxu0 0.0
    %1733 = vmatpush1.msra.mxu0 0.0
    %1734 = vmatprep.subr.mxu0 0.0
    %1735 = vmatpush1.msra.mxu0 0.0
    %1736 = vmatprep.subr.mxu0 0.0
    %1737 = vmatpush1.msra.mxu0 0.0
    %1738 = vmatprep.subr.mxu0 0.0
    %1739 = vmatpush1.msra.mxu0 0.0
    %1740 = vmatprep.mubr.f32.mxu0 0.0
    %1741 = vmatmul.mubr.f32.gmra.mrb[0].mxu0 %v1674
    %v1742 = vpop.f32.mrb[0].mxu0
    %v1743 = vadd.f32 0.0, %v1742
    %v1744 = vpop.f32.mrb[0].mxu0
    %1745 = vdwg.mxu0
    %v1746 = vadd.f32 %v1673, %v1743
    %v1747 = vxor.u32 %v1746, 2147483648
    %v1748 = vmul.f32 %v1747, 1.442695
    %v1749 = vpow.pop %v1748
    %v1750 = vadd.f32 %v1749, 1.0
    %v1751 = vrcp.pop %v1750
    %v1752 = vmul.f32 1.0, %v1751
    %v1753 = vtanh.pop %v1746
    %v1754 = vmul.f32 %v1752, %v1661
    %1756 = vrot.lane.b32.xlu0 %v1753, 32
    %v1757 = vpop.permute.xlu0 %1756
    %v1759 = vmul.f32 %v1752, %v1757
    %1761 = vrot.lane.b32.xlu0 %v1759, 32
    %v1762 = vpop.permute.xlu0 %1761
    %v1764 = vadd.f32 %v1754, %v1762
    %v1765 = vtanh.pop %v1764
    %1767 = vrot.lane.b32.xlu0 %v1765, 32
    %v1768 = vpop.permute.xlu0 %1767
    %v1770 = vmul.f32 %v1752, %v1768
    %1772 = vrot.lane.b32.xlu0 %v1770, 64
    %v1773 = vpop.permute.xlu0 %1772
    %1775 = vst.msk [vmem:[%s731] sm:$0x3] %vm416, %v1773
    %v1776 = vld [vmem:[%s733] sm:$0x3]
    %v1777 = vsel %vm309, %v1773, 0
    %1779 = vmatprep.subr.mxu0 0.0
    %1780 = vmatpush1.msra.mxu0 %v1163
    %1781 = vmatprep.subr.mxu0 0.0
    %1782 = vmatpush1.msra.mxu0 %v1164
    %1783 = vmatprep.subr.mxu0 0.0
    %1784 = vmatpush1.msra.mxu0 %v1165
    %1785 = vmatprep.subr.mxu0 0.0
    %1786 = vmatpush1.msra.mxu0 %v1166
    %1787 = vmatprep.subr.mxu0 0.0
    %1788 = vmatpush1.msra.mxu0 0.0
    %1789 = vmatprep.subr.mxu0 0.0
    %1790 = vmatpush1.msra.mxu0 0.0
    %1791 = vmatprep.subr.mxu0 0.0
    %1792 = vmatpush1.msra.mxu0 0.0
    %1793 = vmatprep.subr.mxu0 0.0
    %1794 = vmatpush1.msra.mxu0 0.0
    %1795 = vmatprep.subr.mxu0 0.0
    %1796 = vmatpush1.msra.mxu0 0.0
    %1797 = vmatprep.subr.mxu0 0.0
    %1798 = vmatpush1.msra.mxu0 0.0
    %1799 = vmatprep.subr.mxu0 0.0
    %1800 = vmatpush1.msra.mxu0 0.0
    %1801 = vmatprep.subr.mxu0 0.0
    %1802 = vmatpush1.msra.mxu0 0.0
    %1803 = vmatprep.subr.mxu0 0.0
    %1804 = vmatpush1.msra.mxu0 0.0
    %1805 = vmatprep.subr.mxu0 0.0
    %1806 = vmatpush1.msra.mxu0 0.0
    %1807 = vmatprep.subr.mxu0 0.0
    %1808 = vmatpush1.msra.mxu0 0.0
    %1809 = vmatprep.subr.mxu0 0.0
    %1810 = vmatpush1.msra.mxu0 0.0
    %1811 = vmatprep.subr.mxu0 0.0
    %1812 = vmatpush1.msra.mxu0 0.0
    %1813 = vmatprep.subr.mxu0 0.0
    %1814 = vmatpush1.msra.mxu0 0.0
    %1815 = vmatprep.subr.mxu0 0.0
    %1816 = vmatpush1.msra.mxu0 0.0
    %1817 = vmatprep.subr.mxu0 0.0
    %1818 = vmatpush1.msra.mxu0 0.0
    %1819 = vmatprep.subr.mxu0 0.0
    %1820 = vmatpush1.msra.mxu0 0.0
    %1821 = vmatprep.subr.mxu0 0.0
    %1822 = vmatpush1.msra.mxu0 0.0
    %1823 = vmatprep.subr.mxu0 0.0
    %1824 = vmatpush1.msra.mxu0 0.0
    %1825 = vmatprep.subr.mxu0 0.0
    %1826 = vmatpush1.msra.mxu0 0.0
    %1827 = vmatprep.subr.mxu0 0.0
    %1828 = vmatpush1.msra.mxu0 0.0
    %1829 = vmatprep.subr.mxu0 0.0
    %1830 = vmatpush1.msra.mxu0 0.0
    %1831 = vmatprep.subr.mxu0 0.0
    %1832 = vmatpush1.msra.mxu0 0.0
    %1833 = vmatprep.subr.mxu0 0.0
    %1834 = vmatpush1.msra.mxu0 0.0
    %1835 = vmatprep.subr.mxu0 0.0
    %1836 = vmatpush1.msra.mxu0 0.0
    %1837 = vmatprep.subr.mxu0 0.0
    %1838 = vmatpush1.msra.mxu0 0.0
    %1839 = vmatprep.subr.mxu0 0.0
    %1840 = vmatpush1.msra.mxu0 0.0
    %1841 = vmatprep.subr.mxu0 0.0
    %1842 = vmatpush1.msra.mxu0 0.0
    %1843 = vmatprep.mubr.f32.mxu0 0.0
    %1844 = vmatmul.mubr.f32.gmra.mrb[0].mxu0 %v1777
    %v1845 = vpop.f32.mrb[0].mxu0
    %v1846 = vadd.f32 0.0, %v1845
    %v1847 = vpop.f32.mrb[0].mxu0
    %1848 = vdwg.mxu0
    %v1849 = vadd.f32 %v1776, %v1846
    %v1850 = vxor.u32 %v1849, 2147483648
    %v1851 = vmul.f32 %v1850, 1.442695
    %v1852 = vpow.pop %v1851
    %v1853 = vadd.f32 %v1852, 1.0
    %v1854 = vrcp.pop %v1853
    %v1855 = vmul.f32 1.0, %v1854
    %v1856 = vtanh.pop %v1849
    %v1857 = vmul.f32 %v1855, %v1764
    %1859 = vrot.lane.b32.xlu0 %v1856, 32
    %v1860 = vpop.permute.xlu0 %1859
    %v1862 = vmul.f32 %v1855, %v1860
    %1864 = vrot.lane.b32.xlu0 %v1862, 32
    %v1865 = vpop.permute.xlu0 %1864
    %v1867 = vadd.f32 %v1857, %v1865
    %v1868 = vtanh.pop %v1867
    %1870 = vrot.lane.b32.xlu0 %v1868, 32
    %v1871 = vpop.permute.xlu0 %1870
    %v1873 = vmul.f32 %v1855, %v1871
    %1875 = vrot.lane.b32.xlu0 %v1873, 64
    %v1876 = vpop.permute.xlu0 %1875
    %1878 = vst.msk [vmem:[%s836] sm:$0x3] %vm416, %v1876
    %v1879 = vld [vmem:[%s838] sm:$0x3]
    %v1880 = vsel %vm309, %v1876, 0
    %1882 = vmatprep.subr.mxu0 0.0
    %1883 = vmatpush1.msra.mxu0 %v1163
    %1884 = vmatprep.subr.mxu0 0.0
    %1885 = vmatpush1.msra.mxu0 %v1164
    %1886 = vmatprep.subr.mxu0 0.0
    %1887 = vmatpush1.msra.mxu0 %v1165
    %1888 = vmatprep.subr.mxu0 0.0
    %1889 = vmatpush1.msra.mxu0 %v1166
    %1890 = vmatprep.subr.mxu0 0.0
    %1891 = vmatpush1.msra.mxu0 0.0
    %1892 = vmatprep.subr.mxu0 0.0
    %1893 = vmatpush1.msra.mxu0 0.0
    %1894 = vmatprep.subr.mxu0 0.0
    %1895 = vmatpush1.msra.mxu0 0.0
    %1896 = vmatprep.subr.mxu0 0.0
    %1897 = vmatpush1.msra.mxu0 0.0
    %1898 = vmatprep.subr.mxu0 0.0
    %1899 = vmatpush1.msra.mxu0 0.0
    %1900 = vmatprep.subr.mxu0 0.0
    %1901 = vmatpush1.msra.mxu0 0.0
    %1902 = vmatprep.subr.mxu0 0.0
    %1903 = vmatpush1.msra.mxu0 0.0
    %1904 = vmatprep.subr.mxu0 0.0
    %1905 = vmatpush1.msra.mxu0 0.0
    %1906 = vmatprep.subr.mxu0 0.0
    %1907 = vmatpush1.msra.mxu0 0.0
    %1908 = vmatprep.subr.mxu0 0.0
    %1909 = vmatpush1.msra.mxu0 0.0
    %1910 = vmatprep.subr.mxu0 0.0
    %1911 = vmatpush1.msra.mxu0 0.0
    %1912 = vmatprep.subr.mxu0 0.0
    %1913 = vmatpush1.msra.mxu0 0.0
    %1914 = vmatprep.subr.mxu0 0.0
    %1915 = vmatpush1.msra.mxu0 0.0
    %1916 = vmatprep.subr.mxu0 0.0
    %1917 = vmatpush1.msra.mxu0 0.0
    %1918 = vmatprep.subr.mxu0 0.0
    %1919 = vmatpush1.msra.mxu0 0.0
    %1920 = vmatprep.subr.mxu0 0.0
    %1921 = vmatpush1.msra.mxu0 0.0
    %1922 = vmatprep.subr.mxu0 0.0
    %1923 = vmatpush1.msra.mxu0 0.0
    %1924 = vmatprep.subr.mxu0 0.0
    %1925 = vmatpush1.msra.mxu0 0.0
    %1926 = vmatprep.subr.mxu0 0.0
    %1927 = vmatpush1.msra.mxu0 0.0
    %1928 = vmatprep.subr.mxu0 0.0
    %1929 = vmatpush1.msra.mxu0 0.0
    %1930 = vmatprep.subr.mxu0 0.0
    %1931 = vmatpush1.msra.mxu0 0.0
    %1932 = vmatprep.subr.mxu0 0.0
    %1933 = vmatpush1.msra.mxu0 0.0
    %1934 = vmatprep.subr.mxu0 0.0
    %1935 = vmatpush1.msra.mxu0 0.0
    %1936 = vmatprep.subr.mxu0 0.0
    %1937 = vmatpush1.msra.mxu0 0.0
    %1938 = vmatprep.subr.mxu0 0.0
    %1939 = vmatpush1.msra.mxu0 0.0
    %1940 = vmatprep.subr.mxu0 0.0
    %1941 = vmatpush1.msra.mxu0 0.0
    %1942 = vmatprep.subr.mxu0 0.0
    %1943 = vmatpush1.msra.mxu0 0.0
    %1944 = vmatprep.subr.mxu0 0.0
    %1945 = vmatpush1.msra.mxu0 0.0
    %1946 = vmatprep.mubr.f32.mxu0 0.0
    %1947 = vmatmul.mubr.f32.gmra.mrb[0].mxu0 %v1880
    %v1948 = vpop.f32.mrb[0].mxu0
    %v1949 = vadd.f32 0.0, %v1948
    %v1950 = vpop.f32.mrb[0].mxu0
    %1951 = vdwg.mxu0
    %v1952 = vadd.f32 %v1879, %v1949
    %v1953 = vxor.u32 %v1952, 2147483648
    %v1954 = vmul.f32 %v1953, 1.442695
    %v1955 = vpow.pop %v1954
    %v1956 = vadd.f32 %v1955, 1.0
    %v1957 = vrcp.pop %v1956
    %v1958 = vmul.f32 1.0, %v1957
    %v1959 = vtanh.pop %v1952
    %v1960 = vmul.f32 %v1958, %v1867
    %1962 = vrot.lane.b32.xlu0 %v1959, 32
    %v1963 = vpop.permute.xlu0 %1962
    %v1965 = vmul.f32 %v1958, %v1963
    %1967 = vrot.lane.b32.xlu0 %v1965, 32
    %v1968 = vpop.permute.xlu0 %1967
    %v1970 = vadd.f32 %v1960, %v1968
    %v1971 = vtanh.pop %v1970
    %1973 = vrot.lane.b32.xlu0 %v1971, 32
    %v1974 = vpop.permute.xlu0 %1973
    %v1976 = vmul.f32 %v1958, %v1974
    %1978 = vrot.lane.b32.xlu0 %v1976, 64
    %v1979 = vpop.permute.xlu0 %1978
    %1981 = vst.msk [vmem:[%s941] sm:$0x3] %vm416, %v1979
    %v1982 = vld [vmem:[%s943] sm:$0x3]
    %v1983 = vsel %vm309, %v1979, 0
    %1985 = vmatprep.subr.mxu0 0.0
    %1986 = vmatpush1.msra.mxu0 %v1163
    %1987 = vmatprep.subr.mxu0 0.0
    %1988 = vmatpush1.msra.mxu0 %v1164
    %1989 = vmatprep.subr.mxu0 0.0
    %1990 = vmatpush1.msra.mxu0 %v1165
    %1991 = vmatprep.subr.mxu0 0.0
    %1992 = vmatpush1.msra.mxu0 %v1166
    %1993 = vmatprep.subr.mxu0 0.0
    %1994 = vmatpush1.msra.mxu0 0.0
    %1995 = vmatprep.subr.mxu0 0.0
    %1996 = vmatpush1.msra.mxu0 0.0
    %1997 = vmatprep.subr.mxu0 0.0
    %1998 = vmatpush1.msra.mxu0 0.0
    %1999 = vmatprep.subr.mxu0 0.0
    %2000 = vmatpush1.msra.mxu0 0.0
    %2001 = vmatprep.subr.mxu0 0.0
    %2002 = vmatpush1.msra.mxu0 0.0
    %2003 = vmatprep.subr.mxu0 0.0
    %2004 = vmatpush1.msra.mxu0 0.0
    %2005 = vmatprep.subr.mxu0 0.0
    %2006 = vmatpush1.msra.mxu0 0.0
    %2007 = vmatprep.subr.mxu0 0.0
    %2008 = vmatpush1.msra.mxu0 0.0
    %2009 = vmatprep.subr.mxu0 0.0
    %2010 = vmatpush1.msra.mxu0 0.0
    %2011 = vmatprep.subr.mxu0 0.0
    %2012 = vmatpush1.msra.mxu0 0.0
    %2013 = vmatprep.subr.mxu0 0.0
    %2014 = vmatpush1.msra.mxu0 0.0
    %2015 = vmatprep.subr.mxu0 0.0
    %2016 = vmatpush1.msra.mxu0 0.0
    %2017 = vmatprep.subr.mxu0 0.0
    %2018 = vmatpush1.msra.mxu0 0.0
    %2019 = vmatprep.subr.mxu0 0.0
    %2020 = vmatpush1.msra.mxu0 0.0
    %2021 = vmatprep.subr.mxu0 0.0
    %2022 = vmatpush1.msra.mxu0 0.0
    %2023 = vmatprep.subr.mxu0 0.0
    %2024 = vmatpush1.msra.mxu0 0.0
    %2025 = vmatprep.subr.mxu0 0.0
    %2026 = vmatpush1.msra.mxu0 0.0
    %2027 = vmatprep.subr.mxu0 0.0
    %2028 = vmatpush1.msra.mxu0 0.0
    %2029 = vmatprep.subr.mxu0 0.0
    %2030 = vmatpush1.msra.mxu0 0.0
    %2031 = vmatprep.subr.mxu0 0.0
    %2032 = vmatpush1.msra.mxu0 0.0
    %2033 = vmatprep.subr.mxu0 0.0
    %2034 = vmatpush1.msra.mxu0 0.0
    %2035 = vmatprep.subr.mxu0 0.0
    %2036 = vmatpush1.msra.mxu0 0.0
    %2037 = vmatprep.subr.mxu0 0.0
    %2038 = vmatpush1.msra.mxu0 0.0
    %2039 = vmatprep.subr.mxu0 0.0
    %2040 = vmatpush1.msra.mxu0 0.0
    %2041 = vmatprep.subr.mxu0 0.0
    %2042 = vmatpush1.msra.mxu0 0.0
    %2043 = vmatprep.subr.mxu0 0.0
    %2044 = vmatpush1.msra.mxu0 0.0
    %2045 = vmatprep.subr.mxu0 0.0
    %2046 = vmatpush1.msra.mxu0 0.0
    %2047 = vmatprep.subr.mxu0 0.0
    %2048 = vmatpush1.msra.mxu0 0.0
    %2049 = vmatprep.mubr.f32.mxu0 0.0
    %2050 = vmatmul.mubr.f32.gmra.mrb[0].mxu0 %v1983
    %v2051 = vpop.f32.mrb[0].mxu0
    %v2052 = vadd.f32 0.0, %v2051
    %v2053 = vpop.f32.mrb[0].mxu0
    %2054 = vdwg.mxu0
    %v2055 = vadd.f32 %v1982, %v2052
    %v2056 = vxor.u32 %v2055, 2147483648
    %v2057 = vmul.f32 %v2056, 1.442695
    %v2058 = vpow.pop %v2057
    %v2059 = vadd.f32 %v2058, 1.0
    %v2060 = vrcp.pop %v2059
    %v2061 = vmul.f32 1.0, %v2060
    %v2062 = vtanh.pop %v2055
    %v2063 = vmul.f32 %v2061, %v1970
    %2065 = vrot.lane.b32.xlu0 %v2062, 32
    %v2066 = vpop.permute.xlu0 %2065
    %v2068 = vmul.f32 %v2061, %v2066
    %2070 = vrot.lane.b32.xlu0 %v2068, 32
    %v2071 = vpop.permute.xlu0 %2070
    %v2073 = vadd.f32 %v2063, %v2071
    %v2074 = vtanh.pop %v2073
    %2076 = vrot.lane.b32.xlu0 %v2074, 32
    %v2077 = vpop.permute.xlu0 %2076
    %v2079 = vmul.f32 %v2061, %v2077
    %2081 = vrot.lane.b32.xlu0 %v2079, 64
    %v2082 = vpop.permute.xlu0 %2081
    %2084 = vst.msk [vmem:[%s1046] sm:$0x3] %vm416, %v2082
    %v2085 = vld [vmem:[%s1048] sm:$0x3]
    %v2086 = vsel %vm309, %v2082, 0
    %2088 = vmatprep.subr.mxu0 0.0
    %2089 = vmatpush1.msra.mxu0 %v1163
    %2090 = vmatprep.subr.mxu0 0.0
    %2091 = vmatpush1.msra.mxu0 %v1164
    %2092 = vmatprep.subr.mxu0 0.0
    %2093 = vmatpush1.msra.mxu0 %v1165
    %2094 = vmatprep.subr.mxu0 0.0
    %2095 = vmatpush1.msra.mxu0 %v1166
    %2096 = vmatprep.subr.mxu0 0.0
    %2097 = vmatpush1.msra.mxu0 0.0
    %2098 = vmatprep.subr.mxu0 0.0
    %2099 = vmatpush1.msra.mxu0 0.0
    %2100 = vmatprep.subr.mxu0 0.0
    %2101 = vmatpush1.msra.mxu0 0.0
    %2102 = vmatprep.subr.mxu0 0.0
    %2103 = vmatpush1.msra.mxu0 0.0
    %2104 = vmatprep.subr.mxu0 0.0
    %2105 = vmatpush1.msra.mxu0 0.0
    %2106 = vmatprep.subr.mxu0 0.0
    %2107 = vmatpush1.msra.mxu0 0.0
    %2108 = vmatprep.subr.mxu0 0.0
    %2109 = vmatpush1.msra.mxu0 0.0
    %2110 = vmatprep.subr.mxu0 0.0
    %2111 = vmatpush1.msra.mxu0 0.0
    %2112 = vmatprep.subr.mxu0 0.0
    %2113 = vmatpush1.msra.mxu0 0.0
    %2114 = vmatprep.subr.mxu0 0.0
    %2115 = vmatpush1.msra.mxu0 0.0
    %2116 = vmatprep.subr.mxu0 0.0
    %2117 = vmatpush1.msra.mxu0 0.0
    %2118 = vmatprep.subr.mxu0 0.0
    %2119 = vmatpush1.msra.mxu0 0.0
    %2120 = vmatprep.subr.mxu0 0.0
    %2121 = vmatpush1.msra.mxu0 0.0
    %2122 = vmatprep.subr.mxu0 0.0
    %2123 = vmatpush1.msra.mxu0 0.0
    %2124 = vmatprep.subr.mxu0 0.0
    %2125 = vmatpush1.msra.mxu0 0.0
    %2126 = vmatprep.subr.mxu0 0.0
    %2127 = vmatpush1.msra.mxu0 0.0
    %2128 = vmatprep.subr.mxu0 0.0
    %2129 = vmatpush1.msra.mxu0 0.0
    %2130 = vmatprep.subr.mxu0 0.0
    %2131 = vmatpush1.msra.mxu0 0.0
    %2132 = vmatprep.subr.mxu0 0.0
    %2133 = vmatpush1.msra.mxu0 0.0
    %2134 = vmatprep.subr.mxu0 0.0
    %2135 = vmatpush1.msra.mxu0 0.0
    %2136 = vmatprep.subr.mxu0 0.0
    %2137 = vmatpush1.msra.mxu0 0.0
    %2138 = vmatprep.subr.mxu0 0.0
    %2139 = vmatpush1.msra.mxu0 0.0
    %2140 = vmatprep.subr.mxu0 0.0
    %2141 = vmatpush1.msra.mxu0 0.0
    %2142 = vmatprep.subr.mxu0 0.0
    %2143 = vmatpush1.msra.mxu0 0.0
    %2144 = vmatprep.subr.mxu0 0.0
    %2145 = vmatpush1.msra.mxu0 0.0
    %2146 = vmatprep.subr.mxu0 0.0
    %2147 = vmatpush1.msra.mxu0 0.0
    %2148 = vmatprep.subr.mxu0 0.0
    %2149 = vmatpush1.msra.mxu0 0.0
    %2150 = vmatprep.subr.mxu0 0.0
    %2151 = vmatpush1.msra.mxu0 0.0
    %2152 = vmatprep.mubr.f32.mxu0 0.0
    %2153 = vmatmul.mubr.f32.gmra.mrb[0].mxu0 %v2086
    %v2154 = vpop.f32.mrb[0].mxu0
    %v2155 = vadd.f32 0.0, %v2154
    %v2156 = vpop.f32.mrb[0].mxu0
    %2157 = vdwg.mxu0
    %v2158 = vadd.f32 %v2085, %v2155
    %v2159 = vxor.u32 %v2158, 2147483648
    %v2160 = vmul.f32 %v2159, 1.442695
    %v2161 = vpow.pop %v2160
    %v2162 = vadd.f32 %v2161, 1.0
    %v2163 = vrcp.pop %v2162
    %v2164 = vmul.f32 1.0, %v2163
    %v2165 = vtanh.pop %v2158
    %v2166 = vmul.f32 %v2164, %v2073
    %2168 = vrot.lane.b32.xlu0 %v2165, 32
    %v2169 = vpop.permute.xlu0 %2168
    %v2171 = vmul.f32 %v2164, %v2169
    %2173 = vrot.lane.b32.xlu0 %v2171, 32
    %v2174 = vpop.permute.xlu0 %2173
    %v2176 = vadd.f32 %v2166, %v2174
    %v2177 = vtanh.pop %v2176
    %2179 = vrot.lane.b32.xlu0 %v2177, 32
    %v2180 = vpop.permute.xlu0 %2179
    %v2182 = vmul.f32 %v2164, %v2180
    %2184 = vrot.lane.b32.xlu0 %v2182, 64
    %v2185 = vpop.permute.xlu0 %2184
    %2187 = vst.msk [vmem:[%s1151] sm:$0x3] %vm416, %v2185
    %s2188 = scalar_lea.vmem [#allocation14], 2
    %2189 = vst.msk [vmem:[%s2188] sm:$0x3] %vm416, %v2185
    %2191 = vrot.lane.b32.xlu0 %v2176, 96
    %v2192 = vpop.permute.xlu0 %2191
    %s2194 = scalar_lea.vmem [#allocation16], 2
    %2195 = vst.msk [vmem:[%s2194] sm:$0x3] %vm416, %v2192
    %v2196 = vld [vmem:[#allocation2] sm:$0x3]
    %v2197 = vld [vmem:[#allocation2 + $0x2] sm:$0x3]
    %v2198 = vld [vmem:[#allocation2 + $0x4] sm:$0x3]
    %v2199 = vld [vmem:[#allocation2 + $0x6] sm:$0x3]
    %v2200 = vld [vmem:[#allocation2 + $0x8] sm:$0x3]
    %v2201 = vld [vmem:[#allocation2 + $0xa] sm:$0x3]
    %v2202 = vld [vmem:[#allocation2 + $0xc] sm:$0x3]
    %v2203 = vld [vmem:[#allocation2 + $0xe] sm:$0x3]
    %v2204 = vld [vmem:[%s9] sm:$0xff]
    %v2205 = vld [vmem:[%s9 + $0x8] sm:$0xff]
    %v2206 = vld [vmem:[%s9 + $0x10] sm:$0xff]
    %v2207 = vld [vmem:[%s9 + $0x18] sm:$0xff]
    %v2208 = vld [vmem:[%s10] sm:$0x1]
    %v2210 = vlaneseq
    %v2211 = vshrl.u32 %v2210, 7
    %v2212 = vsub.s32 0, %v2211
    %v2213 = vrot.slane %v2208, %v2212
    %v2223 = vcombine.low %v2196, %v2197
    %v2224 = vcombine.low %v2198, %v2199
    %v2226 = vunpack.c.l.s4 1983009808
    %v2227 = vunpack.c.0.s8 %v2226
    %v2228 = vlaneseq
    %v2229 = vshrl.u32 %v2228, 7
    %v2230 = vsub.s32 %v2227, %v2229
    %v2231 = vrot.slane %v2223, %v2230
    %v2233 = vunpack.c.l.s4 1983009808
    %v2234 = vunpack.c.0.s8 %v2233
    %v2235 = vlaneseq
    %v2236 = vshrl.u32 %v2235, 7
    %v2237 = vsub.s32 %v2234, %v2236
    %v2238 = vrot.slane %v2224, %v2237
    %v2239 = vcombine.low %v2231, %v2238
    %v2240 = vcombine.low %v2200, %v2201
    %v2241 = vcombine.low %v2202, %v2203
    %v2243 = vunpack.c.l.s4 1983009808
    %v2244 = vunpack.c.0.s8 %v2243
    %v2245 = vlaneseq
    %v2246 = vshrl.u32 %v2245, 7
    %v2247 = vsub.s32 %v2244, %v2246
    %v2248 = vrot.slane %v2240, %v2247
    %v2250 = vunpack.c.l.s4 1983009808
    %v2251 = vunpack.c.0.s8 %v2250
    %v2252 = vlaneseq
    %v2253 = vshrl.u32 %v2252, 7
    %v2254 = vsub.s32 %v2251, %v2253
    %v2255 = vrot.slane %v2241, %v2254
    %v2256 = vcombine.low %v2248, %v2255
    %v2257 = vsel %vm309, %v2239, 0
    %v2259 = vsel %vm309, %v2256, 0
    %2261 = vmatprep.subr.mxu0 0.0
    %2262 = vmatpush1.msra.mxu0 %v2204
    %2263 = vmatprep.subr.mxu0 0.0
    %2264 = vmatpush1.msra.mxu0 %v2205
    %2265 = vmatprep.subr.mxu0 0.0
    %2266 = vmatpush1.msra.mxu0 %v2206
    %2267 = vmatprep.subr.mxu0 0.0
    %2268 = vmatpush1.msra.mxu0 %v2207
    %2269 = vmatprep.subr.mxu0 0.0
    %2270 = vmatpush1.msra.mxu0 0.0
    %2271 = vmatprep.subr.mxu0 0.0
    %2272 = vmatpush1.msra.mxu0 0.0
    %2273 = vmatprep.subr.mxu0 0.0
    %2274 = vmatpush1.msra.mxu0 0.0
    %2275 = vmatprep.subr.mxu0 0.0
    %2276 = vmatpush1.msra.mxu0 0.0
    %2277 = vmatprep.subr.mxu0 0.0
    %2278 = vmatpush1.msra.mxu0 0.0
    %2279 = vmatprep.subr.mxu0 0.0
    %2280 = vmatpush1.msra.mxu0 0.0
    %2281 = vmatprep.subr.mxu0 0.0
    %2282 = vmatpush1.msra.mxu0 0.0
    %2283 = vmatprep.subr.mxu0 0.0
    %2284 = vmatpush1.msra.mxu0 0.0
    %2285 = vmatprep.subr.mxu0 0.0
    %2286 = vmatpush1.msra.mxu0 0.0
    %2287 = vmatprep.subr.mxu0 0.0
    %2288 = vmatpush1.msra.mxu0 0.0
    %2289 = vmatprep.subr.mxu0 0.0
    %2290 = vmatpush1.msra.mxu0 0.0
    %2291 = vmatprep.subr.mxu0 0.0
    %2292 = vmatpush1.msra.mxu0 0.0
    %2293 = vmatprep.subr.mxu0 0.0
    %2294 = vmatpush1.msra.mxu0 0.0
    %2295 = vmatprep.subr.mxu0 0.0
    %2296 = vmatpush1.msra.mxu0 0.0
    %2297 = vmatprep.subr.mxu0 0.0
    %2298 = vmatpush1.msra.mxu0 0.0
    %2299 = vmatprep.subr.mxu0 0.0
    %2300 = vmatpush1.msra.mxu0 0.0
    %2301 = vmatprep.subr.mxu0 0.0
    %2302 = vmatpush1.msra.mxu0 0.0
    %2303 = vmatprep.subr.mxu0 0.0
    %2304 = vmatpush1.msra.mxu0 0.0
    %2305 = vmatprep.subr.mxu0 0.0
    %2306 = vmatpush1.msra.mxu0 0.0
    %2307 = vmatprep.subr.mxu0 0.0
    %2308 = vmatpush1.msra.mxu0 0.0
    %2309 = vmatprep.subr.mxu0 0.0
    %2310 = vmatpush1.msra.mxu0 0.0
    %2311 = vmatprep.subr.mxu0 0.0
    %2312 = vmatpush1.msra.mxu0 0.0
    %2313 = vmatprep.subr.mxu0 0.0
    %2314 = vmatpush1.msra.mxu0 0.0
    %2315 = vmatprep.subr.mxu0 0.0
    %2316 = vmatpush1.msra.mxu0 0.0
    %2317 = vmatprep.subr.mxu0 0.0
    %2318 = vmatpush1.msra.mxu0 0.0
    %2319 = vmatprep.subr.mxu0 0.0
    %2320 = vmatpush1.msra.mxu0 0.0
    %2321 = vmatprep.subr.mxu0 0.0
    %2322 = vmatpush1.msra.mxu0 0.0
    %2323 = vmatprep.subr.mxu0 0.0
    %2324 = vmatpush1.msra.mxu0 0.0
    %2325 = vmatprep.mubr.f32.mxu0 0.0
    %2326 = vmatmul.mubr.f32.gmra.mrb[0].mxu0 %v2257
    %v2327 = vpop.f32.mrb[0].mxu0
    %v2328 = vadd.f32 %v2213, %v2327
    %v2329 = vpop.f32.mrb[0].mxu0
    %2330 = vmatprep.mubr.f32.mxu0 0.0
    %2331 = vmatmul.mubr.f32.gmra.mrb[0].mxu0 %v2259
    %v2332 = vpop.f32.mrb[0].mxu0
    %v2333 = vadd.f32 %v2213, %v2332
    %v2334 = vpop.f32.mrb[0].mxu0
    %2335 = vdwg.mxu0
    %v2338 = vcombine.high %v2328, %v2328
    %v2340 = vunpack.c.l.s4 1983009808
    %v2341 = vunpack.c.0.s8 %v2340
    %v2342 = vlaneseq
    %v2343 = vshrl.u32 %v2342, 7
    %v2344 = vsub.s32 %v2341, %v2343
    %v2345 = vrot.slane %v2328, %v2344
    %v2347 = vunpack.c.l.s4 1983009808
    %v2348 = vunpack.c.0.s8 %v2347
    %v2349 = vlaneseq
    %v2350 = vshrl.u32 %v2349, 7
    %v2351 = vsub.s32 %v2348, %v2350
    %v2352 = vrot.slane %v2338, %v2351
    %v2353 = vcombine.high %v2345, %v2345
    %v2354 = vcombine.high %v2352, %v2352
    %v2355 = vcombine.high %v2333, %v2333
    %v2357 = vunpack.c.l.s4 1983009808
    %v2358 = vunpack.c.0.s8 %v2357
    %v2359 = vlaneseq
    %v2360 = vshrl.u32 %v2359, 7
    %v2361 = vsub.s32 %v2358, %v2360
    %v2362 = vrot.slane %v2333, %v2361
    %v2364 = vunpack.c.l.s4 1983009808
    %v2365 = vunpack.c.0.s8 %v2364
    %v2366 = vlaneseq
    %v2367 = vshrl.u32 %v2366, 7
    %v2368 = vsub.s32 %v2365, %v2367
    %v2369 = vrot.slane %v2355, %v2368
    %v2370 = vcombine.high %v2362, %v2362
    %v2371 = vcombine.high %v2369, %v2369
    %vm2380 = vcmask 123904
    %2381 = vst.msk [vmem:[#allocation13] sm:$0x3] %vm2380, %v2345
    %2382 = vst.msk [vmem:[#allocation13 + $0x2] sm:$0x3] %vm2380, %v2353
    %2383 = vst.msk [vmem:[#allocation13 + $0x4] sm:$0x3] %vm2380, %v2352
    %2384 = vst.msk [vmem:[#allocation13 + $0x6] sm:$0x3] %vm2380, %v2354
    %2385 = vst.msk [vmem:[#allocation13 + $0x8] sm:$0x3] %vm2380, %v2362
    %2386 = vst.msk [vmem:[#allocation13 + $0xa] sm:$0x3] %vm2380, %v2370
    %2387 = vst.msk [vmem:[#allocation13 + $0xc] sm:$0x3] %vm2380, %v2369
    %2388 = vst.msk [vmem:[#allocation13 + $0xe] sm:$0x3] %vm2380, %v2371
    // Predicated region
    $region66: #{tpu_custom_call.1} parent=1 // pred_check
      _
    $region67: #{tpu_custom_call.1} parent=1 // pred_check_branch
      %2390 = sbr.rel (0) target = $region69
    $region68: #{tpu_custom_call.1} parent=1 // pred_region
      %s2392 = ssub.s32 256, 256
      %2393 = vsyncadd [#allocation6], %s2392
      %s2394 = sshll.u32 [#allocation13], 4
      %s2395 = int_to_ptr.vmem [resolvable:$true] %s2394
      %2400 = dma.vmem_to_hbm [thread:$0]  %s2395, 256, %s11, [#allocation6], 32, 32, 2
    $region69: #{tpu_custom_call.1} parent=1 // pred_fallthru
      _
    // Predicated region
    $region70: #{tpu_custom_call.1} parent=1 // pred_check
      _
    $region71: #{tpu_custom_call.1} parent=1 // pred_check_branch
      %2402 = sbr.rel (0) target = $region73
    $region72: #{tpu_custom_call.1} parent=1 // pred_region
      %s2404 = ssub.s32 64, 64
      %2405 = vsyncadd [#allocation15], %s2404
      %s2406 = sshll.u32 [#allocation14], 4
      %s2407 = int_to_ptr.vmem [resolvable:$true] %s2406
      %2412 = dma.vmem_to_hbm [thread:$0]  %s2407, 64, %s12, [#allocation15], 32, 32, 2
    $region73: #{tpu_custom_call.1} parent=1 // pred_fallthru
      _
    // Predicated region
    $region74: #{tpu_custom_call.1} parent=1 // pred_check
      _
    $region75: #{tpu_custom_call.1} parent=1 // pred_check_branch
      %2414 = sbr.rel (0) target = $region77
    $region76: #{tpu_custom_call.1} parent=1 // pred_region
      %s2416 = ssub.s32 64, 64
      %2417 = vsyncadd [#allocation15], %s2416
      %s2418 = sshll.u32 [#allocation16], 4
      %s2419 = int_to_ptr.vmem [resolvable:$true] %s2418
      %2424 = dma.vmem_to_hbm [thread:$0]  %s2419, 64, %s13, [#allocation15], 32, 32, 2
    $region77: #{tpu_custom_call.1} parent=1 // pred_fallthru
      _
    // Predicated region
    $region78: #{tpu_custom_call.1} parent=1 // pred_check
      _
    $region79: #{tpu_custom_call.1} parent=1 // pred_check_branch
      %2426 = sbr.rel (0) target = $region81
    $region80: #{tpu_custom_call.1} parent=1 // pred_region
      %2427 = dma.done [#allocation6], 256
    $region81: #{tpu_custom_call.1} parent=1 // pred_fallthru
      _
    // Predicated region
    $region82: #{tpu_custom_call.1} parent=1 // pred_check
      _
    $region83: #{tpu_custom_call.1} parent=1 // pred_check_branch
      %2429 = sbr.rel (0) target = $region85
    $region84: #{tpu_custom_call.1} parent=1 // pred_region
      %2430 = dma.done [#allocation15], 64
    $region85: #{tpu_custom_call.1} parent=1 // pred_fallthru
      _
    // Predicated region
    $region86: #{tpu_custom_call.1} parent=1 // pred_check
      _
    $region87: #{tpu_custom_call.1} parent=1 // pred_check_branch
      %2432 = sbr.rel (0) target = $region89
    $region88: #{tpu_custom_call.1} parent=1 // pred_region
      %2433 = dma.done [#allocation15], 64
    $region89: #{tpu_custom_call.1} parent=1 // pred_fallthru
      _
    %2434 = vsyncpa [#allocation5], 1
    %2435 = vsyncpa [#allocation8], 1
    %2436 = vsyncpa [#allocation11], 1
    %2437 = vsyncpa [#allocation6], 1
    %2438 = vsyncpa [#allocation15], 1

</llo_original>
